<compile_context>
chip_gen: v7x
topology: tpu7x:2x2x1
jax: 0.10.0
libtpu: 0.0.40
codegen_flags: <defaults>
</compile_context>

<pallas_src>
import functools

import jax
import jax.numpy as jnp
from jax.experimental import pallas as pl
from jax.experimental.pallas import tpu as pltpu

LN_EPS = 1e-5     # torch.nn.LayerNorm default
ROUT_EPS = 1e-5


# ----------------------------------------------------------------------------
# EM routing math on VMEM-resident values (flat, lane-dense vote layout).
# ----------------------------------------------------------------------------
def _em_routing(f_a, V, E, ET, bu, bi, n_iters):
    """f_a: (TB, n_inp); V: (TB, n_inp, NOD) with NOD = n_out*d_out (j-major);
    E: (n_out, NOD) 0/1 expansion matrix, ET = E.T; bu, bi: (1, n_out)."""
    TB, n_inp, NOD = V.shape
    n_out = E.shape[0]
    fa3 = f_a[:, :, None]                                            # (TB, n_inp, 1)
    R = jnp.full((TB, n_inp, n_out), 1.0 / n_out, jnp.float32)
    a_out = mu_out = sig2 = None
    log_f_a_out = inv_sig2 = log_sig2 = None
    for it in range(n_iters):                                        # static unroll
        if it > 0:
            # E-step: diagonal-Gaussian responsibilities.
            t = -(V - mu_out) ** 2 * (0.5 * inv_sig2) - 0.5 * log_sig2      # (TB,n_inp,NOD)
            log_p = jnp.dot(t.reshape(TB * n_inp, NOD), ET,                  # group-sum over d_out
                            preferred_element_type=jnp.float32
                            ).reshape(TB, n_inp, n_out)
            logits = log_f_a_out[:, None, :] + log_p
            z = logits - jnp.max(logits, axis=-1, keepdims=True)
            e = jnp.exp(z)
            R = e / jnp.sum(e, axis=-1, keepdims=True)               # exact divide
        # D-step
        D_use = fa3 * R                                              # (TB, n_inp, n_out)
        D_ign = fa3 - D_use
        # M-step
        sum_use = jnp.sum(D_use, axis=1)                             # (TB, n_out)
        sum_ign = jnp.sum(D_ign, axis=1)
        a_out = bu * sum_use - bi * sum_ign                          # (TB, n_out)
        inv = 1.0 / (sum_use + ROUT_EPS)                             # exact divide
        # Expand per-(i,j) weights / per-j scale over d_out lanes via MXU matmul.
        D_exp = jnp.dot(D_use.reshape(TB * n_inp, n_out), E,
                        preferred_element_type=jnp.float32
                        ).reshape(TB, n_inp, NOD)
        inv_exp = jnp.dot(inv, E, preferred_element_type=jnp.float32)[:, None, :]
        mu_out = jnp.sum(D_exp * V, axis=1, keepdims=True) * inv_exp           # (TB,1,NOD)
        sig2 = jnp.sum(D_exp * (V - mu_out) ** 2, axis=1,
                       keepdims=True) * inv_exp + ROUT_EPS                      # (TB,1,NOD)
        if it + 1 < n_iters:
            log_f_a_out = jax.nn.log_sigmoid(a_out)                  # stable (no exp overflow)
            inv_sig2 = 1.0 / sig2
            log_sig2 = jnp.log(sig2)
    return a_out, mu_out[:, 0, :], sig2[:, 0, :]


# ----------------------------------------------------------------------------
# Fused kernel: detect_parts + 2-layer capsule routing, TB batch elems / step.
# ----------------------------------------------------------------------------
def fused_forward_kernel(a_ref, x_ref,
                         dpw_ref, dpb_ref, lng_ref, lnb_ref,
                         w1_ref, b1_ref, bu1_ref, bi1_ref, e1_ref, e1t_ref,
                         w2_ref, b2_ref, bu2_ref, bi2_ref, e2_ref, e2t_ref,
                         a_out_ref, musig_out_ref, *, n_iters):
    tb, n_inp = a_ref.shape
    nod1 = w1_ref.shape[1]                                           # n_parts * d_cap
    nod2 = b2_ref.shape[1]                                           # n_classes * d_cap
    n_parts = bu1_ref.shape[1]

    # ---- detect_parts: Linear -> Swish -> LayerNorm (mu stays in VMEM) ------
    x = x_ref[...]                                                   # (tb*n_inp, d_emb)
    h = jnp.dot(x.astype(jnp.bfloat16), dpw_ref[...],
                preferred_element_type=jnp.float32) + dpb_ref[...]
    s = h * jax.nn.sigmoid(h)                                        # Swish
    mean = jnp.mean(s, axis=-1, keepdims=True)
    var = jnp.mean((s - mean) ** 2, axis=-1, keepdims=True)          # biased (torch LN)
    mu = (s - mean) * jax.lax.rsqrt(var + LN_EPS) * lng_ref[...] + lnb_ref[...]

    # ---- layer 1: shared-W votes, one bf16 MXU matmul ------------------------
    v1 = (jnp.dot(mu.astype(jnp.bfloat16), w1_ref[...],
                  preferred_element_type=jnp.float32) + b1_ref[...]
          ).reshape(tb, n_inp, nod1)
    f_a1 = jax.nn.sigmoid(a_ref[...])                                # finite logits
    a1, mu1, _ = _em_routing(f_a1, v1, e1_ref[...], e1t_ref[...],
                             bu1_ref[...], bi1_ref[...], n_iters)

    # ---- layer 2: ONE block-diagonal vote matmul (no per-part loop) ----------
    v2 = jnp.dot(mu1.astype(jnp.bfloat16), w2_ref[...],
                 preferred_element_type=jnp.float32)                 # (tb, n_parts*nod2)
    v2 = v2.reshape(tb, n_parts, nod2) + b2_ref[...]
    f_a2 = jax.nn.sigmoid(a1)
    a2, mu2, sig2 = _em_routing(f_a2, v2, e2_ref[...], e2t_ref[...],
                                bu2_ref[...], bi2_ref[...], n_iters)

    # ---- outputs: mu2/sig2 packed into one lane-dense (tb, 2*nod2) slab ------
    a_out_ref[...] = a2                                              # (tb, n_classes)
    musig_out_ref[:, :nod2] = mu2
    musig_out_ref[:, nod2:] = sig2


def _expand_matrices(n_out, d_out):
    j = jnp.arange(n_out, dtype=jnp.int32)[:, None]
    c = jnp.arange(n_out * d_out, dtype=jnp.int32)[None, :]
    e = (c // d_out == j).astype(jnp.float32)                        # (n_out, n_out*d_out)
    return e, e.T


# ----------------------------------------------------------------------------
# Full forward pass
# ----------------------------------------------------------------------------
def sst_classifier_forward(params, mask, embs, *, n_iters=3, tb=64):
    B, n, d_depth, d_emb = embs.shape
    n_inp = n * d_depth

    # a = logit(mask), expanded over d_depth; robust for exact {0,1} masks.
    logit = jnp.log(mask) - jnp.log1p(-mask)
    a = jnp.where(mask >= 1.0, 30.0,
                  jnp.where(mask <= 0.0, -30.0, jnp.clip(logit, -30.0, 30.0)))
    a = jnp.broadcast_to(a[:, :, None], (B, n, d_depth)).reshape(B, n_inp)

    x = (embs + params["depth_emb"]).reshape(B * n_inp, d_emb)       # detect_parts input

    r1, r2 = params["routings"]
    W1 = r1["W"]                            # (1, n_parts, d_inp, d_cap) — shared over inputs
    n_parts, d_inp, d_cap = W1.shape[1], W1.shape[2], W1.shape[3]
    W2 = r2["W"]                            # (n_parts, n_classes, d_cap, d_cap)
    n_classes = W2.shape[1]
    nod1 = n_parts * d_cap
    nod2 = n_classes * d_cap

    # detect_parts params
    dpw = params["dp_w"].astype(jnp.bfloat16)                        # (d_emb, d_inp)
    dpb = params["dp_b"].reshape(1, d_inp)
    lng = params["ln_g"].reshape(1, d_inp)
    lnb = params["ln_b"].reshape(1, d_inp)

    # layer-1 params: shared W flattened to (d_inp, NOD1), j-major
    w1f = jnp.transpose(W1[0], (1, 0, 2)).reshape(d_inp, nod1).astype(jnp.bfloat16)
    b1f = r1["B"].reshape(1, nod1)
    bu1 = r1["beta_use"].reshape(1, n_parts)
    bi1 = r1["beta_ign"].reshape(1, n_parts)

    # layer-2 params: per-part W packed block-diagonally -> one (NOD1, n_parts*NOD2) matmul
    w2f = jnp.transpose(W2, (0, 2, 1, 3)).reshape(n_parts, d_cap, nod2)
    eye = jnp.eye(n_parts, dtype=w2f.dtype)
    w2bd = jnp.einsum("idj,ik->idkj", w2f, eye).reshape(nod1, n_parts * nod2)
    w2bd = w2bd.astype(jnp.bfloat16)
    b2f = r2["B"].reshape(1, nod2)
    bu2 = r2["beta_use"].reshape(1, n_classes)
    bi2 = r2["beta_ign"].reshape(1, n_classes)

    e1, e1t = _expand_matrices(n_parts, d_cap)
    e2, e2t = _expand_matrices(n_classes, d_cap)

    # Batch tile: no wrapper-side padding; Pallas handles the ragged tail block
    # (batch rows are independent; OOB writes are masked). On v7x pick tb so the
    # grid length is even and >= 2 to keep both TensorCores busy.
    tb = max(1, min(tb, B))
    grid_b = pl.cdiv(B, tb)

    kernel = functools.partial(fused_forward_kernel, n_iters=n_iters)
    a_out, musig = pl.pallas_call(
        kernel,
        out_shape=(
            jax.ShapeDtypeStruct((B, n_classes), jnp.float32),
            jax.ShapeDtypeStruct((B, 2 * nod2), jnp.float32),
        ),
        grid=(grid_b,),
        in_specs=[
            pl.BlockSpec((tb, n_inp), lambda b: (b, 0)),
            pl.BlockSpec((tb * n_inp, d_emb), lambda b: (b, 0)),
            pl.BlockSpec((d_emb, d_inp), lambda b: (0, 0)),
            pl.BlockSpec((1, d_inp), lambda b: (0, 0)),
            pl.BlockSpec((1, d_inp), lambda b: (0, 0)),
            pl.BlockSpec((1, d_inp), lambda b: (0, 0)),
            pl.BlockSpec((d_inp, nod1), lambda b: (0, 0)),
            pl.BlockSpec((1, nod1), lambda b: (0, 0)),
            pl.BlockSpec((1, n_parts), lambda b: (0, 0)),
            pl.BlockSpec((1, n_parts), lambda b: (0, 0)),
            pl.BlockSpec((n_parts, nod1), lambda b: (0, 0)),
            pl.BlockSpec((nod1, n_parts), lambda b: (0, 0)),
            pl.BlockSpec((nod1, n_parts * nod2), lambda b: (0, 0)),
            pl.BlockSpec((1, nod2), lambda b: (0, 0)),
            pl.BlockSpec((1, n_classes), lambda b: (0, 0)),
            pl.BlockSpec((1, n_classes), lambda b: (0, 0)),
            pl.BlockSpec((n_classes, nod2), lambda b: (0, 0)),
            pl.BlockSpec((nod2, n_classes), lambda b: (0, 0)),
        ],
        out_specs=(
            pl.BlockSpec((tb, n_classes), lambda b: (b, 0)),
            pl.BlockSpec((tb, 2 * nod2), lambda b: (b, 0)),
        ),
        compiler_params=pltpu.CompilerParams(dimension_semantics=("parallel",)),
    )(a, x, dpw, dpb, lng, lnb,
      w1f, b1f, bu1, bi1, e1, e1t,
      w2bd, b2f, bu2, bi2, e2, e2t)

    mu_out = musig[:, :nod2].reshape(B, n_classes, 1, d_cap)
    sig2_out = musig[:, nod2:].reshape(B, n_classes, 1, d_cap)
    return a_out, mu_out, sig2_out


def init_params(key, d_depth, d_emb, d_inp, d_cap, n_parts, n_classes):
    ks = jax.random.split(key, 7)
    return {
        "depth_emb": jnp.zeros((d_depth, d_emb), jnp.float32),                 # torch.zeros
        "dp_w": jax.random.normal(ks[0], (d_emb, d_inp), jnp.float32)
                * jnp.sqrt(2.0 / d_emb),                                       # kaiming_normal_
        "dp_b": jnp.zeros((d_inp,), jnp.float32),
        "ln_g": jnp.ones((d_inp,), jnp.float32),
        "ln_b": jnp.zeros((d_inp,), jnp.float32),
        "routings": [
            {   # routing 1: W shared across inputs (n_inp unspecified)
                "W": jax.random.normal(ks[1], (1, n_parts, d_inp, d_cap), jnp.float32) / d_inp,
                "B": jnp.zeros((n_parts, d_cap), jnp.float32),
                "beta_use": 0.1 * jax.random.normal(ks[2], (n_parts,), jnp.float32),
                "beta_ign": 0.1 * jax.random.normal(ks[3], (n_parts,), jnp.float32),
            },
            {   # routing 2: per-input W (n_inp = n_parts)
                "W": jax.random.normal(ks[4], (n_parts, n_classes, d_cap, d_cap),
                                       jnp.float32) / d_cap,
                "B": jnp.zeros((n_classes, d_cap), jnp.float32),
                "beta_use": 0.1 * jax.random.normal(ks[5], (n_classes,), jnp.float32),
                "beta_ign": 0.1 * jax.random.normal(ks[6], (n_classes,), jnp.float32),
            },
        ],
    }


if __name__ == "__main__":
    # Small shapes consistent with the module.
    d_depth, d_emb, d_inp, d_cap = 2, 32, 32, 16
    n_parts, n_classes, n_iters = 8, 4, 3
    B, n = 2, 8

    key = jax.random.PRNGKey(0)
    k_emb, k_par = jax.random.split(key)

    embs = jax.random.normal(k_emb, (B, n, d_depth, d_emb), jnp.float32)
    lengths = jnp.array([n, 5])
    mask = (jnp.arange(n)[None, :] < lengths[:, None]).astype(jnp.float32)   # 1.0 / 0.0

    params = init_params(k_par, d_depth, d_emb, d_inp, d_cap, n_parts, n_classes)

    a_out, mu_out, sig2_out = sst_classifier_forward(params, mask, embs, n_iters=n_iters)
    jax.block_until_ready((a_out, mu_out, sig2_out))

    assert a_out.shape == (B, n_classes)
    assert mu_out.shape == (B, n_classes, 1, d_cap)
    assert sig2_out.shape == (B, n_classes, 1, d_cap)
    assert bool(jnp.all(jnp.isfinite(a_out)))
    assert bool(jnp.all(jnp.isfinite(mu_out)))
    assert bool(jnp.all(sig2_out > 0.0))
    print("KERNEL_OK")
</pallas_src>

<mosaic_0001>
module attributes {stable_mosaic.version = 11 : i64} {
  func.func @fused_forward_kernel(%arg0: i32, %arg1: memref<2x16xf32, #tpu.memory_space<vmem>>, %arg2: memref<32x32xf32, #tpu.memory_space<vmem>>, %arg3: memref<32x32xbf16, #tpu.memory_space<vmem>>, %arg4: memref<1x32xf32, #tpu.memory_space<vmem>>, %arg5: memref<1x32xf32, #tpu.memory_space<vmem>>, %arg6: memref<1x32xf32, #tpu.memory_space<vmem>>, %arg7: memref<32x128xbf16, #tpu.memory_space<vmem>>, %arg8: memref<1x128xf32, #tpu.memory_space<vmem>>, %arg9: memref<1x8xf32, #tpu.memory_space<vmem>>, %arg10: memref<1x8xf32, #tpu.memory_space<vmem>>, %arg11: memref<8x128xf32, #tpu.memory_space<vmem>>, %arg12: memref<128x8xf32, #tpu.memory_space<vmem>>, %arg13: memref<128x512xbf16, #tpu.memory_space<vmem>>, %arg14: memref<1x64xf32, #tpu.memory_space<vmem>>, %arg15: memref<1x4xf32, #tpu.memory_space<vmem>>, %arg16: memref<1x4xf32, #tpu.memory_space<vmem>>, %arg17: memref<4x64xf32, #tpu.memory_space<vmem>>, %arg18: memref<64x4xf32, #tpu.memory_space<vmem>>, %arg19: memref<2x4xf32, #tpu.memory_space<vmem>>, %arg20: memref<2x128xf32, #tpu.memory_space<vmem>>) attributes {dimension_semantics = [#tpu.dimension_semantics<parallel>], iteration_bounds = array<i64: 1>, scalar_prefetch = 0 : i64, scratch_operands = 0 : i64, tpu.core_type = #tpu.core_type<tc>, window_params = [{transform_indices = @transform_0, window_bounds = array<i64: 2, 16>}, {transform_indices = @transform_1, window_bounds = array<i64: 32, 32>}, {pipeline_mode = #tpu.pipeline_mode<synchronous>, transform_indices = @transform_2, window_bounds = array<i64: 32, 32>}, {pipeline_mode = #tpu.pipeline_mode<synchronous>, transform_indices = @transform_3, window_bounds = array<i64: 1, 32>}, {pipeline_mode = #tpu.pipeline_mode<synchronous>, transform_indices = @transform_4, window_bounds = array<i64: 1, 32>}, {pipeline_mode = #tpu.pipeline_mode<synchronous>, transform_indices = @transform_5, window_bounds = array<i64: 1, 32>}, {pipeline_mode = #tpu.pipeline_mode<synchronous>, transform_indices = @transform_6, window_bounds = array<i64: 32, 128>}, {pipeline_mode = #tpu.pipeline_mode<synchronous>, transform_indices = @transform_7, window_bounds = array<i64: 1, 128>}, {pipeline_mode = #tpu.pipeline_mode<synchronous>, transform_indices = @transform_8, window_bounds = array<i64: 1, 8>}, {pipeline_mode = #tpu.pipeline_mode<synchronous>, transform_indices = @transform_9, window_bounds = array<i64: 1, 8>}, {pipeline_mode = #tpu.pipeline_mode<synchronous>, transform_indices = @transform_10, window_bounds = array<i64: 8, 128>}, {pipeline_mode = #tpu.pipeline_mode<synchronous>, transform_indices = @transform_11, window_bounds = array<i64: 128, 8>}, {pipeline_mode = #tpu.pipeline_mode<synchronous>, transform_indices = @transform_12, window_bounds = array<i64: 128, 512>}, {pipeline_mode = #tpu.pipeline_mode<synchronous>, transform_indices = @transform_13, window_bounds = array<i64: 1, 64>}, {pipeline_mode = #tpu.pipeline_mode<synchronous>, transform_indices = @transform_14, window_bounds = array<i64: 1, 4>}, {pipeline_mode = #tpu.pipeline_mode<synchronous>, transform_indices = @transform_15, window_bounds = array<i64: 1, 4>}, {pipeline_mode = #tpu.pipeline_mode<synchronous>, transform_indices = @transform_16, window_bounds = array<i64: 4, 64>}, {pipeline_mode = #tpu.pipeline_mode<synchronous>, transform_indices = @transform_17, window_bounds = array<i64: 64, 4>}, {transform_indices = @transform_18, window_bounds = array<i64: 2, 4>}, {transform_indices = @transform_19, window_bounds = array<i64: 2, 128>}]} {
    %c0 = arith.constant 0 : index
    %c0_0 = arith.constant 0 : index
    %0 = vector.load %arg2[%c0, %c0_0] : memref<32x32xf32, #tpu.memory_space<vmem>>, vector<32x32xf32>
    %1 = arith.truncf %0 : vector<32x32xf32> to vector<32x32xbf16>
    %c0_1 = arith.constant 0 : index
    %c0_2 = arith.constant 0 : index
    %2 = vector.load %arg3[%c0_1, %c0_2] : memref<32x32xbf16, #tpu.memory_space<vmem>>, vector<32x32xbf16>
    %cst = arith.constant dense<0.000000e+00> : vector<32x32xf32>
    %3 = tpu.matmul %1, %2, %cst {dimension_numbers = #tpu.dot_dimension_numbers<[1], [0], [0], [1], [0, 0, 1, 1], [], []>} : vector<32x32xbf16>, vector<32x32xbf16>, vector<32x32xf32> -> vector<32x32xf32>
    %c0_3 = arith.constant 0 : index
    %c0_4 = arith.constant 0 : index
    %4 = vector.load %arg4[%c0_3, %c0_4] : memref<1x32xf32, #tpu.memory_space<vmem>>, vector<1x32xf32>
    %5 = vector.broadcast %4 : vector<1x32xf32> to vector<32x32xf32>
    %6 = arith.addf %3, %5 : vector<32x32xf32>
    %7 = arith.negf %6 : vector<32x32xf32>
    %8 = math.exp %7 : vector<32x32xf32>
    %cst_5 = arith.constant 1.000000e+00 : f32
    %9 = vector.broadcast %cst_5 : f32 to vector<32x32xf32>
    %10 = arith.addf %9, %8 : vector<32x32xf32>
    %11 = arith.divf %9, %10 : vector<32x32xf32>
    %12 = arith.mulf %6, %11 : vector<32x32xf32>
    %cst_6 = arith.constant dense<0.000000e+00> : vector<32xf32>
    %13 = vector.multi_reduction <add>, %12, %cst_6 [1] : vector<32x32xf32> to vector<32xf32>
    %14 = vector.shape_cast %13 : vector<32xf32> to vector<32x1xf32>
    %cst_7 = arith.constant 3.200000e+01 : f32
    %15 = vector.broadcast %cst_7 : f32 to vector<32x1xf32>
    %16 = arith.divf %14, %15 : vector<32x1xf32>
    %17 = vector.broadcast %16 : vector<32x1xf32> to vector<32x32xf32>
    %18 = arith.subf %12, %17 : vector<32x32xf32>
    %19 = arith.mulf %18, %18 : vector<32x32xf32>
    %cst_8 = arith.constant dense<0.000000e+00> : vector<32xf32>
    %20 = vector.multi_reduction <add>, %19, %cst_8 [1] : vector<32x32xf32> to vector<32xf32>
    %21 = vector.shape_cast %20 : vector<32xf32> to vector<32x1xf32>
    %cst_9 = arith.constant 3.200000e+01 : f32
    %22 = vector.broadcast %cst_9 : f32 to vector<32x1xf32>
    %23 = arith.divf %21, %22 : vector<32x1xf32>
    %24 = vector.broadcast %16 : vector<32x1xf32> to vector<32x32xf32>
    %25 = arith.subf %12, %24 : vector<32x32xf32>
    %cst_10 = arith.constant 9.99999974E-6 : f32
    %26 = vector.broadcast %cst_10 : f32 to vector<32x1xf32>
    %27 = arith.addf %23, %26 : vector<32x1xf32>
    %28 = math.rsqrt %27 : vector<32x1xf32>
    %29 = vector.broadcast %28 : vector<32x1xf32> to vector<32x32xf32>
    %30 = arith.mulf %25, %29 : vector<32x32xf32>
    %c0_11 = arith.constant 0 : index
    %c0_12 = arith.constant 0 : index
    %31 = vector.load %arg5[%c0_11, %c0_12] : memref<1x32xf32, #tpu.memory_space<vmem>>, vector<1x32xf32>
    %32 = vector.broadcast %31 : vector<1x32xf32> to vector<32x32xf32>
    %33 = arith.mulf %30, %32 : vector<32x32xf32>
    %c0_13 = arith.constant 0 : index
    %c0_14 = arith.constant 0 : index
    %34 = vector.load %arg6[%c0_13, %c0_14] : memref<1x32xf32, #tpu.memory_space<vmem>>, vector<1x32xf32>
    %35 = vector.broadcast %34 : vector<1x32xf32> to vector<32x32xf32>
    %36 = arith.addf %33, %35 : vector<32x32xf32>
    %37 = arith.truncf %36 : vector<32x32xf32> to vector<32x32xbf16>
    %c0_15 = arith.constant 0 : index
    %c0_16 = arith.constant 0 : index
    %38 = vector.load %arg7[%c0_15, %c0_16] : memref<32x128xbf16, #tpu.memory_space<vmem>>, vector<32x128xbf16>
    %cst_17 = arith.constant dense<0.000000e+00> : vector<32x128xf32>
    %39 = tpu.matmul %37, %38, %cst_17 {dimension_numbers = #tpu.dot_dimension_numbers<[1], [0], [0], [1], [0, 0, 1, 1], [], []>} : vector<32x32xbf16>, vector<32x128xbf16>, vector<32x128xf32> -> vector<32x128xf32>
    %c0_18 = arith.constant 0 : index
    %c0_19 = arith.constant 0 : index
    %40 = vector.load %arg8[%c0_18, %c0_19] : memref<1x128xf32, #tpu.memory_space<vmem>>, vector<1x128xf32>
    %41 = vector.broadcast %40 : vector<1x128xf32> to vector<32x128xf32>
    %42 = arith.addf %39, %41 : vector<32x128xf32>
    %43 = vector.shape_cast %42 : vector<32x128xf32> to vector<2x16x128xf32>
    %c0_20 = arith.constant 0 : index
    %c0_21 = arith.constant 0 : index
    %44 = vector.load %arg1[%c0_20, %c0_21] : memref<2x16xf32, #tpu.memory_space<vmem>>, vector<2x16xf32>
    %45 = arith.negf %44 : vector<2x16xf32>
    %46 = math.exp %45 : vector<2x16xf32>
    %cst_22 = arith.constant 1.000000e+00 : f32
    %47 = vector.broadcast %cst_22 : f32 to vector<2x16xf32>
    %48 = arith.addf %47, %46 : vector<2x16xf32>
    %49 = arith.divf %47, %48 : vector<2x16xf32>
    %c0_23 = arith.constant 0 : index
    %c0_24 = arith.constant 0 : index
    %50 = vector.load %arg11[%c0_23, %c0_24] : memref<8x128xf32, #tpu.memory_space<vmem>>, vector<8x128xf32>
    %c0_25 = arith.constant 0 : index
    %c0_26 = arith.constant 0 : index
    %51 = vector.load %arg12[%c0_25, %c0_26] : memref<128x8xf32, #tpu.memory_space<vmem>>, vector<128x8xf32>
    %c0_27 = arith.constant 0 : index
    %c0_28 = arith.constant 0 : index
    %52 = vector.load %arg9[%c0_27, %c0_28] : memref<1x8xf32, #tpu.memory_space<vmem>>, vector<1x8xf32>
    %c0_29 = arith.constant 0 : index
    %c0_30 = arith.constant 0 : index
    %53 = vector.load %arg10[%c0_29, %c0_30] : memref<1x8xf32, #tpu.memory_space<vmem>>, vector<1x8xf32>
    %54 = vector.shape_cast %49 : vector<2x16xf32> to vector<2x16x1xf32>
    %cst_31 = arith.constant 1.250000e-01 : f32
    %55 = vector.broadcast %cst_31 : f32 to vector<2x16x8xf32>
    %56 = vector.broadcast %54 : vector<2x16x1xf32> to vector<2x16x8xf32>
    %57 = arith.mulf %56, %55 : vector<2x16x8xf32>
    %58 = vector.broadcast %54 : vector<2x16x1xf32> to vector<2x16x8xf32>
    %59 = arith.subf %58, %57 : vector<2x16x8xf32>
    %cst_32 = arith.constant dense<0.000000e+00> : vector<2x8xf32>
    %60 = vector.multi_reduction <add>, %57, %cst_32 [1] : vector<2x16x8xf32> to vector<2x8xf32>
    %cst_33 = arith.constant dense<0.000000e+00> : vector<2x8xf32>
    %61 = vector.multi_reduction <add>, %59, %cst_33 [1] : vector<2x16x8xf32> to vector<2x8xf32>
    %62 = vector.broadcast %52 : vector<1x8xf32> to vector<2x8xf32>
    %63 = arith.mulf %62, %60 : vector<2x8xf32>
    %64 = vector.broadcast %53 : vector<1x8xf32> to vector<2x8xf32>
    %65 = arith.mulf %64, %61 : vector<2x8xf32>
    %66 = arith.subf %63, %65 : vector<2x8xf32>
    %cst_34 = arith.constant 9.99999974E-6 : f32
    %67 = vector.broadcast %cst_34 : f32 to vector<2x8xf32>
    %68 = arith.addf %60, %67 : vector<2x8xf32>
    %cst_35 = arith.constant 1.000000e+00 : f32
    %69 = vector.broadcast %cst_35 : f32 to vector<2x8xf32>
    %70 = arith.divf %69, %68 : vector<2x8xf32>
    %71 = vector.shape_cast %57 : vector<2x16x8xf32> to vector<32x8xf32>
    %cst_36 = arith.constant dense<0.000000e+00> : vector<32x128xf32>
    %72 = tpu.matmul %71, %50, %cst_36 {dimension_numbers = #tpu.dot_dimension_numbers<[1], [0], [0], [1], [0, 0, 1, 1], [], []>} : vector<32x8xf32>, vector<8x128xf32>, vector<32x128xf32> -> vector<32x128xf32>
    %73 = vector.shape_cast %72 : vector<32x128xf32> to vector<2x16x128xf32>
    %cst_37 = arith.constant dense<0.000000e+00> : vector<2x128xf32>
    %74 = tpu.matmul %70, %50, %cst_37 {dimension_numbers = #tpu.dot_dimension_numbers<[1], [0], [0], [1], [0, 0, 1, 1], [], []>} : vector<2x8xf32>, vector<8x128xf32>, vector<2x128xf32> -> vector<2x128xf32>
    %75 = vector.shape_cast %74 : vector<2x128xf32> to vector<2x1x128xf32>
    %76 = arith.mulf %73, %43 : vector<2x16x128xf32>
    %cst_38 = arith.constant dense<0.000000e+00> : vector<2x128xf32>
    %77 = vector.multi_reduction <add>, %76, %cst_38 [1] : vector<2x16x128xf32> to vector<2x128xf32>
    %78 = vector.shape_cast %77 : vector<2x128xf32> to vector<2x1x128xf32>
    %79 = arith.mulf %78, %75 : vector<2x1x128xf32>
    %80 = vector.broadcast %79 : vector<2x1x128xf32> to vector<2x16x128xf32>
    %81 = arith.subf %43, %80 : vector<2x16x128xf32>
    %82 = arith.mulf %81, %81 : vector<2x16x128xf32>
    %83 = arith.mulf %73, %82 : vector<2x16x128xf32>
    %cst_39 = arith.constant dense<0.000000e+00> : vector<2x128xf32>
    %84 = vector.multi_reduction <add>, %83, %cst_39 [1] : vector<2x16x128xf32> to vector<2x128xf32>
    %85 = vector.shape_cast %84 : vector<2x128xf32> to vector<2x1x128xf32>
    %86 = arith.mulf %85, %75 : vector<2x1x128xf32>
    %cst_40 = arith.constant 9.99999974E-6 : f32
    %87 = vector.broadcast %cst_40 : f32 to vector<2x1x128xf32>
    %88 = arith.addf %86, %87 : vector<2x1x128xf32>
    %cst_41 = arith.constant 0.000000e+00 : f32
    %89 = vector.broadcast %cst_41 : f32 to vector<2x8xf32>
    %90 = arith.subf %89, %66 : vector<2x8xf32>
    %cst_42 = arith.constant 0.000000e+00 : f32
    %91 = vector.broadcast %cst_42 : f32 to vector<2x8xf32>
    %92 = arith.maximumf %90, %91 : vector<2x8xf32>
    %93 = vector.broadcast %cst_42 : f32 to vector<2x8xf32>
    %94 = arith.subf %90, %93 : vector<2x8xf32>
    %95 = arith.cmpf one, %94, %94 : vector<2x8xf32>
    %96 = vector.broadcast %cst_42 : f32 to vector<2x8xf32>
    %97 = arith.addf %90, %96 : vector<2x8xf32>
    %98 = math.absf %94 : vector<2x8xf32>
    %cst_43 = arith.constant 0.000000e+00 : f32
    %99 = vector.broadcast %cst_43 : f32 to vector<2x8xf32>
    %100 = arith.subf %99, %98 : vector<2x8xf32>
    %101 = math.exp %100 : vector<2x8xf32>
    %102 = math.log1p %101 : vector<2x8xf32>
    %103 = arith.addf %92, %102 : vector<2x8xf32>
    %104 = arith.select %95, %97, %103 : vector<2x8xi1>, vector<2x8xf32>
    %cst_44 = arith.constant 0.000000e+00 : f32
    %105 = vector.broadcast %cst_44 : f32 to vector<2x8xf32>
    %106 = arith.subf %105, %104 : vector<2x8xf32>
    %cst_45 = arith.constant 1.000000e+00 : f32
    %107 = vector.broadcast %cst_45 : f32 to vector<2x1x128xf32>
    %108 = arith.divf %107, %88 : vector<2x1x128xf32>
    %109 = math.log %88 : vector<2x1x128xf32>
    %110 = vector.broadcast %79 : vector<2x1x128xf32> to vector<2x16x128xf32>
    %111 = arith.subf %43, %110 : vector<2x16x128xf32>
    %112 = arith.mulf %111, %111 : vector<2x16x128xf32>
    %cst_46 = arith.constant 0.000000e+00 : f32
    %113 = vector.broadcast %cst_46 : f32 to vector<2x16x128xf32>
    %114 = arith.subf %113, %112 : vector<2x16x128xf32>
    %cst_47 = arith.constant 5.000000e-01 : f32
    %115 = vector.broadcast %cst_47 : f32 to vector<2x1x128xf32>
    %116 = arith.mulf %115, %108 : vector<2x1x128xf32>
    %117 = vector.broadcast %116 : vector<2x1x128xf32> to vector<2x16x128xf32>
    %118 = arith.mulf %114, %117 : vector<2x16x128xf32>
    %cst_48 = arith.constant 5.000000e-01 : f32
    %119 = vector.broadcast %cst_48 : f32 to vector<2x1x128xf32>
    %120 = arith.mulf %119, %109 : vector<2x1x128xf32>
    %121 = vector.broadcast %120 : vector<2x1x128xf32> to vector<2x16x128xf32>
    %122 = arith.subf %118, %121 : vector<2x16x128xf32>
    %123 = vector.shape_cast %122 : vector<2x16x128xf32> to vector<32x128xf32>
    %cst_49 = arith.constant dense<0.000000e+00> : vector<32x8xf32>
    %124 = tpu.matmul %123, %51, %cst_49 {dimension_numbers = #tpu.dot_dimension_numbers<[1], [0], [0], [1], [0, 0, 1, 1], [], []>} : vector<32x128xf32>, vector<128x8xf32>, vector<32x8xf32> -> vector<32x8xf32>
    %125 = vector.shape_cast %124 : vector<32x8xf32> to vector<2x16x8xf32>
    %126 = vector.shape_cast %106 : vector<2x8xf32> to vector<2x1x8xf32>
    %127 = vector.broadcast %126 : vector<2x1x8xf32> to vector<2x16x8xf32>
    %128 = arith.addf %127, %125 : vector<2x16x8xf32>
    %cst_50 = arith.constant dense<0xFF800000> : vector<2x16xf32>
    %129 = vector.multi_reduction <maximumf>, %128, %cst_50 [2] : vector<2x16x8xf32> to vector<2x16xf32>
    %130 = vector.shape_cast %129 : vector<2x16xf32> to vector<2x16x1xf32>
    %131 = vector.broadcast %130 : vector<2x16x1xf32> to vector<2x16x8xf32>
    %132 = arith.subf %128, %131 : vector<2x16x8xf32>
    %133 = math.exp %132 : vector<2x16x8xf32>
    %cst_51 = arith.constant dense<0.000000e+00> : vector<2x16xf32>
    %134 = vector.multi_reduction <add>, %133, %cst_51 [2] : vector<2x16x8xf32> to vector<2x16xf32>
    %135 = vector.shape_cast %134 : vector<2x16xf32> to vector<2x16x1xf32>
    %136 = vector.broadcast %135 : vector<2x16x1xf32> to vector<2x16x8xf32>
    %137 = arith.divf %133, %136 : vector<2x16x8xf32>
    %138 = vector.broadcast %54 : vector<2x16x1xf32> to vector<2x16x8xf32>
    %139 = arith.mulf %138, %137 : vector<2x16x8xf32>
    %140 = vector.broadcast %54 : vector<2x16x1xf32> to vector<2x16x8xf32>
    %141 = arith.subf %140, %139 : vector<2x16x8xf32>
    %cst_52 = arith.constant dense<0.000000e+00> : vector<2x8xf32>
    %142 = vector.multi_reduction <add>, %139, %cst_52 [1] : vector<2x16x8xf32> to vector<2x8xf32>
    %cst_53 = arith.constant dense<0.000000e+00> : vector<2x8xf32>
    %143 = vector.multi_reduction <add>, %141, %cst_53 [1] : vector<2x16x8xf32> to vector<2x8xf32>
    %144 = vector.broadcast %52 : vector<1x8xf32> to vector<2x8xf32>
    %145 = arith.mulf %144, %142 : vector<2x8xf32>
    %146 = vector.broadcast %53 : vector<1x8xf32> to vector<2x8xf32>
    %147 = arith.mulf %146, %143 : vector<2x8xf32>
    %148 = arith.subf %145, %147 : vector<2x8xf32>
    %cst_54 = arith.constant 9.99999974E-6 : f32
    %149 = vector.broadcast %cst_54 : f32 to vector<2x8xf32>
    %150 = arith.addf %142, %149 : vector<2x8xf32>
    %cst_55 = arith.constant 1.000000e+00 : f32
    %151 = vector.broadcast %cst_55 : f32 to vector<2x8xf32>
    %152 = arith.divf %151, %150 : vector<2x8xf32>
    %153 = vector.shape_cast %139 : vector<2x16x8xf32> to vector<32x8xf32>
    %cst_56 = arith.constant dense<0.000000e+00> : vector<32x128xf32>
    %154 = tpu.matmul %153, %50, %cst_56 {dimension_numbers = #tpu.dot_dimension_numbers<[1], [0], [0], [1], [0, 0, 1, 1], [], []>} : vector<32x8xf32>, vector<8x128xf32>, vector<32x128xf32> -> vector<32x128xf32>
    %155 = vector.shape_cast %154 : vector<32x128xf32> to vector<2x16x128xf32>
    %cst_57 = arith.constant dense<0.000000e+00> : vector<2x128xf32>
    %156 = tpu.matmul %152, %50, %cst_57 {dimension_numbers = #tpu.dot_dimension_numbers<[1], [0], [0], [1], [0, 0, 1, 1], [], []>} : vector<2x8xf32>, vector<8x128xf32>, vector<2x128xf32> -> vector<2x128xf32>
    %157 = vector.shape_cast %156 : vector<2x128xf32> to vector<2x1x128xf32>
    %158 = arith.mulf %155, %43 : vector<2x16x128xf32>
    %cst_58 = arith.constant dense<0.000000e+00> : vector<2x128xf32>
    %159 = vector.multi_reduction <add>, %158, %cst_58 [1] : vector<2x16x128xf32> to vector<2x128xf32>
    %160 = vector.shape_cast %159 : vector<2x128xf32> to vector<2x1x128xf32>
    %161 = arith.mulf %160, %157 : vector<2x1x128xf32>
    %162 = vector.broadcast %161 : vector<2x1x128xf32> to vector<2x16x128xf32>
    %163 = arith.subf %43, %162 : vector<2x16x128xf32>
    %164 = arith.mulf %163, %163 : vector<2x16x128xf32>
    %165 = arith.mulf %155, %164 : vector<2x16x128xf32>
    %cst_59 = arith.constant dense<0.000000e+00> : vector<2x128xf32>
    %166 = vector.multi_reduction <add>, %165, %cst_59 [1] : vector<2x16x128xf32> to vector<2x128xf32>
    %167 = vector.shape_cast %166 : vector<2x128xf32> to vector<2x1x128xf32>
    %168 = arith.mulf %167, %157 : vector<2x1x128xf32>
    %cst_60 = arith.constant 9.99999974E-6 : f32
    %169 = vector.broadcast %cst_60 : f32 to vector<2x1x128xf32>
    %170 = arith.addf %168, %169 : vector<2x1x128xf32>
    %cst_61 = arith.constant 0.000000e+00 : f32
    %171 = vector.broadcast %cst_61 : f32 to vector<2x8xf32>
    %172 = arith.subf %171, %148 : vector<2x8xf32>
    %cst_62 = arith.constant 0.000000e+00 : f32
    %173 = vector.broadcast %cst_62 : f32 to vector<2x8xf32>
    %174 = arith.maximumf %172, %173 : vector<2x8xf32>
    %175 = vector.broadcast %cst_62 : f32 to vector<2x8xf32>
    %176 = arith.subf %172, %175 : vector<2x8xf32>
    %177 = arith.cmpf one, %176, %176 : vector<2x8xf32>
    %178 = vector.broadcast %cst_62 : f32 to vector<2x8xf32>
    %179 = arith.addf %172, %178 : vector<2x8xf32>
    %180 = math.absf %176 : vector<2x8xf32>
    %cst_63 = arith.constant 0.000000e+00 : f32
    %181 = vector.broadcast %cst_63 : f32 to vector<2x8xf32>
    %182 = arith.subf %181, %180 : vector<2x8xf32>
    %183 = math.exp %182 : vector<2x8xf32>
    %184 = math.log1p %183 : vector<2x8xf32>
    %185 = arith.addf %174, %184 : vector<2x8xf32>
    %186 = arith.select %177, %179, %185 : vector<2x8xi1>, vector<2x8xf32>
    %cst_64 = arith.constant 0.000000e+00 : f32
    %187 = vector.broadcast %cst_64 : f32 to vector<2x8xf32>
    %188 = arith.subf %187, %186 : vector<2x8xf32>
    %cst_65 = arith.constant 1.000000e+00 : f32
    %189 = vector.broadcast %cst_65 : f32 to vector<2x1x128xf32>
    %190 = arith.divf %189, %170 : vector<2x1x128xf32>
    %191 = math.log %170 : vector<2x1x128xf32>
    %192 = vector.broadcast %161 : vector<2x1x128xf32> to vector<2x16x128xf32>
    %193 = arith.subf %43, %192 : vector<2x16x128xf32>
    %194 = arith.mulf %193, %193 : vector<2x16x128xf32>
    %cst_66 = arith.constant 0.000000e+00 : f32
    %195 = vector.broadcast %cst_66 : f32 to vector<2x16x128xf32>
    %196 = arith.subf %195, %194 : vector<2x16x128xf32>
    %cst_67 = arith.constant 5.000000e-01 : f32
    %197 = vector.broadcast %cst_67 : f32 to vector<2x1x128xf32>
    %198 = arith.mulf %197, %190 : vector<2x1x128xf32>
    %199 = vector.broadcast %198 : vector<2x1x128xf32> to vector<2x16x128xf32>
    %200 = arith.mulf %196, %199 : vector<2x16x128xf32>
    %cst_68 = arith.constant 5.000000e-01 : f32
    %201 = vector.broadcast %cst_68 : f32 to vector<2x1x128xf32>
    %202 = arith.mulf %201, %191 : vector<2x1x128xf32>
    %203 = vector.broadcast %202 : vector<2x1x128xf32> to vector<2x16x128xf32>
    %204 = arith.subf %200, %203 : vector<2x16x128xf32>
    %205 = vector.shape_cast %204 : vector<2x16x128xf32> to vector<32x128xf32>
    %cst_69 = arith.constant dense<0.000000e+00> : vector<32x8xf32>
    %206 = tpu.matmul %205, %51, %cst_69 {dimension_numbers = #tpu.dot_dimension_numbers<[1], [0], [0], [1], [0, 0, 1, 1], [], []>} : vector<32x128xf32>, vector<128x8xf32>, vector<32x8xf32> -> vector<32x8xf32>
    %207 = vector.shape_cast %206 : vector<32x8xf32> to vector<2x16x8xf32>
    %208 = vector.shape_cast %188 : vector<2x8xf32> to vector<2x1x8xf32>
    %209 = vector.broadcast %208 : vector<2x1x8xf32> to vector<2x16x8xf32>
    %210 = arith.addf %209, %207 : vector<2x16x8xf32>
    %cst_70 = arith.constant dense<0xFF800000> : vector<2x16xf32>
    %211 = vector.multi_reduction <maximumf>, %210, %cst_70 [2] : vector<2x16x8xf32> to vector<2x16xf32>
    %212 = vector.shape_cast %211 : vector<2x16xf32> to vector<2x16x1xf32>
    %213 = vector.broadcast %212 : vector<2x16x1xf32> to vector<2x16x8xf32>
    %214 = arith.subf %210, %213 : vector<2x16x8xf32>
    %215 = math.exp %214 : vector<2x16x8xf32>
    %cst_71 = arith.constant dense<0.000000e+00> : vector<2x16xf32>
    %216 = vector.multi_reduction <add>, %215, %cst_71 [2] : vector<2x16x8xf32> to vector<2x16xf32>
    %217 = vector.shape_cast %216 : vector<2x16xf32> to vector<2x16x1xf32>
    %218 = vector.broadcast %217 : vector<2x16x1xf32> to vector<2x16x8xf32>
    %219 = arith.divf %215, %218 : vector<2x16x8xf32>
    %220 = vector.broadcast %54 : vector<2x16x1xf32> to vector<2x16x8xf32>
    %221 = arith.mulf %220, %219 : vector<2x16x8xf32>
    %222 = vector.broadcast %54 : vector<2x16x1xf32> to vector<2x16x8xf32>
    %223 = arith.subf %222, %221 : vector<2x16x8xf32>
    %cst_72 = arith.constant dense<0.000000e+00> : vector<2x8xf32>
    %224 = vector.multi_reduction <add>, %221, %cst_72 [1] : vector<2x16x8xf32> to vector<2x8xf32>
    %cst_73 = arith.constant dense<0.000000e+00> : vector<2x8xf32>
    %225 = vector.multi_reduction <add>, %223, %cst_73 [1] : vector<2x16x8xf32> to vector<2x8xf32>
    %226 = vector.broadcast %52 : vector<1x8xf32> to vector<2x8xf32>
    %227 = arith.mulf %226, %224 : vector<2x8xf32>
    %228 = vector.broadcast %53 : vector<1x8xf32> to vector<2x8xf32>
    %229 = arith.mulf %228, %225 : vector<2x8xf32>
    %230 = arith.subf %227, %229 : vector<2x8xf32>
    %cst_74 = arith.constant 9.99999974E-6 : f32
    %231 = vector.broadcast %cst_74 : f32 to vector<2x8xf32>
    %232 = arith.addf %224, %231 : vector<2x8xf32>
    %cst_75 = arith.constant 1.000000e+00 : f32
    %233 = vector.broadcast %cst_75 : f32 to vector<2x8xf32>
    %234 = arith.divf %233, %232 : vector<2x8xf32>
    %235 = vector.shape_cast %221 : vector<2x16x8xf32> to vector<32x8xf32>
    %cst_76 = arith.constant dense<0.000000e+00> : vector<32x128xf32>
    %236 = tpu.matmul %235, %50, %cst_76 {dimension_numbers = #tpu.dot_dimension_numbers<[1], [0], [0], [1], [0, 0, 1, 1], [], []>} : vector<32x8xf32>, vector<8x128xf32>, vector<32x128xf32> -> vector<32x128xf32>
    %237 = vector.shape_cast %236 : vector<32x128xf32> to vector<2x16x128xf32>
    %cst_77 = arith.constant dense<0.000000e+00> : vector<2x128xf32>
    %238 = tpu.matmul %234, %50, %cst_77 {dimension_numbers = #tpu.dot_dimension_numbers<[1], [0], [0], [1], [0, 0, 1, 1], [], []>} : vector<2x8xf32>, vector<8x128xf32>, vector<2x128xf32> -> vector<2x128xf32>
    %239 = vector.shape_cast %238 : vector<2x128xf32> to vector<2x1x128xf32>
    %240 = arith.mulf %237, %43 : vector<2x16x128xf32>
    %cst_78 = arith.constant dense<0.000000e+00> : vector<2x128xf32>
    %241 = vector.multi_reduction <add>, %240, %cst_78 [1] : vector<2x16x128xf32> to vector<2x128xf32>
    %242 = vector.shape_cast %241 : vector<2x128xf32> to vector<2x1x128xf32>
    %243 = arith.mulf %242, %239 : vector<2x1x128xf32>
    %244 = vector.shape_cast %243 : vector<2x1x128xf32> to vector<2x128xf32>
    %245 = arith.truncf %244 : vector<2x128xf32> to vector<2x128xbf16>
    %c0_79 = arith.constant 0 : index
    %c0_80 = arith.constant 0 : index
    %246 = vector.load %arg13[%c0_79, %c0_80] : memref<128x512xbf16, #tpu.memory_space<vmem>>, vector<128x512xbf16>
    %cst_81 = arith.constant dense<0.000000e+00> : vector<2x512xf32>
    %247 = tpu.matmul %245, %246, %cst_81 {dimension_numbers = #tpu.dot_dimension_numbers<[1], [0], [0], [1], [0, 0, 1, 1], [], []>} : vector<2x128xbf16>, vector<128x512xbf16>, vector<2x512xf32> -> vector<2x512xf32>
    %248 = vector.shape_cast %247 : vector<2x512xf32> to vector<2x8x64xf32>
    %c0_82 = arith.constant 0 : index
    %c0_83 = arith.constant 0 : index
    %249 = vector.load %arg14[%c0_82, %c0_83] : memref<1x64xf32, #tpu.memory_space<vmem>>, vector<1x64xf32>
    %250 = vector.shape_cast %249 : vector<1x64xf32> to vector<1x1x64xf32>
    %251 = vector.broadcast %250 : vector<1x1x64xf32> to vector<2x8x64xf32>
    %252 = arith.addf %248, %251 : vector<2x8x64xf32>
    %253 = arith.negf %230 : vector<2x8xf32>
    %254 = math.exp %253 : vector<2x8xf32>
    %cst_84 = arith.constant 1.000000e+00 : f32
    %255 = vector.broadcast %cst_84 : f32 to vector<2x8xf32>
    %256 = arith.addf %255, %254 : vector<2x8xf32>
    %257 = arith.divf %255, %256 : vector<2x8xf32>
    %c0_85 = arith.constant 0 : index
    %c0_86 = arith.constant 0 : index
    %258 = vector.load %arg17[%c0_85, %c0_86] : memref<4x64xf32, #tpu.memory_space<vmem>>, vector<4x64xf32>
    %c0_87 = arith.constant 0 : index
    %c0_88 = arith.constant 0 : index
    %259 = vector.load %arg18[%c0_87, %c0_88] : memref<64x4xf32, #tpu.memory_space<vmem>>, vector<64x4xf32>
    %c0_89 = arith.constant 0 : index
    %c0_90 = arith.constant 0 : index
    %260 = vector.load %arg15[%c0_89, %c0_90] : memref<1x4xf32, #tpu.memory_space<vmem>>, vector<1x4xf32>
    %c0_91 = arith.constant 0 : index
    %c0_92 = arith.constant 0 : index
    %261 = vector.load %arg16[%c0_91, %c0_92] : memref<1x4xf32, #tpu.memory_space<vmem>>, vector<1x4xf32>
    %262 = vector.shape_cast %257 : vector<2x8xf32> to vector<2x8x1xf32>
    %cst_93 = arith.constant 2.500000e-01 : f32
    %263 = vector.broadcast %cst_93 : f32 to vector<2x8x4xf32>
    %264 = vector.broadcast %262 : vector<2x8x1xf32> to vector<2x8x4xf32>
    %265 = arith.mulf %264, %263 : vector<2x8x4xf32>
    %266 = vector.broadcast %262 : vector<2x8x1xf32> to vector<2x8x4xf32>
    %267 = arith.subf %266, %265 : vector<2x8x4xf32>
    %cst_94 = arith.constant dense<0.000000e+00> : vector<2x4xf32>
    %268 = vector.multi_reduction <add>, %265, %cst_94 [1] : vector<2x8x4xf32> to vector<2x4xf32>
    %cst_95 = arith.constant dense<0.000000e+00> : vector<2x4xf32>
    %269 = vector.multi_reduction <add>, %267, %cst_95 [1] : vector<2x8x4xf32> to vector<2x4xf32>
    %270 = vector.broadcast %260 : vector<1x4xf32> to vector<2x4xf32>
    %271 = arith.mulf %270, %268 : vector<2x4xf32>
    %272 = vector.broadcast %261 : vector<1x4xf32> to vector<2x4xf32>
    %273 = arith.mulf %272, %269 : vector<2x4xf32>
    %274 = arith.subf %271, %273 : vector<2x4xf32>
    %cst_96 = arith.constant 9.99999974E-6 : f32
    %275 = vector.broadcast %cst_96 : f32 to vector<2x4xf32>
    %276 = arith.addf %268, %275 : vector<2x4xf32>
    %cst_97 = arith.constant 1.000000e+00 : f32
    %277 = vector.broadcast %cst_97 : f32 to vector<2x4xf32>
    %278 = arith.divf %277, %276 : vector<2x4xf32>
    %279 = vector.shape_cast %265 : vector<2x8x4xf32> to vector<16x4xf32>
    %cst_98 = arith.constant dense<0.000000e+00> : vector<16x64xf32>
    %280 = tpu.matmul %279, %258, %cst_98 {dimension_numbers = #tpu.dot_dimension_numbers<[1], [0], [0], [1], [0, 0, 1, 1], [], []>} : vector<16x4xf32>, vector<4x64xf32>, vector<16x64xf32> -> vector<16x64xf32>
    %281 = vector.shape_cast %280 : vector<16x64xf32> to vector<2x8x64xf32>
    %cst_99 = arith.constant dense<0.000000e+00> : vector<2x64xf32>
    %282 = tpu.matmul %278, %258, %cst_99 {dimension_numbers = #tpu.dot_dimension_numbers<[1], [0], [0], [1], [0, 0, 1, 1], [], []>} : vector<2x4xf32>, vector<4x64xf32>, vector<2x64xf32> -> vector<2x64xf32>
    %283 = vector.shape_cast %282 : vector<2x64xf32> to vector<2x1x64xf32>
    %284 = arith.mulf %281, %252 : vector<2x8x64xf32>
    %cst_100 = arith.constant dense<0.000000e+00> : vector<2x64xf32>
    %285 = vector.multi_reduction <add>, %284, %cst_100 [1] : vector<2x8x64xf32> to vector<2x64xf32>
    %286 = vector.shape_cast %285 : vector<2x64xf32> to vector<2x1x64xf32>
    %287 = arith.mulf %286, %283 : vector<2x1x64xf32>
    %288 = vector.broadcast %287 : vector<2x1x64xf32> to vector<2x8x64xf32>
    %289 = arith.subf %252, %288 : vector<2x8x64xf32>
    %290 = arith.mulf %289, %289 : vector<2x8x64xf32>
    %291 = arith.mulf %281, %290 : vector<2x8x64xf32>
    %cst_101 = arith.constant dense<0.000000e+00> : vector<2x64xf32>
    %292 = vector.multi_reduction <add>, %291, %cst_101 [1] : vector<2x8x64xf32> to vector<2x64xf32>
    %293 = vector.shape_cast %292 : vector<2x64xf32> to vector<2x1x64xf32>
    %294 = arith.mulf %293, %283 : vector<2x1x64xf32>
    %cst_102 = arith.constant 9.99999974E-6 : f32
    %295 = vector.broadcast %cst_102 : f32 to vector<2x1x64xf32>
    %296 = arith.addf %294, %295 : vector<2x1x64xf32>
    %cst_103 = arith.constant 0.000000e+00 : f32
    %297 = vector.broadcast %cst_103 : f32 to vector<2x4xf32>
    %298 = arith.subf %297, %274 : vector<2x4xf32>
    %cst_104 = arith.constant 0.000000e+00 : f32
    %299 = vector.broadcast %cst_104 : f32 to vector<2x4xf32>
    %300 = arith.maximumf %298, %299 : vector<2x4xf32>
    %301 = vector.broadcast %cst_104 : f32 to vector<2x4xf32>
    %302 = arith.subf %298, %301 : vector<2x4xf32>
    %303 = arith.cmpf one, %302, %302 : vector<2x4xf32>
    %304 = vector.broadcast %cst_104 : f32 to vector<2x4xf32>
    %305 = arith.addf %298, %304 : vector<2x4xf32>
    %306 = math.absf %302 : vector<2x4xf32>
    %cst_105 = arith.constant 0.000000e+00 : f32
    %307 = vector.broadcast %cst_105 : f32 to vector<2x4xf32>
    %308 = arith.subf %307, %306 : vector<2x4xf32>
    %309 = math.exp %308 : vector<2x4xf32>
    %310 = math.log1p %309 : vector<2x4xf32>
    %311 = arith.addf %300, %310 : vector<2x4xf32>
    %312 = arith.select %303, %305, %311 : vector<2x4xi1>, vector<2x4xf32>
    %cst_106 = arith.constant 0.000000e+00 : f32
    %313 = vector.broadcast %cst_106 : f32 to vector<2x4xf32>
    %314 = arith.subf %313, %312 : vector<2x4xf32>
    %cst_107 = arith.constant 1.000000e+00 : f32
    %315 = vector.broadcast %cst_107 : f32 to vector<2x1x64xf32>
    %316 = arith.divf %315, %296 : vector<2x1x64xf32>
    %317 = math.log %296 : vector<2x1x64xf32>
    %318 = vector.broadcast %287 : vector<2x1x64xf32> to vector<2x8x64xf32>
    %319 = arith.subf %252, %318 : vector<2x8x64xf32>
    %320 = arith.mulf %319, %319 : vector<2x8x64xf32>
    %cst_108 = arith.constant 0.000000e+00 : f32
    %321 = vector.broadcast %cst_108 : f32 to vector<2x8x64xf32>
    %322 = arith.subf %321, %320 : vector<2x8x64xf32>
    %cst_109 = arith.constant 5.000000e-01 : f32
    %323 = vector.broadcast %cst_109 : f32 to vector<2x1x64xf32>
    %324 = arith.mulf %323, %316 : vector<2x1x64xf32>
    %325 = vector.broadcast %324 : vector<2x1x64xf32> to vector<2x8x64xf32>
    %326 = arith.mulf %322, %325 : vector<2x8x64xf32>
    %cst_110 = arith.constant 5.000000e-01 : f32
    %327 = vector.broadcast %cst_110 : f32 to vector<2x1x64xf32>
    %328 = arith.mulf %327, %317 : vector<2x1x64xf32>
    %329 = vector.broadcast %328 : vector<2x1x64xf32> to vector<2x8x64xf32>
    %330 = arith.subf %326, %329 : vector<2x8x64xf32>
    %331 = vector.shape_cast %330 : vector<2x8x64xf32> to vector<16x64xf32>
    %cst_111 = arith.constant dense<0.000000e+00> : vector<16x4xf32>
    %332 = tpu.matmul %331, %259, %cst_111 {dimension_numbers = #tpu.dot_dimension_numbers<[1], [0], [0], [1], [0, 0, 1, 1], [], []>} : vector<16x64xf32>, vector<64x4xf32>, vector<16x4xf32> -> vector<16x4xf32>
    %333 = vector.shape_cast %332 : vector<16x4xf32> to vector<2x8x4xf32>
    %334 = vector.shape_cast %314 : vector<2x4xf32> to vector<2x1x4xf32>
    %335 = vector.broadcast %334 : vector<2x1x4xf32> to vector<2x8x4xf32>
    %336 = arith.addf %335, %333 : vector<2x8x4xf32>
    %cst_112 = arith.constant dense<0xFF800000> : vector<2x8xf32>
    %337 = vector.multi_reduction <maximumf>, %336, %cst_112 [2] : vector<2x8x4xf32> to vector<2x8xf32>
    %338 = vector.shape_cast %337 : vector<2x8xf32> to vector<2x8x1xf32>
    %339 = vector.broadcast %338 : vector<2x8x1xf32> to vector<2x8x4xf32>
    %340 = arith.subf %336, %339 : vector<2x8x4xf32>
    %341 = math.exp %340 : vector<2x8x4xf32>
    %cst_113 = arith.constant dense<0.000000e+00> : vector<2x8xf32>
    %342 = vector.multi_reduction <add>, %341, %cst_113 [2] : vector<2x8x4xf32> to vector<2x8xf32>
    %343 = vector.shape_cast %342 : vector<2x8xf32> to vector<2x8x1xf32>
    %344 = vector.broadcast %343 : vector<2x8x1xf32> to vector<2x8x4xf32>
    %345 = arith.divf %341, %344 : vector<2x8x4xf32>
    %346 = vector.broadcast %262 : vector<2x8x1xf32> to vector<2x8x4xf32>
    %347 = arith.mulf %346, %345 : vector<2x8x4xf32>
    %348 = vector.broadcast %262 : vector<2x8x1xf32> to vector<2x8x4xf32>
    %349 = arith.subf %348, %347 : vector<2x8x4xf32>
    %cst_114 = arith.constant dense<0.000000e+00> : vector<2x4xf32>
    %350 = vector.multi_reduction <add>, %347, %cst_114 [1] : vector<2x8x4xf32> to vector<2x4xf32>
    %cst_115 = arith.constant dense<0.000000e+00> : vector<2x4xf32>
    %351 = vector.multi_reduction <add>, %349, %cst_115 [1] : vector<2x8x4xf32> to vector<2x4xf32>
    %352 = vector.broadcast %260 : vector<1x4xf32> to vector<2x4xf32>
    %353 = arith.mulf %352, %350 : vector<2x4xf32>
    %354 = vector.broadcast %261 : vector<1x4xf32> to vector<2x4xf32>
    %355 = arith.mulf %354, %351 : vector<2x4xf32>
    %356 = arith.subf %353, %355 : vector<2x4xf32>
    %cst_116 = arith.constant 9.99999974E-6 : f32
    %357 = vector.broadcast %cst_116 : f32 to vector<2x4xf32>
    %358 = arith.addf %350, %357 : vector<2x4xf32>
    %cst_117 = arith.constant 1.000000e+00 : f32
    %359 = vector.broadcast %cst_117 : f32 to vector<2x4xf32>
    %360 = arith.divf %359, %358 : vector<2x4xf32>
    %361 = vector.shape_cast %347 : vector<2x8x4xf32> to vector<16x4xf32>
    %cst_118 = arith.constant dense<0.000000e+00> : vector<16x64xf32>
    %362 = tpu.matmul %361, %258, %cst_118 {dimension_numbers = #tpu.dot_dimension_numbers<[1], [0], [0], [1], [0, 0, 1, 1], [], []>} : vector<16x4xf32>, vector<4x64xf32>, vector<16x64xf32> -> vector<16x64xf32>
    %363 = vector.shape_cast %362 : vector<16x64xf32> to vector<2x8x64xf32>
    %cst_119 = arith.constant dense<0.000000e+00> : vector<2x64xf32>
    %364 = tpu.matmul %360, %258, %cst_119 {dimension_numbers = #tpu.dot_dimension_numbers<[1], [0], [0], [1], [0, 0, 1, 1], [], []>} : vector<2x4xf32>, vector<4x64xf32>, vector<2x64xf32> -> vector<2x64xf32>
    %365 = vector.shape_cast %364 : vector<2x64xf32> to vector<2x1x64xf32>
    %366 = arith.mulf %363, %252 : vector<2x8x64xf32>
    %cst_120 = arith.constant dense<0.000000e+00> : vector<2x64xf32>
    %367 = vector.multi_reduction <add>, %366, %cst_120 [1] : vector<2x8x64xf32> to vector<2x64xf32>
    %368 = vector.shape_cast %367 : vector<2x64xf32> to vector<2x1x64xf32>
    %369 = arith.mulf %368, %365 : vector<2x1x64xf32>
    %370 = vector.broadcast %369 : vector<2x1x64xf32> to vector<2x8x64xf32>
    %371 = arith.subf %252, %370 : vector<2x8x64xf32>
    %372 = arith.mulf %371, %371 : vector<2x8x64xf32>
    %373 = arith.mulf %363, %372 : vector<2x8x64xf32>
    %cst_121 = arith.constant dense<0.000000e+00> : vector<2x64xf32>
    %374 = vector.multi_reduction <add>, %373, %cst_121 [1] : vector<2x8x64xf32> to vector<2x64xf32>
    %375 = vector.shape_cast %374 : vector<2x64xf32> to vector<2x1x64xf32>
    %376 = arith.mulf %375, %365 : vector<2x1x64xf32>
    %cst_122 = arith.constant 9.99999974E-6 : f32
    %377 = vector.broadcast %cst_122 : f32 to vector<2x1x64xf32>
    %378 = arith.addf %376, %377 : vector<2x1x64xf32>
    %cst_123 = arith.constant 0.000000e+00 : f32
    %379 = vector.broadcast %cst_123 : f32 to vector<2x4xf32>
    %380 = arith.subf %379, %356 : vector<2x4xf32>
    %cst_124 = arith.constant 0.000000e+00 : f32
    %381 = vector.broadcast %cst_124 : f32 to vector<2x4xf32>
    %382 = arith.maximumf %380, %381 : vector<2x4xf32>
    %383 = vector.broadcast %cst_124 : f32 to vector<2x4xf32>
    %384 = arith.subf %380, %383 : vector<2x4xf32>
    %385 = arith.cmpf one, %384, %384 : vector<2x4xf32>
    %386 = vector.broadcast %cst_124 : f32 to vector<2x4xf32>
    %387 = arith.addf %380, %386 : vector<2x4xf32>
    %388 = math.absf %384 : vector<2x4xf32>
    %cst_125 = arith.constant 0.000000e+00 : f32
    %389 = vector.broadcast %cst_125 : f32 to vector<2x4xf32>
    %390 = arith.subf %389, %388 : vector<2x4xf32>
    %391 = math.exp %390 : vector<2x4xf32>
    %392 = math.log1p %391 : vector<2x4xf32>
    %393 = arith.addf %382, %392 : vector<2x4xf32>
    %394 = arith.select %385, %387, %393 : vector<2x4xi1>, vector<2x4xf32>
    %cst_126 = arith.constant 0.000000e+00 : f32
    %395 = vector.broadcast %cst_126 : f32 to vector<2x4xf32>
    %396 = arith.subf %395, %394 : vector<2x4xf32>
    %cst_127 = arith.constant 1.000000e+00 : f32
    %397 = vector.broadcast %cst_127 : f32 to vector<2x1x64xf32>
    %398 = arith.divf %397, %378 : vector<2x1x64xf32>
    %399 = math.log %378 : vector<2x1x64xf32>
    %400 = vector.broadcast %369 : vector<2x1x64xf32> to vector<2x8x64xf32>
    %401 = arith.subf %252, %400 : vector<2x8x64xf32>
    %402 = arith.mulf %401, %401 : vector<2x8x64xf32>
    %cst_128 = arith.constant 0.000000e+00 : f32
    %403 = vector.broadcast %cst_128 : f32 to vector<2x8x64xf32>
    %404 = arith.subf %403, %402 : vector<2x8x64xf32>
    %cst_129 = arith.constant 5.000000e-01 : f32
    %405 = vector.broadcast %cst_129 : f32 to vector<2x1x64xf32>
    %406 = arith.mulf %405, %398 : vector<2x1x64xf32>
    %407 = vector.broadcast %406 : vector<2x1x64xf32> to vector<2x8x64xf32>
    %408 = arith.mulf %404, %407 : vector<2x8x64xf32>
    %cst_130 = arith.constant 5.000000e-01 : f32
    %409 = vector.broadcast %cst_130 : f32 to vector<2x1x64xf32>
    %410 = arith.mulf %409, %399 : vector<2x1x64xf32>
    %411 = vector.broadcast %410 : vector<2x1x64xf32> to vector<2x8x64xf32>
    %412 = arith.subf %408, %411 : vector<2x8x64xf32>
    %413 = vector.shape_cast %412 : vector<2x8x64xf32> to vector<16x64xf32>
    %cst_131 = arith.constant dense<0.000000e+00> : vector<16x4xf32>
    %414 = tpu.matmul %413, %259, %cst_131 {dimension_numbers = #tpu.dot_dimension_numbers<[1], [0], [0], [1], [0, 0, 1, 1], [], []>} : vector<16x64xf32>, vector<64x4xf32>, vector<16x4xf32> -> vector<16x4xf32>
    %415 = vector.shape_cast %414 : vector<16x4xf32> to vector<2x8x4xf32>
    %416 = vector.shape_cast %396 : vector<2x4xf32> to vector<2x1x4xf32>
    %417 = vector.broadcast %416 : vector<2x1x4xf32> to vector<2x8x4xf32>
    %418 = arith.addf %417, %415 : vector<2x8x4xf32>
    %cst_132 = arith.constant dense<0xFF800000> : vector<2x8xf32>
    %419 = vector.multi_reduction <maximumf>, %418, %cst_132 [2] : vector<2x8x4xf32> to vector<2x8xf32>
    %420 = vector.shape_cast %419 : vector<2x8xf32> to vector<2x8x1xf32>
    %421 = vector.broadcast %420 : vector<2x8x1xf32> to vector<2x8x4xf32>
    %422 = arith.subf %418, %421 : vector<2x8x4xf32>
    %423 = math.exp %422 : vector<2x8x4xf32>
    %cst_133 = arith.constant dense<0.000000e+00> : vector<2x8xf32>
    %424 = vector.multi_reduction <add>, %423, %cst_133 [2] : vector<2x8x4xf32> to vector<2x8xf32>
    %425 = vector.shape_cast %424 : vector<2x8xf32> to vector<2x8x1xf32>
    %426 = vector.broadcast %425 : vector<2x8x1xf32> to vector<2x8x4xf32>
    %427 = arith.divf %423, %426 : vector<2x8x4xf32>
    %428 = vector.broadcast %262 : vector<2x8x1xf32> to vector<2x8x4xf32>
    %429 = arith.mulf %428, %427 : vector<2x8x4xf32>
    %430 = vector.broadcast %262 : vector<2x8x1xf32> to vector<2x8x4xf32>
    %431 = arith.subf %430, %429 : vector<2x8x4xf32>
    %cst_134 = arith.constant dense<0.000000e+00> : vector<2x4xf32>
    %432 = vector.multi_reduction <add>, %429, %cst_134 [1] : vector<2x8x4xf32> to vector<2x4xf32>
    %cst_135 = arith.constant dense<0.000000e+00> : vector<2x4xf32>
    %433 = vector.multi_reduction <add>, %431, %cst_135 [1] : vector<2x8x4xf32> to vector<2x4xf32>
    %434 = vector.broadcast %260 : vector<1x4xf32> to vector<2x4xf32>
    %435 = arith.mulf %434, %432 : vector<2x4xf32>
    %436 = vector.broadcast %261 : vector<1x4xf32> to vector<2x4xf32>
    %437 = arith.mulf %436, %433 : vector<2x4xf32>
    %438 = arith.subf %435, %437 : vector<2x4xf32>
    %cst_136 = arith.constant 9.99999974E-6 : f32
    %439 = vector.broadcast %cst_136 : f32 to vector<2x4xf32>
    %440 = arith.addf %432, %439 : vector<2x4xf32>
    %cst_137 = arith.constant 1.000000e+00 : f32
    %441 = vector.broadcast %cst_137 : f32 to vector<2x4xf32>
    %442 = arith.divf %441, %440 : vector<2x4xf32>
    %443 = vector.shape_cast %429 : vector<2x8x4xf32> to vector<16x4xf32>
    %cst_138 = arith.constant dense<0.000000e+00> : vector<16x64xf32>
    %444 = tpu.matmul %443, %258, %cst_138 {dimension_numbers = #tpu.dot_dimension_numbers<[1], [0], [0], [1], [0, 0, 1, 1], [], []>} : vector<16x4xf32>, vector<4x64xf32>, vector<16x64xf32> -> vector<16x64xf32>
    %445 = vector.shape_cast %444 : vector<16x64xf32> to vector<2x8x64xf32>
    %cst_139 = arith.constant dense<0.000000e+00> : vector<2x64xf32>
    %446 = tpu.matmul %442, %258, %cst_139 {dimension_numbers = #tpu.dot_dimension_numbers<[1], [0], [0], [1], [0, 0, 1, 1], [], []>} : vector<2x4xf32>, vector<4x64xf32>, vector<2x64xf32> -> vector<2x64xf32>
    %447 = vector.shape_cast %446 : vector<2x64xf32> to vector<2x1x64xf32>
    %448 = arith.mulf %445, %252 : vector<2x8x64xf32>
    %cst_140 = arith.constant dense<0.000000e+00> : vector<2x64xf32>
    %449 = vector.multi_reduction <add>, %448, %cst_140 [1] : vector<2x8x64xf32> to vector<2x64xf32>
    %450 = vector.shape_cast %449 : vector<2x64xf32> to vector<2x1x64xf32>
    %451 = arith.mulf %450, %447 : vector<2x1x64xf32>
    %452 = vector.broadcast %451 : vector<2x1x64xf32> to vector<2x8x64xf32>
    %453 = arith.subf %252, %452 : vector<2x8x64xf32>
    %454 = arith.mulf %453, %453 : vector<2x8x64xf32>
    %455 = arith.mulf %445, %454 : vector<2x8x64xf32>
    %cst_141 = arith.constant dense<0.000000e+00> : vector<2x64xf32>
    %456 = vector.multi_reduction <add>, %455, %cst_141 [1] : vector<2x8x64xf32> to vector<2x64xf32>
    %457 = vector.shape_cast %456 : vector<2x64xf32> to vector<2x1x64xf32>
    %458 = arith.mulf %457, %447 : vector<2x1x64xf32>
    %cst_142 = arith.constant 9.99999974E-6 : f32
    %459 = vector.broadcast %cst_142 : f32 to vector<2x1x64xf32>
    %460 = arith.addf %458, %459 : vector<2x1x64xf32>
    %461 = vector.shape_cast %451 : vector<2x1x64xf32> to vector<2x64xf32>
    %462 = vector.shape_cast %460 : vector<2x1x64xf32> to vector<2x64xf32>
    %c0_143 = arith.constant 0 : index
    %c0_144 = arith.constant 0 : index
    %463 = vector.load %arg19[%c0_143, %c0_144] : memref<2x4xf32, #tpu.memory_space<vmem>>, vector<2x4xf32>
    tpu.vector_store %arg19[%c0_143, %c0_144], %438 {strides = array<i32>} : memref<2x4xf32, #tpu.memory_space<vmem>>, vector<2x4xf32>,
    %c0_145 = arith.constant 0 : index
    %c0_146 = arith.constant 0 : index
    %464 = vector.load %arg20[%c0_145, %c0_146] : memref<2x128xf32, #tpu.memory_space<vmem>>, vector<2x64xf32>
    tpu.vector_store %arg20[%c0_145, %c0_146], %461 {strides = array<i32>} : memref<2x128xf32, #tpu.memory_space<vmem>>, vector<2x64xf32>,
    %c0_147 = arith.constant 0 : index
    %c64 = arith.constant 64 : index
    %465 = vector.load %arg20[%c0_147, %c64] : memref<2x128xf32, #tpu.memory_space<vmem>>, vector<2x64xf32>
    tpu.vector_store %arg20[%c0_147, %c64], %462 {strides = array<i32>} : memref<2x128xf32, #tpu.memory_space<vmem>>, vector<2x64xf32>,
    return
  }
  func.func @transform_0(%arg0: i32) -> (i32, i32) {
    %c0_i32 = arith.constant 0 : i32
    %c0_i32_0 = arith.constant 0 : i32
    return %arg0, %c0_i32 : i32, i32
  }
  func.func @transform_1(%arg0: i32) -> (i32, i32) {
    %c0_i32 = arith.constant 0 : i32
    %c0_i32_0 = arith.constant 0 : i32
    return %arg0, %c0_i32 : i32, i32
  }
  func.func @transform_2(%arg0: i32) -> (i32, i32) {
    %c0_i32 = arith.constant 0 : i32
    %c0_i32_0 = arith.constant 0 : i32
    %c0_i32_1 = arith.constant 0 : i32
    return %c0_i32, %c0_i32_0 : i32, i32
  }
  func.func @transform_3(%arg0: i32) -> (i32, i32) {
    %c0_i32 = arith.constant 0 : i32
    %c0_i32_0 = arith.constant 0 : i32
    %c0_i32_1 = arith.constant 0 : i32
    return %c0_i32, %c0_i32_0 : i32, i32
  }
  func.func @transform_4(%arg0: i32) -> (i32, i32) {
    %c0_i32 = arith.constant 0 : i32
    %c0_i32_0 = arith.constant 0 : i32
    %c0_i32_1 = arith.constant 0 : i32
    return %c0_i32, %c0_i32_0 : i32, i32
  }
  func.func @transform_5(%arg0: i32) -> (i32, i32) {
    %c0_i32 = arith.constant 0 : i32
    %c0_i32_0 = arith.constant 0 : i32
    %c0_i32_1 = arith.constant 0 : i32
    return %c0_i32, %c0_i32_0 : i32, i32
  }
  func.func @transform_6(%arg0: i32) -> (i32, i32) {
    %c0_i32 = arith.constant 0 : i32
    %c0_i32_0 = arith.constant 0 : i32
    %c0_i32_1 = arith.constant 0 : i32
    return %c0_i32, %c0_i32_0 : i32, i32
  }
  func.func @transform_7(%arg0: i32) -> (i32, i32) {
    %c0_i32 = arith.constant 0 : i32
    %c0_i32_0 = arith.constant 0 : i32
    %c0_i32_1 = arith.constant 0 : i32
    return %c0_i32, %c0_i32_0 : i32, i32
  }
  func.func @transform_8(%arg0: i32) -> (i32, i32) {
    %c0_i32 = arith.constant 0 : i32
    %c0_i32_0 = arith.constant 0 : i32
    %c0_i32_1 = arith.constant 0 : i32
    return %c0_i32, %c0_i32_0 : i32, i32
  }
  func.func @transform_9(%arg0: i32) -> (i32, i32) {
    %c0_i32 = arith.constant 0 : i32
    %c0_i32_0 = arith.constant 0 : i32
    %c0_i32_1 = arith.constant 0 : i32
    return %c0_i32, %c0_i32_0 : i32, i32
  }
  func.func @transform_10(%arg0: i32) -> (i32, i32) {
    %c0_i32 = arith.constant 0 : i32
    %c0_i32_0 = arith.constant 0 : i32
    %c0_i32_1 = arith.constant 0 : i32
    return %c0_i32, %c0_i32_0 : i32, i32
  }
  func.func @transform_11(%arg0: i32) -> (i32, i32) {
    %c0_i32 = arith.constant 0 : i32
    %c0_i32_0 = arith.constant 0 : i32
    %c0_i32_1 = arith.constant 0 : i32
    return %c0_i32, %c0_i32_0 : i32, i32
  }
  func.func @transform_12(%arg0: i32) -> (i32, i32) {
    %c0_i32 = arith.constant 0 : i32
    %c0_i32_0 = arith.constant 0 : i32
    %c0_i32_1 = arith.constant 0 : i32
    return %c0_i32, %c0_i32_0 : i32, i32
  }
  func.func @transform_13(%arg0: i32) -> (i32, i32) {
    %c0_i32 = arith.constant 0 : i32
    %c0_i32_0 = arith.constant 0 : i32
    %c0_i32_1 = arith.constant 0 : i32
    return %c0_i32, %c0_i32_0 : i32, i32
  }
  func.func @transform_14(%arg0: i32) -> (i32, i32) {
    %c0_i32 = arith.constant 0 : i32
    %c0_i32_0 = arith.constant 0 : i32
    %c0_i32_1 = arith.constant 0 : i32
    return %c0_i32, %c0_i32_0 : i32, i32
  }
  func.func @transform_15(%arg0: i32) -> (i32, i32) {
    %c0_i32 = arith.constant 0 : i32
    %c0_i32_0 = arith.constant 0 : i32
    %c0_i32_1 = arith.constant 0 : i32
    return %c0_i32, %c0_i32_0 : i32, i32
  }
  func.func @transform_16(%arg0: i32) -> (i32, i32) {
    %c0_i32 = arith.constant 0 : i32
    %c0_i32_0 = arith.constant 0 : i32
    %c0_i32_1 = arith.constant 0 : i32
    return %c0_i32, %c0_i32_0 : i32, i32
  }
  func.func @transform_17(%arg0: i32) -> (i32, i32) {
    %c0_i32 = arith.constant 0 : i32
    %c0_i32_0 = arith.constant 0 : i32
    %c0_i32_1 = arith.constant 0 : i32
    return %c0_i32, %c0_i32_0 : i32, i32
  }
  func.func @transform_18(%arg0: i32) -> (i32, i32) {
    %c0_i32 = arith.constant 0 : i32
    %c0_i32_0 = arith.constant 0 : i32
    return %arg0, %c0_i32 : i32, i32
  }
  func.func @transform_19(%arg0: i32) -> (i32, i32) {
    %c0_i32 = arith.constant 0 : i32
    %c0_i32_0 = arith.constant 0 : i32
    return %arg0, %c0_i32 : i32, i32
  }
}

</mosaic_0001>

<llo_original>
// kernel: tpu_custom_call.1
$region0: #{tpu_custom_call.1}
  #allocation0 [shape = 'u32[]', space=smem, size = 0x4, offset = 0x4, fixed_abs, tag = 'smem constant byte address 0x4 - core index']
  #allocation1 [shape = 'u32[144,128]{1,0:T(1,128)}', space=vmem, size = 0x12000, scoped, tag = 'internal scratch']
  %s0 = inlined_call_operand.vmem [shape: f32[2,16], index: 0, kind: input, shape index: {}]
  %s1 = inlined_call_operand.vmem [shape: f32[32,32], index: 1, kind: input, shape index: {}]
  %s2 = inlined_call_operand.vmem [shape: bf16[32,32], index: 2, kind: input, shape index: {}]
  %s3 = inlined_call_operand.vmem [shape: f32[1,32], index: 3, kind: input, shape index: {}]
  %s4 = inlined_call_operand.vmem [shape: f32[1,32], index: 4, kind: input, shape index: {}]
  %s5 = inlined_call_operand.vmem [shape: f32[1,32], index: 5, kind: input, shape index: {}]
  %s6 = inlined_call_operand.vmem [shape: bf16[32,128], index: 6, kind: input, shape index: {}]
  %s7 = inlined_call_operand.vmem [shape: f32[1,128], index: 7, kind: input, shape index: {}]
  %s8 = inlined_call_operand.vmem [shape: f32[1,8], index: 8, kind: input, shape index: {}]
  %s9 = inlined_call_operand.vmem [shape: f32[1,8], index: 9, kind: input, shape index: {}]
  %s10 = inlined_call_operand.vmem [shape: f32[8,128], index: 10, kind: input, shape index: {}]
  %s11 = inlined_call_operand.vmem [shape: f32[128,8], index: 11, kind: input, shape index: {}]
  %s12 = inlined_call_operand.hbm [shape: bf16[128,512], index: 12, kind: input, shape index: {}]
  %s13 = inlined_call_operand.vmem [shape: f32[1,64], index: 13, kind: input, shape index: {}]
  %s14 = inlined_call_operand.vmem [shape: f32[1,4], index: 14, kind: input, shape index: {}]
  %s15 = inlined_call_operand.vmem [shape: f32[1,4], index: 15, kind: input, shape index: {}]
  %s16 = inlined_call_operand.vmem [shape: f32[4,64], index: 16, kind: input, shape index: {}]
  %s17 = inlined_call_operand.vmem [shape: f32[64,4], index: 17, kind: input, shape index: {}]
  %s18 = inlined_call_operand.hbm [shape: f32[2,4], index: 18, kind: output, shape index: {0}]
  %s19 = inlined_call_operand.hbm [shape: f32[2,128], index: 19, kind: output, shape index: {1}]
  %20 = xla_tuple %s18, %s19
  %s21 = sld [smem:[#allocation0]]
  $region94: #{tpu_custom_call.1} parent=0
    _
  %s23 = ssub.s32 1, %s21
  %s24 = scalar_select 0, %s23, %s21
  $region1: #{tpu_custom_call.1} parent=0
    #allocation2 [shape = 'u8[131072]{0}', space=vmem, size = 0x20000, scoped, tag = 'input window, operand 12, single buffered']
    #allocation3 [shape = 's32[1]{0}', space=sflag, size = 0x4, scoped, tag = 'scoped memory for tpu_custom_call.1']
    #allocation4 [shape = 's32[1]{0}', space=sflag, size = 0x4, scoped, tag = 'scoped memory for tpu_custom_call.1']
    #allocation5 [shape = 'u8[1024]{0}', space=vmem, size = 0x400, scoped, tag = 'output window, operand 0, single buffered']
    #allocation6 [shape = 'u8[1024]{0}', space=vmem, size = 0x400, scoped, tag = 'output window, operand 1, single buffered']
    #allocation7 [shape = 's32[1]{0}', space=sflag, size = 0x4, scoped, tag = 'scoped memory for tpu_custom_call.1']
    %25 = vsyncpa [#allocation3], 0
    %26 = vsyncpa [#allocation4], 0
    %27 = vsyncpa [#allocation7], 0
    // Predicated region
    $region2: #{tpu_custom_call.1} parent=1 // pred_check
      _
    $region3: #{tpu_custom_call.1} parent=1 // pred_check_branch
      %29 = sbr.rel (0) target = $region5
    $region4: #{tpu_custom_call.1} parent=1 // pred_region
      _
    $region5: #{tpu_custom_call.1} parent=1 // pred_fallthru
      _
    // Predicated region
    $region6: #{tpu_custom_call.1} parent=1 // pred_check
      _
    $region7: #{tpu_custom_call.1} parent=1 // pred_check_branch
      %31 = sbr.rel (0) target = $region9
    $region8: #{tpu_custom_call.1} parent=1 // pred_region
      _
    $region9: #{tpu_custom_call.1} parent=1 // pred_fallthru
      _
    // Predicated region
    $region10: #{tpu_custom_call.1} parent=1 // pred_check
      _
    $region11: #{tpu_custom_call.1} parent=1 // pred_check_branch
      %33 = sbr.rel (0) target = $region13
    $region12: #{tpu_custom_call.1} parent=1 // pred_region
      _
    $region13: #{tpu_custom_call.1} parent=1 // pred_fallthru
      _
    // Predicated region
    $region14: #{tpu_custom_call.1} parent=1 // pred_check
      _
    $region15: #{tpu_custom_call.1} parent=1 // pred_check_branch
      %35 = sbr.rel (0) target = $region17
    $region16: #{tpu_custom_call.1} parent=1 // pred_region
      _
    $region17: #{tpu_custom_call.1} parent=1 // pred_fallthru
      _
    // Predicated region
    $region18: #{tpu_custom_call.1} parent=1 // pred_check
      _
    $region19: #{tpu_custom_call.1} parent=1 // pred_check_branch
      %37 = sbr.rel (0) target = $region21
    $region20: #{tpu_custom_call.1} parent=1 // pred_region
      _
    $region21: #{tpu_custom_call.1} parent=1 // pred_fallthru
      _
    // Predicated region
    $region22: #{tpu_custom_call.1} parent=1 // pred_check
      _
    $region23: #{tpu_custom_call.1} parent=1 // pred_check_branch
      %39 = sbr.rel (0) target = $region25
    $region24: #{tpu_custom_call.1} parent=1 // pred_region
      _
    $region25: #{tpu_custom_call.1} parent=1 // pred_fallthru
      _
    // Predicated region
    $region26: #{tpu_custom_call.1} parent=1 // pred_check
      _
    $region27: #{tpu_custom_call.1} parent=1 // pred_check_branch
      %41 = sbr.rel (0) target = $region29
    $region28: #{tpu_custom_call.1} parent=1 // pred_region
      _
    $region29: #{tpu_custom_call.1} parent=1 // pred_fallthru
      _
    // Predicated region
    $region30: #{tpu_custom_call.1} parent=1 // pred_check
      _
    $region31: #{tpu_custom_call.1} parent=1 // pred_check_branch
      %43 = sbr.rel (0) target = $region33
    $region32: #{tpu_custom_call.1} parent=1 // pred_region
      _
    $region33: #{tpu_custom_call.1} parent=1 // pred_fallthru
      _
    // Predicated region
    $region34: #{tpu_custom_call.1} parent=1 // pred_check
      _
    $region35: #{tpu_custom_call.1} parent=1 // pred_check_branch
      %45 = sbr.rel (0) target = $region37
    $region36: #{tpu_custom_call.1} parent=1 // pred_region
      _
    $region37: #{tpu_custom_call.1} parent=1 // pred_fallthru
      _
    // Predicated region
    $region38: #{tpu_custom_call.1} parent=1 // pred_check
      _
    $region39: #{tpu_custom_call.1} parent=1 // pred_check_branch
      %47 = sbr.rel (0) target = $region41
    $region40: #{tpu_custom_call.1} parent=1 // pred_region
      _
    $region41: #{tpu_custom_call.1} parent=1 // pred_fallthru
      _
    // Predicated region
    $region42: #{tpu_custom_call.1} parent=1 // pred_check
      _
    $region43: #{tpu_custom_call.1} parent=1 // pred_check_branch
      %49 = sbr.rel (0) target = $region45
    $region44: #{tpu_custom_call.1} parent=1 // pred_region
      _
    $region45: #{tpu_custom_call.1} parent=1 // pred_fallthru
      _
    // Predicated region
    $region46: #{tpu_custom_call.1} parent=1 // pred_check
      _
    $region47: #{tpu_custom_call.1} parent=1 // pred_check_branch
      %51 = sbr.rel (0) target = $region49
    $region48: #{tpu_custom_call.1} parent=1 // pred_region
      _
    $region49: #{tpu_custom_call.1} parent=1 // pred_fallthru
      _
    // Predicated region
    $region50: #{tpu_custom_call.1} parent=1 // pred_check
      _
    $region51: #{tpu_custom_call.1} parent=1 // pred_check_branch
      %53 = sbr.rel (0) target = $region53
    $region52: #{tpu_custom_call.1} parent=1 // pred_region
      %s55 = ssub.s32 4096, 4096
      %56 = vsyncadd [#allocation3], %s55
      %s57 = sshll.u32 [#allocation2], 4
      %s58 = int_to_ptr.vmem [resolvable:$true] %s57
      %63 = dma.hbm_to_vmem [thread:$0]  %s12, 4096, %s58, [#allocation3], 256, 256, 16
    $region53: #{tpu_custom_call.1} parent=1 // pred_fallthru
      _
    // Predicated region
    $region54: #{tpu_custom_call.1} parent=1 // pred_check
      _
    $region55: #{tpu_custom_call.1} parent=1 // pred_check_branch
      %65 = sbr.rel (0) target = $region57
    $region56: #{tpu_custom_call.1} parent=1 // pred_region
      _
    $region57: #{tpu_custom_call.1} parent=1 // pred_fallthru
      _
    // Predicated region
    $region58: #{tpu_custom_call.1} parent=1 // pred_check
      _
    $region59: #{tpu_custom_call.1} parent=1 // pred_check_branch
      %67 = sbr.rel (0) target = $region61
    $region60: #{tpu_custom_call.1} parent=1 // pred_region
      _
    $region61: #{tpu_custom_call.1} parent=1 // pred_fallthru
      _
    // Predicated region
    $region62: #{tpu_custom_call.1} parent=1 // pred_check
      _
    $region63: #{tpu_custom_call.1} parent=1 // pred_check_branch
      %69 = sbr.rel (0) target = $region65
    $region64: #{tpu_custom_call.1} parent=1 // pred_region
      _
    $region65: #{tpu_custom_call.1} parent=1 // pred_fallthru
      _
    // Predicated region
    $region66: #{tpu_custom_call.1} parent=1 // pred_check
      _
    $region67: #{tpu_custom_call.1} parent=1 // pred_check_branch
      %71 = sbr.rel (0) target = $region69
    $region68: #{tpu_custom_call.1} parent=1 // pred_region
      _
    $region69: #{tpu_custom_call.1} parent=1 // pred_fallthru
      _
    // Predicated region
    $region70: #{tpu_custom_call.1} parent=1 // pred_check
      _
    $region71: #{tpu_custom_call.1} parent=1 // pred_check_branch
      %73 = sbr.rel (0) target = $region73
    $region72: #{tpu_custom_call.1} parent=1 // pred_region
      _
    $region73: #{tpu_custom_call.1} parent=1 // pred_fallthru
      _
    // Predicated region
    $region74: #{tpu_custom_call.1} parent=1 // pred_check
      _
    $region75: #{tpu_custom_call.1} parent=1 // pred_check_branch
      %75 = sbr.rel (0) target = $region77
    $region76: #{tpu_custom_call.1} parent=1 // pred_region
      %76 = dma.done [#allocation3], 4096
    $region77: #{tpu_custom_call.1} parent=1 // pred_fallthru
      _
    %v78 = vld [vmem:[%s1] sm:$0xff]
    %v79 = vld [vmem:[%s1 + $0x8] sm:$0xff]
    %v80 = vld [vmem:[%s1 + $0x10] sm:$0xff]
    %v81 = vld [vmem:[%s1 + $0x18] sm:$0xff]
    %v82 = vpack.c.bf16 %v79, %v78
    %v83 = vpack.c.bf16 %v81, %v80
    %v84 = vld [vmem:[%s2] sm:$0xf]
    %v85 = vld [vmem:[%s2 + $0x4] sm:$0xf]
    %v86 = vld [vmem:[%s2 + $0x8] sm:$0xf]
    %v87 = vld [vmem:[%s2 + $0xc] sm:$0xf]
    %v88 = vld [vmem:[%s3] sm:$0x1]
    %v90 = vlaneseq
    %v91 = vshrl.u32 %v90, 7
    %v92 = vsub.s32 0, %v91
    %v93 = vrot.slane %v88, %v92
    %v99 = vunpack.c.l.b16 %v84
    %v100 = vunpack.c.l.b16 %v85
    %v101 = vunpack.c.l.b16 %v86
    %v102 = vunpack.c.l.b16 %v87
    %v103 = vpack.c.b16 %v100, %v99
    %v104 = vpack.c.b16 %v102, %v101
    %vm107 = vcmask 261120
    %v109 = vsel %vm107, %v82, 0
    %v112 = vsel %vm107, %v83, 0
    %114 = vmatprep.subr.bf16.mxu0 0
    %115 = vmatpush1.bf16.msra.mxu0 %v103
    %116 = vmatprep.subr.bf16.mxu0 0
    %117 = vmatpush1.bf16.msra.mxu0 %v104
    %118 = vmatprep.subr.bf16.mxu0 0
    %119 = vmatpush1.bf16.msra.mxu0 0
    %120 = vmatprep.subr.bf16.mxu0 0
    %121 = vmatpush1.bf16.msra.mxu0 0
    %122 = vmatprep.subr.bf16.mxu0 0
    %123 = vmatpush1.bf16.msra.mxu0 0
    %124 = vmatprep.subr.bf16.mxu0 0
    %125 = vmatpush1.bf16.msra.mxu0 0
    %126 = vmatprep.subr.bf16.mxu0 0
    %127 = vmatpush1.bf16.msra.mxu0 0
    %128 = vmatprep.subr.bf16.mxu0 0
    %129 = vmatpush1.bf16.msra.mxu0 0
    %130 = vmatprep.subr.bf16.mxu0 0
    %131 = vmatpush1.bf16.msra.mxu0 0
    %132 = vmatprep.subr.bf16.mxu0 0
    %133 = vmatpush1.bf16.msra.mxu0 0
    %134 = vmatprep.subr.bf16.mxu0 0
    %135 = vmatpush1.bf16.msra.mxu0 0
    %136 = vmatprep.subr.bf16.mxu0 0
    %137 = vmatpush1.bf16.msra.mxu0 0
    %138 = vmatprep.subr.bf16.mxu0 0
    %139 = vmatpush1.bf16.msra.mxu0 0
    %140 = vmatprep.subr.bf16.mxu0 0
    %141 = vmatpush1.bf16.msra.mxu0 0
    %142 = vmatprep.subr.bf16.mxu0 0
    %143 = vmatpush1.bf16.msra.mxu0 0
    %144 = vmatprep.subr.bf16.mxu0 0
    %145 = vmatpush1.bf16.msra.mxu0 0
    %146 = vmatprep.mubr.bf16.mxu0 0
    %147 = vmatmul.mubr.bf16.gmra.mrb[0].mxu0 %v109
    %v148 = vpop.f32.mrb[0].mxu0
    %v149 = vadd.f32 %v93, %v148
    %v150 = vpop.f32.mrb[0].mxu0
    %v151 = vpop.f32.mrb[0].mxu0
    %v152 = vadd.f32 %v93, %v151
    %v153 = vpop.f32.mrb[0].mxu0
    %154 = vmatprep.mubr.bf16.mxu0 0
    %155 = vmatmul.mubr.bf16.gmra.mrb[0].mxu0 %v112
    %v156 = vpop.f32.mrb[0].mxu0
    %v157 = vadd.f32 %v93, %v156
    %v158 = vpop.f32.mrb[0].mxu0
    %v159 = vpop.f32.mrb[0].mxu0
    %v160 = vadd.f32 %v93, %v159
    %v161 = vpop.f32.mrb[0].mxu0
    %162 = vdwg.mxu0
    %v163 = vxor.u32 %v149, 2147483648
    %v164 = vxor.u32 %v152, 2147483648
    %v165 = vxor.u32 %v157, 2147483648
    %v166 = vxor.u32 %v160, 2147483648
    %v167 = vmul.f32 %v163, 1.442695
    %v168 = vpow.pop %v167
    %v169 = vmul.f32 %v164, 1.442695
    %v170 = vpow.pop %v169
    %v171 = vmul.f32 %v165, 1.442695
    %v172 = vpow.pop %v171
    %v173 = vmul.f32 %v166, 1.442695
    %v174 = vpow.pop %v173
    %v175 = vadd.f32 %v168, 1.0
    %v176 = vadd.f32 %v170, 1.0
    %v177 = vadd.f32 %v172, 1.0
    %v178 = vadd.f32 %v174, 1.0
    %v179 = vrcp.pop %v175
    %v180 = vmul.f32 1.0, %v179
    %v181 = vrcp.pop %v176
    %v182 = vmul.f32 1.0, %v181
    %v183 = vrcp.pop %v177
    %v184 = vmul.f32 1.0, %v183
    %v185 = vrcp.pop %v178
    %v186 = vmul.f32 1.0, %v185
    %v187 = vmul.f32 %v149, %v180
    %v188 = vmul.f32 %v152, %v182
    %v189 = vmul.f32 %v157, %v184
    %v190 = vmul.f32 %v160, %v186
    %v191 = vsel %vm107, %v187, 0.0
    %192 = vadd.xlane.f32.xlu0 %v191
    %v193 = vpop.xlane.xlu0 %192
    %v194 = vsel %vm107, %v188, 0.0
    %195 = vadd.xlane.f32.xlu0 %v194
    %v196 = vpop.xlane.xlu0 %195
    %v197 = vsel %vm107, %v189, 0.0
    %198 = vadd.xlane.f32.xlu0 %v197
    %v199 = vpop.xlane.xlu0 %198
    %v200 = vsel %vm107, %v190, 0.0
    %201 = vadd.xlane.f32.xlu0 %v200
    %v202 = vpop.xlane.xlu0 %201
    %v203 = vrcp.pop 32.0
    %v204 = vmul.f32 %v193, %v203
    %v205 = vmul.f32 %v196, %v203
    %v206 = vmul.f32 %v199, %v203
    %v207 = vmul.f32 %v202, %v203
    %v208 = vsub.f32 %v187, %v204
    %v209 = vsub.f32 %v188, %v205
    %v210 = vsub.f32 %v189, %v206
    %v211 = vsub.f32 %v190, %v207
    %v212 = vmul.f32 %v208, %v208
    %v213 = vmul.f32 %v209, %v209
    %v214 = vmul.f32 %v210, %v210
    %v215 = vmul.f32 %v211, %v211
    %v216 = vsel %vm107, %v212, 0.0
    %217 = vadd.xlane.f32.xlu0 %v216
    %v218 = vpop.xlane.xlu0 %217
    %v219 = vsel %vm107, %v213, 0.0
    %220 = vadd.xlane.f32.xlu0 %v219
    %v221 = vpop.xlane.xlu0 %220
    %v222 = vsel %vm107, %v214, 0.0
    %223 = vadd.xlane.f32.xlu0 %v222
    %v224 = vpop.xlane.xlu0 %223
    %v225 = vsel %vm107, %v215, 0.0
    %226 = vadd.xlane.f32.xlu0 %v225
    %v227 = vpop.xlane.xlu0 %226
    %v228 = vmul.f32 %v218, %v203
    %v229 = vmul.f32 %v221, %v203
    %v230 = vmul.f32 %v224, %v203
    %v231 = vmul.f32 %v227, %v203
    %v232 = vadd.f32 %v228, 1e-05
    %v233 = vadd.f32 %v229, 1e-05
    %v234 = vadd.f32 %v230, 1e-05
    %v235 = vadd.f32 %v231, 1e-05
    %v236 = vrsqrt.pop %v232
    %v237 = vrsqrt.pop %v233
    %v238 = vrsqrt.pop %v234
    %v239 = vrsqrt.pop %v235
    %v240 = vmul.f32 %v208, %v236
    %v241 = vmul.f32 %v209, %v237
    %v242 = vmul.f32 %v210, %v238
    %v243 = vmul.f32 %v211, %v239
    %v244 = vld [vmem:[%s4] sm:$0x1]
    %v246 = vlaneseq
    %v247 = vshrl.u32 %v246, 7
    %v248 = vsub.s32 0, %v247
    %v249 = vrot.slane %v244, %v248
    %v251 = vmul.f32 %v240, %v249
    %v252 = vmul.f32 %v241, %v249
    %v253 = vmul.f32 %v242, %v249
    %v254 = vmul.f32 %v243, %v249
    %v255 = vld [vmem:[%s5] sm:$0x1]
    %v257 = vlaneseq
    %v258 = vshrl.u32 %v257, 7
    %v259 = vsub.s32 0, %v258
    %v260 = vrot.slane %v255, %v259
    %v262 = vadd.f32 %v251, %v260
    %v263 = vadd.f32 %v252, %v260
    %v264 = vadd.f32 %v253, %v260
    %v265 = vadd.f32 %v254, %v260
    %v266 = vpack.c.bf16 %v263, %v262
    %v267 = vpack.c.bf16 %v265, %v264
    %v268 = vld [vmem:[%s6] sm:$0xf]
    %v269 = vld [vmem:[%s6 + $0x4] sm:$0xf]
    %v270 = vld [vmem:[%s6 + $0x8] sm:$0xf]
    %v271 = vld [vmem:[%s6 + $0xc] sm:$0xf]
    %v272 = vld [vmem:[%s7] sm:$0x1]
    %v274 = vlaneseq
    %v275 = vshrl.u32 %v274, 7
    %v276 = vsub.s32 0, %v275
    %v277 = vrot.slane %v272, %v276
    %v283 = vunpack.c.l.b16 %v268
    %v284 = vunpack.c.l.b16 %v269
    %v285 = vunpack.c.l.b16 %v270
    %v286 = vunpack.c.l.b16 %v271
    %v287 = vpack.c.b16 %v284, %v283
    %v288 = vpack.c.b16 %v286, %v285
    %v292 = vsel %vm107, %v266, 0
    %v295 = vsel %vm107, %v267, 0
    %297 = vmatprep.subr.bf16.mxu0 0
    %298 = vmatpush1.bf16.msra.mxu0 %v287
    %299 = vmatprep.subr.bf16.mxu0 0
    %300 = vmatpush1.bf16.msra.mxu0 %v288
    %301 = vmatprep.subr.bf16.mxu0 0
    %302 = vmatpush1.bf16.msra.mxu0 0
    %303 = vmatprep.subr.bf16.mxu0 0
    %304 = vmatpush1.bf16.msra.mxu0 0
    %305 = vmatprep.subr.bf16.mxu0 0
    %306 = vmatpush1.bf16.msra.mxu0 0
    %307 = vmatprep.subr.bf16.mxu0 0
    %308 = vmatpush1.bf16.msra.mxu0 0
    %309 = vmatprep.subr.bf16.mxu0 0
    %310 = vmatpush1.bf16.msra.mxu0 0
    %311 = vmatprep.subr.bf16.mxu0 0
    %312 = vmatpush1.bf16.msra.mxu0 0
    %313 = vmatprep.subr.bf16.mxu0 0
    %314 = vmatpush1.bf16.msra.mxu0 0
    %315 = vmatprep.subr.bf16.mxu0 0
    %316 = vmatpush1.bf16.msra.mxu0 0
    %317 = vmatprep.subr.bf16.mxu0 0
    %318 = vmatpush1.bf16.msra.mxu0 0
    %319 = vmatprep.subr.bf16.mxu0 0
    %320 = vmatpush1.bf16.msra.mxu0 0
    %321 = vmatprep.subr.bf16.mxu0 0
    %322 = vmatpush1.bf16.msra.mxu0 0
    %323 = vmatprep.subr.bf16.mxu0 0
    %324 = vmatpush1.bf16.msra.mxu0 0
    %325 = vmatprep.subr.bf16.mxu0 0
    %326 = vmatpush1.bf16.msra.mxu0 0
    %327 = vmatprep.subr.bf16.mxu0 0
    %328 = vmatpush1.bf16.msra.mxu0 0
    %329 = vmatprep.mubr.bf16.mxu0 0
    %330 = vmatmul.mubr.bf16.gmra.mrb[0].mxu0 %v292
    %v331 = vpop.f32.mrb[0].mxu0
    %v332 = vadd.f32 %v277, %v331
    %v333 = vpop.f32.mrb[0].mxu0
    %v334 = vpop.f32.mrb[0].mxu0
    %v335 = vadd.f32 %v277, %v334
    %v336 = vpop.f32.mrb[0].mxu0
    %337 = vmatprep.mubr.bf16.mxu0 0
    %338 = vmatmul.mubr.bf16.gmra.mrb[0].mxu0 %v295
    %v339 = vpop.f32.mrb[0].mxu0
    %v340 = vadd.f32 %v277, %v339
    %v341 = vpop.f32.mrb[0].mxu0
    %v342 = vpop.f32.mrb[0].mxu0
    %v343 = vadd.f32 %v277, %v342
    %v344 = vpop.f32.mrb[0].mxu0
    %345 = vdwg.mxu0
    %v346 = vld [vmem:[%s0] sm:$0x3]
    %v347 = vxor.u32 %v346, 2147483648
    %v348 = vmul.f32 %v347, 1.442695
    %v349 = vpow.pop %v348
    %v350 = vadd.f32 %v349, 1.0
    %v351 = vrcp.pop %v350
    %v352 = vmul.f32 1.0, %v351
    %v353 = vld [vmem:[%s10] sm:$0xff]
    %v354 = vld [vmem:[%s11] sm:$0xff]
    %v355 = vld [vmem:[%s11 + $0x8] sm:$0xff]
    %v356 = vld [vmem:[%s11 + $0x10] sm:$0xff]
    %v357 = vld [vmem:[%s11 + $0x18] sm:$0xff]
    %v358 = vld [vmem:[%s11 + $0x20] sm:$0xff]
    %v359 = vld [vmem:[%s11 + $0x28] sm:$0xff]
    %v360 = vld [vmem:[%s11 + $0x30] sm:$0xff]
    %v361 = vld [vmem:[%s11 + $0x38] sm:$0xff]
    %v362 = vld [vmem:[%s11 + $0x40] sm:$0xff]
    %v363 = vld [vmem:[%s11 + $0x48] sm:$0xff]
    %v364 = vld [vmem:[%s11 + $0x50] sm:$0xff]
    %v365 = vld [vmem:[%s11 + $0x58] sm:$0xff]
    %v366 = vld [vmem:[%s11 + $0x60] sm:$0xff]
    %v367 = vld [vmem:[%s11 + $0x68] sm:$0xff]
    %v368 = vld [vmem:[%s11 + $0x70] sm:$0xff]
    %v369 = vld [vmem:[%s11 + $0x78] sm:$0xff]
    %v370 = vld [vmem:[%s8] sm:$0x1]
    %v371 = vld [vmem:[%s9] sm:$0x1]
    %v372 = vlaneseq
    %v373 = vshrl.u32 %v372, 7
    %v374 = vsub.s32 0, %v373
    %v375 = vrot.slane %v352, %v374
    %377 = vbcast.lane.b32.xlu0 %v375, 256
    %v378 = vpop.permute.xlu0 %377
    %s380 = sor.u32 256, 8
    %381 = vbcast.lane.b32.xlu0 %v375, %s380
    %v382 = vpop.permute.xlu0 %381
    %v383 = vlaneseq
    %v384 = vshrl.u32 %v383, 7
    %v385 = vsub.s32 1, %v384
    %v386 = vrot.slane %v352, %v385
    %388 = vbcast.lane.b32.xlu0 %v386, 256
    %v389 = vpop.permute.xlu0 %388
    %s391 = sor.u32 256, 8
    %392 = vbcast.lane.b32.xlu0 %v386, %s391
    %v393 = vpop.permute.xlu0 %392
    %v394 = vmul.f32 %v378, 0.125
    %v395 = vmul.f32 %v382, 0.125
    %v396 = vmul.f32 %v389, 0.125
    %v397 = vmul.f32 %v393, 0.125
    %v398 = vsub.f32 %v378, %v394
    %v399 = vsub.f32 %v382, %v395
    %v400 = vsub.f32 %v389, %v396
    %v401 = vsub.f32 %v393, %v397
    %v402 = vadd.f32 %v394, %v395
    %v403 = vrot.slane %v402, 4
    %v404 = vadd.f32 %v402, %v403
    %v405 = vrot.slane %v404, 2
    %v406 = vadd.f32 %v404, %v405
    %v407 = vrot.slane %v406, 1
    %v408 = vadd.f32 %v406, %v407
    %v409 = vadd.f32 %v396, %v397
    %v410 = vrot.slane %v409, 4
    %v411 = vadd.f32 %v409, %v410
    %v412 = vrot.slane %v411, 2
    %v413 = vadd.f32 %v411, %v412
    %v414 = vrot.slane %v413, 1
    %v415 = vadd.f32 %v413, %v414
    %v416 = vadd.f32 %v398, %v399
    %v417 = vrot.slane %v416, 4
    %v418 = vadd.f32 %v416, %v417
    %v419 = vrot.slane %v418, 2
    %v420 = vadd.f32 %v418, %v419
    %v421 = vrot.slane %v420, 1
    %v422 = vadd.f32 %v420, %v421
    %v423 = vadd.f32 %v400, %v401
    %v424 = vrot.slane %v423, 4
    %v425 = vadd.f32 %v423, %v424
    %v426 = vrot.slane %v425, 2
    %v427 = vadd.f32 %v425, %v426
    %v428 = vrot.slane %v427, 1
    %v429 = vadd.f32 %v427, %v428
    %v431 = vlaneseq
    %v432 = vshrl.u32 %v431, 7
    %v433 = vsub.s32 0, %v432
    %v434 = vrot.slane %v370, %v433
    %vm438 = vcmask 1041409
    %v439 = vsel %vm438, %v415, %v408
    %v441 = vmul.f32 %v434, %v439
    %v443 = vlaneseq
    %v444 = vshrl.u32 %v443, 7
    %v445 = vsub.s32 0, %v444
    %v446 = vrot.slane %v371, %v445
    %v450 = vsel %vm438, %v429, %v422
    %v452 = vmul.f32 %v446, %v450
    %v453 = vsub.f32 %v441, %v452
    %v454 = vadd.f32 %v408, 1e-05
    %v455 = vadd.f32 %v415, 1e-05
    %v456 = vrcp.pop %v454
    %v457 = vmul.f32 1.0, %v456
    %v458 = vrcp.pop %v455
    %v459 = vmul.f32 1.0, %v458
    %vm460 = vcmask 64512
    %v462 = vsel %vm460, %v394, 0
    %v465 = vsel %vm460, %v395, 0
    %v468 = vsel %vm460, %v396, 0
    %v471 = vsel %vm460, %v397, 0
    %473 = vmatprep.subr.mxu0 0.0
    %474 = vmatpush1.msra.mxu0 %v353
    %475 = vmatprep.subr.mxu0 0.0
    %476 = vmatpush1.msra.mxu0 0.0
    %477 = vmatprep.subr.mxu0 0.0
    %478 = vmatpush1.msra.mxu0 0.0
    %479 = vmatprep.subr.mxu0 0.0
    %480 = vmatpush1.msra.mxu0 0.0
    %481 = vmatprep.subr.mxu0 0.0
    %482 = vmatpush1.msra.mxu0 0.0
    %483 = vmatprep.subr.mxu0 0.0
    %484 = vmatpush1.msra.mxu0 0.0
    %485 = vmatprep.subr.mxu0 0.0
    %486 = vmatpush1.msra.mxu0 0.0
    %487 = vmatprep.subr.mxu0 0.0
    %488 = vmatpush1.msra.mxu0 0.0
    %489 = vmatprep.subr.mxu0 0.0
    %490 = vmatpush1.msra.mxu0 0.0
    %491 = vmatprep.subr.mxu0 0.0
    %492 = vmatpush1.msra.mxu0 0.0
    %493 = vmatprep.subr.mxu0 0.0
    %494 = vmatpush1.msra.mxu0 0.0
    %495 = vmatprep.subr.mxu0 0.0
    %496 = vmatpush1.msra.mxu0 0.0
    %497 = vmatprep.subr.mxu0 0.0
    %498 = vmatpush1.msra.mxu0 0.0
    %499 = vmatprep.subr.mxu0 0.0
    %500 = vmatpush1.msra.mxu0 0.0
    %501 = vmatprep.subr.mxu0 0.0
    %502 = vmatpush1.msra.mxu0 0.0
    %503 = vmatprep.subr.mxu0 0.0
    %504 = vmatpush1.msra.mxu0 0.0
    %505 = vmatprep.subr.mxu0 0.0
    %506 = vmatpush1.msra.mxu0 0.0
    %507 = vmatprep.subr.mxu0 0.0
    %508 = vmatpush1.msra.mxu0 0.0
    %509 = vmatprep.subr.mxu0 0.0
    %510 = vmatpush1.msra.mxu0 0.0
    %511 = vmatprep.subr.mxu0 0.0
    %512 = vmatpush1.msra.mxu0 0.0
    %513 = vmatprep.subr.mxu0 0.0
    %514 = vmatpush1.msra.mxu0 0.0
    %515 = vmatprep.subr.mxu0 0.0
    %516 = vmatpush1.msra.mxu0 0.0
    %517 = vmatprep.subr.mxu0 0.0
    %518 = vmatpush1.msra.mxu0 0.0
    %519 = vmatprep.subr.mxu0 0.0
    %520 = vmatpush1.msra.mxu0 0.0
    %521 = vmatprep.subr.mxu0 0.0
    %522 = vmatpush1.msra.mxu0 0.0
    %523 = vmatprep.subr.mxu0 0.0
    %524 = vmatpush1.msra.mxu0 0.0
    %525 = vmatprep.subr.mxu0 0.0
    %526 = vmatpush1.msra.mxu0 0.0
    %527 = vmatprep.subr.mxu0 0.0
    %528 = vmatpush1.msra.mxu0 0.0
    %529 = vmatprep.subr.mxu0 0.0
    %530 = vmatpush1.msra.mxu0 0.0
    %531 = vmatprep.subr.mxu0 0.0
    %532 = vmatpush1.msra.mxu0 0.0
    %533 = vmatprep.subr.mxu0 0.0
    %534 = vmatpush1.msra.mxu0 0.0
    %535 = vmatprep.subr.mxu0 0.0
    %536 = vmatpush1.msra.mxu0 0.0
    %537 = vmatprep.mubr.f32.mxu0 0.0
    %538 = vmatmul.mubr.f32.gmra.mrb[0].mxu0 %v462
    %v539 = vpop.f32.mrb[0].mxu0
    %v540 = vadd.f32 0.0, %v539
    %v541 = vpop.f32.mrb[0].mxu0
    %542 = vmatprep.mubr.f32.mxu0 0.0
    %543 = vmatmul.mubr.f32.gmra.mrb[0].mxu0 %v465
    %v544 = vpop.f32.mrb[0].mxu0
    %v545 = vadd.f32 0.0, %v544
    %v546 = vpop.f32.mrb[0].mxu0
    %547 = vmatprep.mubr.f32.mxu0 0.0
    %548 = vmatmul.mubr.f32.gmra.mrb[0].mxu0 %v468
    %v549 = vpop.f32.mrb[0].mxu0
    %v550 = vadd.f32 0.0, %v549
    %v551 = vpop.f32.mrb[0].mxu0
    %552 = vmatprep.mubr.f32.mxu0 0.0
    %553 = vmatmul.mubr.f32.gmra.mrb[0].mxu0 %v471
    %v554 = vpop.f32.mrb[0].mxu0
    %v555 = vadd.f32 0.0, %v554
    %v556 = vpop.f32.mrb[0].mxu0
    %557 = vdwg.mxu0
    %v560 = vsel %vm438, %v459, %v457
    %v561 = vsel %vm460, %v560, 0
    %563 = vmatprep.subr.mxu0 0.0
    %564 = vmatpush1.msra.mxu0 %v353
    %565 = vmatprep.subr.mxu0 0.0
    %566 = vmatpush1.msra.mxu0 0.0
    %567 = vmatprep.subr.mxu0 0.0
    %568 = vmatpush1.msra.mxu0 0.0
    %569 = vmatprep.subr.mxu0 0.0
    %570 = vmatpush1.msra.mxu0 0.0
    %571 = vmatprep.subr.mxu0 0.0
    %572 = vmatpush1.msra.mxu0 0.0
    %573 = vmatprep.subr.mxu0 0.0
    %574 = vmatpush1.msra.mxu0 0.0
    %575 = vmatprep.subr.mxu0 0.0
    %576 = vmatpush1.msra.mxu0 0.0
    %577 = vmatprep.subr.mxu0 0.0
    %578 = vmatpush1.msra.mxu0 0.0
    %579 = vmatprep.subr.mxu0 0.0
    %580 = vmatpush1.msra.mxu0 0.0
    %581 = vmatprep.subr.mxu0 0.0
    %582 = vmatpush1.msra.mxu0 0.0
    %583 = vmatprep.subr.mxu0 0.0
    %584 = vmatpush1.msra.mxu0 0.0
    %585 = vmatprep.subr.mxu0 0.0
    %586 = vmatpush1.msra.mxu0 0.0
    %587 = vmatprep.subr.mxu0 0.0
    %588 = vmatpush1.msra.mxu0 0.0
    %589 = vmatprep.subr.mxu0 0.0
    %590 = vmatpush1.msra.mxu0 0.0
    %591 = vmatprep.subr.mxu0 0.0
    %592 = vmatpush1.msra.mxu0 0.0
    %593 = vmatprep.subr.mxu0 0.0
    %594 = vmatpush1.msra.mxu0 0.0
    %595 = vmatprep.subr.mxu0 0.0
    %596 = vmatpush1.msra.mxu0 0.0
    %597 = vmatprep.subr.mxu0 0.0
    %598 = vmatpush1.msra.mxu0 0.0
    %599 = vmatprep.subr.mxu0 0.0
    %600 = vmatpush1.msra.mxu0 0.0
    %601 = vmatprep.subr.mxu0 0.0
    %602 = vmatpush1.msra.mxu0 0.0
    %603 = vmatprep.subr.mxu0 0.0
    %604 = vmatpush1.msra.mxu0 0.0
    %605 = vmatprep.subr.mxu0 0.0
    %606 = vmatpush1.msra.mxu0 0.0
    %607 = vmatprep.subr.mxu0 0.0
    %608 = vmatpush1.msra.mxu0 0.0
    %609 = vmatprep.subr.mxu0 0.0
    %610 = vmatpush1.msra.mxu0 0.0
    %611 = vmatprep.subr.mxu0 0.0
    %612 = vmatpush1.msra.mxu0 0.0
    %613 = vmatprep.subr.mxu0 0.0
    %614 = vmatpush1.msra.mxu0 0.0
    %615 = vmatprep.subr.mxu0 0.0
    %616 = vmatpush1.msra.mxu0 0.0
    %617 = vmatprep.subr.mxu0 0.0
    %618 = vmatpush1.msra.mxu0 0.0
    %619 = vmatprep.subr.mxu0 0.0
    %620 = vmatpush1.msra.mxu0 0.0
    %621 = vmatprep.subr.mxu0 0.0
    %622 = vmatpush1.msra.mxu0 0.0
    %623 = vmatprep.subr.mxu0 0.0
    %624 = vmatpush1.msra.mxu0 0.0
    %625 = vmatprep.subr.mxu0 0.0
    %626 = vmatpush1.msra.mxu0 0.0
    %627 = vmatprep.mubr.f32.mxu0 0.0
    %628 = vmatmul.mubr.f32.gmra.mrb[0].mxu0 %v561
    %v629 = vpop.f32.mrb[0].mxu0
    %v630 = vadd.f32 0.0, %v629
    %v631 = vpop.f32.mrb[0].mxu0
    %632 = vdwg.mxu0
    %v635 = vunpack.c.l.s4 1966171168
    %v636 = vunpack.c.0.s8 %v635
    %v637 = vlaneseq
    %v638 = vshrl.u32 %v637, 7
    %v639 = vsub.s32 %v636, %v638
    %v640 = vrot.slane %v630, %v639
    %v641 = vcombine.high %v640, %v640
    %v643 = vunpack.c.l.s4 1966171168
    %v644 = vunpack.c.0.s8 %v643
    %v645 = vlaneseq
    %v646 = vshrl.u32 %v645, 7
    %v647 = vsub.s32 %v644, %v646
    %v648 = vrot.slane %v640, %v647
    %v650 = vunpack.c.l.s4 1966171168
    %v651 = vunpack.c.0.s8 %v650
    %v652 = vlaneseq
    %v653 = vshrl.u32 %v652, 7
    %v654 = vsub.s32 %v651, %v653
    %v655 = vrot.slane %v641, %v654
    %v658 = vmul.f32 %v540, %v332
    %v659 = vmul.f32 %v545, %v335
    %v660 = vmul.f32 %v550, %v340
    %v661 = vmul.f32 %v555, %v343
    %v662 = vadd.f32 %v658, %v659
    %v663 = vrot.slane %v662, 4
    %v664 = vadd.f32 %v662, %v663
    %v665 = vrot.slane %v664, 2
    %v666 = vadd.f32 %v664, %v665
    %v667 = vrot.slane %v666, 1
    %v668 = vadd.f32 %v666, %v667
    %v669 = vadd.f32 %v660, %v661
    %v670 = vrot.slane %v669, 4
    %v671 = vadd.f32 %v669, %v670
    %v672 = vrot.slane %v671, 2
    %v673 = vadd.f32 %v671, %v672
    %v674 = vrot.slane %v673, 1
    %v675 = vadd.f32 %v673, %v674
    %v676 = vmul.f32 %v668, %v648
    %v677 = vmul.f32 %v675, %v655
    %v678 = vlaneseq
    %v679 = vshrl.u32 %v678, 7
    %v680 = vsub.s32 0, %v679
    %v681 = vrot.slane %v676, %v680
    %v682 = vlaneseq
    %v683 = vshrl.u32 %v682, 7
    %v684 = vsub.s32 0, %v683
    %v685 = vrot.slane %v677, %v684
    %v686 = vsub.f32 %v332, %v681
    %v687 = vsub.f32 %v335, %v681
    %v688 = vsub.f32 %v340, %v685
    %v689 = vsub.f32 %v343, %v685
    %v690 = vmul.f32 %v686, %v686
    %v691 = vmul.f32 %v687, %v687
    %v692 = vmul.f32 %v688, %v688
    %v693 = vmul.f32 %v689, %v689
    %v694 = vmul.f32 %v540, %v690
    %v695 = vmul.f32 %v545, %v691
    %v696 = vmul.f32 %v550, %v692
    %v697 = vmul.f32 %v555, %v693
    %v698 = vadd.f32 %v694, %v695
    %v699 = vrot.slane %v698, 4
    %v700 = vadd.f32 %v698, %v699
    %v701 = vrot.slane %v700, 2
    %v702 = vadd.f32 %v700, %v701
    %v703 = vrot.slane %v702, 1
    %v704 = vadd.f32 %v702, %v703
    %v705 = vadd.f32 %v696, %v697
    %v706 = vrot.slane %v705, 4
    %v707 = vadd.f32 %v705, %v706
    %v708 = vrot.slane %v707, 2
    %v709 = vadd.f32 %v707, %v708
    %v710 = vrot.slane %v709, 1
    %v711 = vadd.f32 %v709, %v710
    %v712 = vmul.f32 %v704, %v648
    %v713 = vmul.f32 %v711, %v655
    %v714 = vadd.f32 %v712, 1e-05
    %v715 = vadd.f32 %v713, 1e-05
    %v716 = vsub.f32 0.0, %v453
    %v717 = vmax.f32 %v716, 0.0
    %vm718 = vcmp.ne.f32.partialorder %v716, %v716
    %v719 = vadd.f32 %v716, 0.0
    %v720 = vand.u32 2147483647, %v716
    %v721 = vsub.f32 0.0, %v720
    %v722 = vmul.f32 %v721, 1.442695
    %v723 = vpow.pop %v722
    %v724 = vadd.f32 %v723, 1.0
    %v725 = vlog2.pop %v724
    %v726 = vmul.f32 %v725, 0.6931472
    %v727 = vmul.f32 -0.5, %v723
    %v728 = vadd.f32 %v727, 1.0
    %v729 = vmul.f32 %v728, %v723
    %v730 = vand.u32 2147483647, %v723
    %vm731 = vcmp.lt.f32.partialorder %v730, 0.0004427343
    %v732 = vsel %vm731, %v729, %v726
    %v733 = vadd.f32 %v717, %v732
    %v734 = vsel %vm718, %v719, %v733
    %v735 = vsub.f32 0.0, %v734
    %v736 = vrcp.pop %v714
    %v737 = vmul.f32 1.0, %v736
    %v738 = vrcp.pop %v715
    %v739 = vmul.f32 1.0, %v738
    %v740 = vlog2.pop %v714
    %v741 = vmul.f32 %v740, 0.6931472
    %v742 = vlog2.pop %v715
    %v743 = vmul.f32 %v742, 0.6931472
    %v744 = vsub.f32 0.0, %v690
    %v745 = vsub.f32 0.0, %v691
    %v746 = vsub.f32 0.0, %v692
    %v747 = vsub.f32 0.0, %v693
    %v748 = vmul.f32 %v737, 0.5
    %v749 = vmul.f32 %v739, 0.5
    %v750 = vlaneseq
    %v751 = vshrl.u32 %v750, 7
    %v752 = vsub.s32 0, %v751
    %v753 = vrot.slane %v748, %v752
    %v754 = vlaneseq
    %v755 = vshrl.u32 %v754, 7
    %v756 = vsub.s32 0, %v755
    %v757 = vrot.slane %v749, %v756
    %v758 = vmul.f32 %v744, %v753
    %v759 = vmul.f32 %v745, %v753
    %v760 = vmul.f32 %v746, %v757
    %v761 = vmul.f32 %v747, %v757
    %v762 = vmul.f32 %v741, 0.5
    %v763 = vmul.f32 %v743, 0.5
    %v764 = vlaneseq
    %v765 = vshrl.u32 %v764, 7
    %v766 = vsub.s32 0, %v765
    %v767 = vrot.slane %v762, %v766
    %v768 = vlaneseq
    %v769 = vshrl.u32 %v768, 7
    %v770 = vsub.s32 0, %v769
    %v771 = vrot.slane %v763, %v770
    %v772 = vsub.f32 %v758, %v767
    %v773 = vsub.f32 %v759, %v767
    %v774 = vsub.f32 %v760, %v771
    %v775 = vsub.f32 %v761, %v771
    %776 = vmatprep.subr.mxu0 0.0
    %777 = vmatpush1.msra.mxu0 %v354
    %778 = vmatprep.subr.mxu0 0.0
    %779 = vmatpush1.msra.mxu0 %v355
    %780 = vmatprep.subr.mxu0 0.0
    %781 = vmatpush1.msra.mxu0 %v356
    %782 = vmatprep.subr.mxu0 0.0
    %783 = vmatpush1.msra.mxu0 %v357
    %784 = vmatprep.subr.mxu0 0.0
    %785 = vmatpush1.msra.mxu0 %v358
    %786 = vmatprep.subr.mxu0 0.0
    %787 = vmatpush1.msra.mxu0 %v359
    %788 = vmatprep.subr.mxu0 0.0
    %789 = vmatpush1.msra.mxu0 %v360
    %790 = vmatprep.subr.mxu0 0.0
    %791 = vmatpush1.msra.mxu0 %v361
    %792 = vmatprep.subr.mxu0 0.0
    %793 = vmatpush1.msra.mxu0 %v362
    %794 = vmatprep.subr.mxu0 0.0
    %795 = vmatpush1.msra.mxu0 %v363
    %796 = vmatprep.subr.mxu0 0.0
    %797 = vmatpush1.msra.mxu0 %v364
    %798 = vmatprep.subr.mxu0 0.0
    %799 = vmatpush1.msra.mxu0 %v365
    %800 = vmatprep.subr.mxu0 0.0
    %801 = vmatpush1.msra.mxu0 %v366
    %802 = vmatprep.subr.mxu0 0.0
    %803 = vmatpush1.msra.mxu0 %v367
    %804 = vmatprep.subr.mxu0 0.0
    %805 = vmatpush1.msra.mxu0 %v368
    %806 = vmatprep.subr.mxu0 0.0
    %807 = vmatpush1.msra.mxu0 %v369
    %808 = vmatprep.subr.mxu0 0.0
    %809 = vmatpush1.msra.mxu0 0.0
    %810 = vmatprep.subr.mxu0 0.0
    %811 = vmatpush1.msra.mxu0 0.0
    %812 = vmatprep.subr.mxu0 0.0
    %813 = vmatpush1.msra.mxu0 0.0
    %814 = vmatprep.subr.mxu0 0.0
    %815 = vmatpush1.msra.mxu0 0.0
    %816 = vmatprep.subr.mxu0 0.0
    %817 = vmatpush1.msra.mxu0 0.0
    %818 = vmatprep.subr.mxu0 0.0
    %819 = vmatpush1.msra.mxu0 0.0
    %820 = vmatprep.subr.mxu0 0.0
    %821 = vmatpush1.msra.mxu0 0.0
    %822 = vmatprep.subr.mxu0 0.0
    %823 = vmatpush1.msra.mxu0 0.0
    %824 = vmatprep.subr.mxu0 0.0
    %825 = vmatpush1.msra.mxu0 0.0
    %826 = vmatprep.subr.mxu0 0.0
    %827 = vmatpush1.msra.mxu0 0.0
    %828 = vmatprep.subr.mxu0 0.0
    %829 = vmatpush1.msra.mxu0 0.0
    %830 = vmatprep.subr.mxu0 0.0
    %831 = vmatpush1.msra.mxu0 0.0
    %832 = vmatprep.subr.mxu0 0.0
    %833 = vmatpush1.msra.mxu0 0.0
    %834 = vmatprep.subr.mxu0 0.0
    %835 = vmatpush1.msra.mxu0 0.0
    %836 = vmatprep.subr.mxu0 0.0
    %837 = vmatpush1.msra.mxu0 0.0
    %838 = vmatprep.subr.mxu0 0.0
    %839 = vmatpush1.msra.mxu0 0.0
    %840 = vmatprep.mubr.f32.mxu0 0.0
    %841 = vmatmul.mubr.f32.gmra.mrb[0].mxu0 %v772
    %v842 = vpop.f32.mrb[0].mxu0
    %v843 = vadd.f32 0.0, %v842
    %v844 = vpop.f32.mrb[0].mxu0
    %845 = vmatprep.mubr.f32.mxu0 0.0
    %846 = vmatmul.mubr.f32.gmra.mrb[0].mxu0 %v773
    %v847 = vpop.f32.mrb[0].mxu0
    %v848 = vadd.f32 0.0, %v847
    %v849 = vpop.f32.mrb[0].mxu0
    %850 = vmatprep.mubr.f32.mxu0 0.0
    %851 = vmatmul.mubr.f32.gmra.mrb[0].mxu0 %v774
    %v852 = vpop.f32.mrb[0].mxu0
    %v853 = vadd.f32 0.0, %v852
    %v854 = vpop.f32.mrb[0].mxu0
    %855 = vmatprep.mubr.f32.mxu0 0.0
    %856 = vmatmul.mubr.f32.gmra.mrb[0].mxu0 %v775
    %v857 = vpop.f32.mrb[0].mxu0
    %v858 = vadd.f32 0.0, %v857
    %v859 = vpop.f32.mrb[0].mxu0
    %860 = vdwg.mxu0
    %v863 = vunpack.c.l.s4 1966171168
    %v864 = vunpack.c.0.s8 %v863
    %v865 = vlaneseq
    %v866 = vshrl.u32 %v865, 7
    %v867 = vsub.s32 %v864, %v866
    %v868 = vrot.slane %v735, %v867
    %v869 = vcombine.high %v868, %v868
    %v871 = vunpack.c.l.s4 1966171168
    %v872 = vunpack.c.0.s8 %v871
    %v873 = vlaneseq
    %v874 = vshrl.u32 %v873, 7
    %v875 = vsub.s32 %v872, %v874
    %v876 = vrot.slane %v868, %v875
    %v878 = vunpack.c.l.s4 1966171168
    %v879 = vunpack.c.0.s8 %v878
    %v880 = vlaneseq
    %v881 = vshrl.u32 %v880, 7
    %v882 = vsub.s32 %v879, %v881
    %v883 = vrot.slane %v869, %v882
    %v884 = vlaneseq
    %v885 = vshrl.u32 %v884, 7
    %v886 = vsub.s32 0, %v885
    %v887 = vrot.slane %v876, %v886
    %v888 = vlaneseq
    %v889 = vshrl.u32 %v888, 7
    %v890 = vsub.s32 0, %v889
    %v891 = vrot.slane %v883, %v890
    %v894 = vadd.f32 %v887, %v843
    %v895 = vadd.f32 %v887, %v848
    %v896 = vadd.f32 %v891, %v853
    %v897 = vadd.f32 %v891, %v858
    %v898 = vsel %vm460, %v894, -inf
    %899 = vmax.xlane.f32.xlu0 %v898
    %v900 = vpop.xlane.xlu0 %899
    %v901 = vsel %vm460, %v895, -inf
    %902 = vmax.xlane.f32.xlu0 %v901
    %v903 = vpop.xlane.xlu0 %902
    %v904 = vsel %vm460, %v896, -inf
    %905 = vmax.xlane.f32.xlu0 %v904
    %v906 = vpop.xlane.xlu0 %905
    %v907 = vsel %vm460, %v897, -inf
    %908 = vmax.xlane.f32.xlu0 %v907
    %v909 = vpop.xlane.xlu0 %908
    %v910 = vsub.f32 %v894, %v900
    %v911 = vsub.f32 %v895, %v903
    %v912 = vsub.f32 %v896, %v906
    %v913 = vsub.f32 %v897, %v909
    %v914 = vmul.f32 %v910, 1.442695
    %v915 = vpow.pop %v914
    %v916 = vmul.f32 %v911, 1.442695
    %v917 = vpow.pop %v916
    %v918 = vmul.f32 %v912, 1.442695
    %v919 = vpow.pop %v918
    %v920 = vmul.f32 %v913, 1.442695
    %v921 = vpow.pop %v920
    %v922 = vsel %vm460, %v915, 0.0
    %923 = vadd.xlane.f32.xlu0 %v922
    %v924 = vpop.xlane.xlu0 %923
    %v925 = vsel %vm460, %v917, 0.0
    %926 = vadd.xlane.f32.xlu0 %v925
    %v927 = vpop.xlane.xlu0 %926
    %v928 = vsel %vm460, %v919, 0.0
    %929 = vadd.xlane.f32.xlu0 %v928
    %v930 = vpop.xlane.xlu0 %929
    %v931 = vsel %vm460, %v921, 0.0
    %932 = vadd.xlane.f32.xlu0 %v931
    %v933 = vpop.xlane.xlu0 %932
    %v934 = vrcp.pop %v924
    %v935 = vmul.f32 %v915, %v934
    %v936 = vrcp.pop %v927
    %v937 = vmul.f32 %v917, %v936
    %v938 = vrcp.pop %v930
    %v939 = vmul.f32 %v919, %v938
    %v940 = vrcp.pop %v933
    %v941 = vmul.f32 %v921, %v940
    %v942 = vmul.f32 %v378, %v935
    %v943 = vmul.f32 %v382, %v937
    %v944 = vmul.f32 %v389, %v939
    %v945 = vmul.f32 %v393, %v941
    %v946 = vsub.f32 %v378, %v942
    %v947 = vsub.f32 %v382, %v943
    %v948 = vsub.f32 %v389, %v944
    %v949 = vsub.f32 %v393, %v945
    %v950 = vsel %vm460, %v942, 0.0
    %v951 = vsel %vm460, %v943, 0.0
    %v952 = vadd.f32 %v950, %v951
    %v953 = vrot.slane %v952, 4
    %v954 = vadd.f32 %v952, %v953
    %v955 = vrot.slane %v954, 2
    %v956 = vadd.f32 %v954, %v955
    %v957 = vrot.slane %v956, 1
    %v958 = vadd.f32 %v956, %v957
    %v959 = vsel %vm460, %v944, 0.0
    %v960 = vsel %vm460, %v945, 0.0
    %v961 = vadd.f32 %v959, %v960
    %v962 = vrot.slane %v961, 4
    %v963 = vadd.f32 %v961, %v962
    %v964 = vrot.slane %v963, 2
    %v965 = vadd.f32 %v963, %v964
    %v966 = vrot.slane %v965, 1
    %v967 = vadd.f32 %v965, %v966
    %v968 = vsel %vm460, %v946, 0.0
    %v969 = vsel %vm460, %v947, 0.0
    %v970 = vadd.f32 %v968, %v969
    %v971 = vrot.slane %v970, 4
    %v972 = vadd.f32 %v970, %v971
    %v973 = vrot.slane %v972, 2
    %v974 = vadd.f32 %v972, %v973
    %v975 = vrot.slane %v974, 1
    %v976 = vadd.f32 %v974, %v975
    %v977 = vsel %vm460, %v948, 0.0
    %v978 = vsel %vm460, %v949, 0.0
    %v979 = vadd.f32 %v977, %v978
    %v980 = vrot.slane %v979, 4
    %v981 = vadd.f32 %v979, %v980
    %v982 = vrot.slane %v981, 2
    %v983 = vadd.f32 %v981, %v982
    %v984 = vrot.slane %v983, 1
    %v985 = vadd.f32 %v983, %v984
    %v988 = vsel %vm438, %v967, %v958
    %v990 = vmul.f32 %v434, %v988
    %v993 = vsel %vm438, %v985, %v976
    %v995 = vmul.f32 %v446, %v993
    %v996 = vsub.f32 %v990, %v995
    %v997 = vadd.f32 %v958, 1e-05
    %v998 = vadd.f32 %v967, 1e-05
    %v999 = vrcp.pop %v997
    %v1000 = vmul.f32 1.0, %v999
    %v1001 = vrcp.pop %v998
    %v1002 = vmul.f32 1.0, %v1001
    %v1004 = vsel %vm460, %v942, 0
    %v1007 = vsel %vm460, %v943, 0
    %v1010 = vsel %vm460, %v944, 0
    %v1013 = vsel %vm460, %v945, 0
    %1015 = vmatprep.subr.mxu0 0.0
    %1016 = vmatpush1.msra.mxu0 %v353
    %1017 = vmatprep.subr.mxu0 0.0
    %1018 = vmatpush1.msra.mxu0 0.0
    %1019 = vmatprep.subr.mxu0 0.0
    %1020 = vmatpush1.msra.mxu0 0.0
    %1021 = vmatprep.subr.mxu0 0.0
    %1022 = vmatpush1.msra.mxu0 0.0
    %1023 = vmatprep.subr.mxu0 0.0
    %1024 = vmatpush1.msra.mxu0 0.0
    %1025 = vmatprep.subr.mxu0 0.0
    %1026 = vmatpush1.msra.mxu0 0.0
    %1027 = vmatprep.subr.mxu0 0.0
    %1028 = vmatpush1.msra.mxu0 0.0
    %1029 = vmatprep.subr.mxu0 0.0
    %1030 = vmatpush1.msra.mxu0 0.0
    %1031 = vmatprep.subr.mxu0 0.0
    %1032 = vmatpush1.msra.mxu0 0.0
    %1033 = vmatprep.subr.mxu0 0.0
    %1034 = vmatpush1.msra.mxu0 0.0
    %1035 = vmatprep.subr.mxu0 0.0
    %1036 = vmatpush1.msra.mxu0 0.0
    %1037 = vmatprep.subr.mxu0 0.0
    %1038 = vmatpush1.msra.mxu0 0.0
    %1039 = vmatprep.subr.mxu0 0.0
    %1040 = vmatpush1.msra.mxu0 0.0
    %1041 = vmatprep.subr.mxu0 0.0
    %1042 = vmatpush1.msra.mxu0 0.0
    %1043 = vmatprep.subr.mxu0 0.0
    %1044 = vmatpush1.msra.mxu0 0.0
    %1045 = vmatprep.subr.mxu0 0.0
    %1046 = vmatpush1.msra.mxu0 0.0
    %1047 = vmatprep.subr.mxu0 0.0
    %1048 = vmatpush1.msra.mxu0 0.0
    %1049 = vmatprep.subr.mxu0 0.0
    %1050 = vmatpush1.msra.mxu0 0.0
    %1051 = vmatprep.subr.mxu0 0.0
    %1052 = vmatpush1.msra.mxu0 0.0
    %1053 = vmatprep.subr.mxu0 0.0
    %1054 = vmatpush1.msra.mxu0 0.0
    %1055 = vmatprep.subr.mxu0 0.0
    %1056 = vmatpush1.msra.mxu0 0.0
    %1057 = vmatprep.subr.mxu0 0.0
    %1058 = vmatpush1.msra.mxu0 0.0
    %1059 = vmatprep.subr.mxu0 0.0
    %1060 = vmatpush1.msra.mxu0 0.0
    %1061 = vmatprep.subr.mxu0 0.0
    %1062 = vmatpush1.msra.mxu0 0.0
    %1063 = vmatprep.subr.mxu0 0.0
    %1064 = vmatpush1.msra.mxu0 0.0
    %1065 = vmatprep.subr.mxu0 0.0
    %1066 = vmatpush1.msra.mxu0 0.0
    %1067 = vmatprep.subr.mxu0 0.0
    %1068 = vmatpush1.msra.mxu0 0.0
    %1069 = vmatprep.subr.mxu0 0.0
    %1070 = vmatpush1.msra.mxu0 0.0
    %1071 = vmatprep.subr.mxu0 0.0
    %1072 = vmatpush1.msra.mxu0 0.0
    %1073 = vmatprep.subr.mxu0 0.0
    %1074 = vmatpush1.msra.mxu0 0.0
    %1075 = vmatprep.subr.mxu0 0.0
    %1076 = vmatpush1.msra.mxu0 0.0
    %1077 = vmatprep.subr.mxu0 0.0
    %1078 = vmatpush1.msra.mxu0 0.0
    %1079 = vmatprep.mubr.f32.mxu0 0.0
    %1080 = vmatmul.mubr.f32.gmra.mrb[0].mxu0 %v1004
    %v1081 = vpop.f32.mrb[0].mxu0
    %v1082 = vadd.f32 0.0, %v1081
    %v1083 = vpop.f32.mrb[0].mxu0
    %1084 = vmatprep.mubr.f32.mxu0 0.0
    %1085 = vmatmul.mubr.f32.gmra.mrb[0].mxu0 %v1007
    %v1086 = vpop.f32.mrb[0].mxu0
    %v1087 = vadd.f32 0.0, %v1086
    %v1088 = vpop.f32.mrb[0].mxu0
    %1089 = vmatprep.mubr.f32.mxu0 0.0
    %1090 = vmatmul.mubr.f32.gmra.mrb[0].mxu0 %v1010
    %v1091 = vpop.f32.mrb[0].mxu0
    %v1092 = vadd.f32 0.0, %v1091
    %v1093 = vpop.f32.mrb[0].mxu0
    %1094 = vmatprep.mubr.f32.mxu0 0.0
    %1095 = vmatmul.mubr.f32.gmra.mrb[0].mxu0 %v1013
    %v1096 = vpop.f32.mrb[0].mxu0
    %v1097 = vadd.f32 0.0, %v1096
    %v1098 = vpop.f32.mrb[0].mxu0
    %1099 = vdwg.mxu0
    %v1102 = vsel %vm438, %v1002, %v1000
    %v1103 = vsel %vm460, %v1102, 0
    %1105 = vmatprep.subr.mxu0 0.0
    %1106 = vmatpush1.msra.mxu0 %v353
    %1107 = vmatprep.subr.mxu0 0.0
    %1108 = vmatpush1.msra.mxu0 0.0
    %1109 = vmatprep.subr.mxu0 0.0
    %1110 = vmatpush1.msra.mxu0 0.0
    %1111 = vmatprep.subr.mxu0 0.0
    %1112 = vmatpush1.msra.mxu0 0.0
    %1113 = vmatprep.subr.mxu0 0.0
    %1114 = vmatpush1.msra.mxu0 0.0
    %1115 = vmatprep.subr.mxu0 0.0
    %1116 = vmatpush1.msra.mxu0 0.0
    %1117 = vmatprep.subr.mxu0 0.0
    %1118 = vmatpush1.msra.mxu0 0.0
    %1119 = vmatprep.subr.mxu0 0.0
    %1120 = vmatpush1.msra.mxu0 0.0
    %1121 = vmatprep.subr.mxu0 0.0
    %1122 = vmatpush1.msra.mxu0 0.0
    %1123 = vmatprep.subr.mxu0 0.0
    %1124 = vmatpush1.msra.mxu0 0.0
    %1125 = vmatprep.subr.mxu0 0.0
    %1126 = vmatpush1.msra.mxu0 0.0
    %1127 = vmatprep.subr.mxu0 0.0
    %1128 = vmatpush1.msra.mxu0 0.0
    %1129 = vmatprep.subr.mxu0 0.0
    %1130 = vmatpush1.msra.mxu0 0.0
    %1131 = vmatprep.subr.mxu0 0.0
    %1132 = vmatpush1.msra.mxu0 0.0
    %1133 = vmatprep.subr.mxu0 0.0
    %1134 = vmatpush1.msra.mxu0 0.0
    %1135 = vmatprep.subr.mxu0 0.0
    %1136 = vmatpush1.msra.mxu0 0.0
    %1137 = vmatprep.subr.mxu0 0.0
    %1138 = vmatpush1.msra.mxu0 0.0
    %1139 = vmatprep.subr.mxu0 0.0
    %1140 = vmatpush1.msra.mxu0 0.0
    %1141 = vmatprep.subr.mxu0 0.0
    %1142 = vmatpush1.msra.mxu0 0.0
    %1143 = vmatprep.subr.mxu0 0.0
    %1144 = vmatpush1.msra.mxu0 0.0
    %1145 = vmatprep.subr.mxu0 0.0
    %1146 = vmatpush1.msra.mxu0 0.0
    %1147 = vmatprep.subr.mxu0 0.0
    %1148 = vmatpush1.msra.mxu0 0.0
    %1149 = vmatprep.subr.mxu0 0.0
    %1150 = vmatpush1.msra.mxu0 0.0
    %1151 = vmatprep.subr.mxu0 0.0
    %1152 = vmatpush1.msra.mxu0 0.0
    %1153 = vmatprep.subr.mxu0 0.0
    %1154 = vmatpush1.msra.mxu0 0.0
    %1155 = vmatprep.subr.mxu0 0.0
    %1156 = vmatpush1.msra.mxu0 0.0
    %1157 = vmatprep.subr.mxu0 0.0
    %1158 = vmatpush1.msra.mxu0 0.0
    %1159 = vmatprep.subr.mxu0 0.0
    %1160 = vmatpush1.msra.mxu0 0.0
    %1161 = vmatprep.subr.mxu0 0.0
    %1162 = vmatpush1.msra.mxu0 0.0
    %1163 = vmatprep.subr.mxu0 0.0
    %1164 = vmatpush1.msra.mxu0 0.0
    %1165 = vmatprep.subr.mxu0 0.0
    %1166 = vmatpush1.msra.mxu0 0.0
    %1167 = vmatprep.subr.mxu0 0.0
    %1168 = vmatpush1.msra.mxu0 0.0
    %1169 = vmatprep.mubr.f32.mxu0 0.0
    %1170 = vmatmul.mubr.f32.gmra.mrb[0].mxu0 %v1103
    %v1171 = vpop.f32.mrb[0].mxu0
    %v1172 = vadd.f32 0.0, %v1171
    %v1173 = vpop.f32.mrb[0].mxu0
    %1174 = vdwg.mxu0
    %v1177 = vunpack.c.l.s4 1966171168
    %v1178 = vunpack.c.0.s8 %v1177
    %v1179 = vlaneseq
    %v1180 = vshrl.u32 %v1179, 7
    %v1181 = vsub.s32 %v1178, %v1180
    %v1182 = vrot.slane %v1172, %v1181
    %v1183 = vcombine.high %v1182, %v1182
    %v1185 = vunpack.c.l.s4 1966171168
    %v1186 = vunpack.c.0.s8 %v1185
    %v1187 = vlaneseq
    %v1188 = vshrl.u32 %v1187, 7
    %v1189 = vsub.s32 %v1186, %v1188
    %v1190 = vrot.slane %v1182, %v1189
    %v1192 = vunpack.c.l.s4 1966171168
    %v1193 = vunpack.c.0.s8 %v1192
    %v1194 = vlaneseq
    %v1195 = vshrl.u32 %v1194, 7
    %v1196 = vsub.s32 %v1193, %v1195
    %v1197 = vrot.slane %v1183, %v1196
    %v1200 = vmul.f32 %v1082, %v332
    %v1201 = vmul.f32 %v1087, %v335
    %v1202 = vmul.f32 %v1092, %v340
    %v1203 = vmul.f32 %v1097, %v343
    %v1204 = vadd.f32 %v1200, %v1201
    %v1205 = vrot.slane %v1204, 4
    %v1206 = vadd.f32 %v1204, %v1205
    %v1207 = vrot.slane %v1206, 2
    %v1208 = vadd.f32 %v1206, %v1207
    %v1209 = vrot.slane %v1208, 1
    %v1210 = vadd.f32 %v1208, %v1209
    %v1211 = vadd.f32 %v1202, %v1203
    %v1212 = vrot.slane %v1211, 4
    %v1213 = vadd.f32 %v1211, %v1212
    %v1214 = vrot.slane %v1213, 2
    %v1215 = vadd.f32 %v1213, %v1214
    %v1216 = vrot.slane %v1215, 1
    %v1217 = vadd.f32 %v1215, %v1216
    %v1218 = vmul.f32 %v1210, %v1190
    %v1219 = vmul.f32 %v1217, %v1197
    %v1220 = vlaneseq
    %v1221 = vshrl.u32 %v1220, 7
    %v1222 = vsub.s32 0, %v1221
    %v1223 = vrot.slane %v1218, %v1222
    %v1224 = vlaneseq
    %v1225 = vshrl.u32 %v1224, 7
    %v1226 = vsub.s32 0, %v1225
    %v1227 = vrot.slane %v1219, %v1226
    %v1228 = vsub.f32 %v332, %v1223
    %v1229 = vsub.f32 %v335, %v1223
    %v1230 = vsub.f32 %v340, %v1227
    %v1231 = vsub.f32 %v343, %v1227
    %v1232 = vmul.f32 %v1228, %v1228
    %v1233 = vmul.f32 %v1229, %v1229
    %v1234 = vmul.f32 %v1230, %v1230
    %v1235 = vmul.f32 %v1231, %v1231
    %v1236 = vmul.f32 %v1082, %v1232
    %v1237 = vmul.f32 %v1087, %v1233
    %v1238 = vmul.f32 %v1092, %v1234
    %v1239 = vmul.f32 %v1097, %v1235
    %v1240 = vadd.f32 %v1236, %v1237
    %v1241 = vrot.slane %v1240, 4
    %v1242 = vadd.f32 %v1240, %v1241
    %v1243 = vrot.slane %v1242, 2
    %v1244 = vadd.f32 %v1242, %v1243
    %v1245 = vrot.slane %v1244, 1
    %v1246 = vadd.f32 %v1244, %v1245
    %v1247 = vadd.f32 %v1238, %v1239
    %v1248 = vrot.slane %v1247, 4
    %v1249 = vadd.f32 %v1247, %v1248
    %v1250 = vrot.slane %v1249, 2
    %v1251 = vadd.f32 %v1249, %v1250
    %v1252 = vrot.slane %v1251, 1
    %v1253 = vadd.f32 %v1251, %v1252
    %v1254 = vmul.f32 %v1246, %v1190
    %v1255 = vmul.f32 %v1253, %v1197
    %v1256 = vadd.f32 %v1254, 1e-05
    %v1257 = vadd.f32 %v1255, 1e-05
    %v1258 = vsub.f32 0.0, %v996
    %v1259 = vmax.f32 %v1258, 0.0
    %vm1260 = vcmp.ne.f32.partialorder %v1258, %v1258
    %v1261 = vadd.f32 %v1258, 0.0
    %v1262 = vand.u32 2147483647, %v1258
    %v1263 = vsub.f32 0.0, %v1262
    %v1264 = vmul.f32 %v1263, 1.442695
    %v1265 = vpow.pop %v1264
    %v1266 = vadd.f32 %v1265, 1.0
    %v1267 = vlog2.pop %v1266
    %v1268 = vmul.f32 %v1267, 0.6931472
    %v1269 = vmul.f32 -0.5, %v1265
    %v1270 = vadd.f32 %v1269, 1.0
    %v1271 = vmul.f32 %v1270, %v1265
    %v1272 = vand.u32 2147483647, %v1265
    %vm1273 = vcmp.lt.f32.partialorder %v1272, 0.0004427343
    %v1274 = vsel %vm1273, %v1271, %v1268
    %v1275 = vadd.f32 %v1259, %v1274
    %v1276 = vsel %vm1260, %v1261, %v1275
    %v1277 = vsub.f32 0.0, %v1276
    %v1278 = vrcp.pop %v1256
    %v1279 = vmul.f32 1.0, %v1278
    %v1280 = vrcp.pop %v1257
    %v1281 = vmul.f32 1.0, %v1280
    %v1282 = vlog2.pop %v1256
    %v1283 = vmul.f32 %v1282, 0.6931472
    %v1284 = vlog2.pop %v1257
    %v1285 = vmul.f32 %v1284, 0.6931472
    %v1286 = vsub.f32 0.0, %v1232
    %v1287 = vsub.f32 0.0, %v1233
    %v1288 = vsub.f32 0.0, %v1234
    %v1289 = vsub.f32 0.0, %v1235
    %v1290 = vmul.f32 %v1279, 0.5
    %v1291 = vmul.f32 %v1281, 0.5
    %v1292 = vlaneseq
    %v1293 = vshrl.u32 %v1292, 7
    %v1294 = vsub.s32 0, %v1293
    %v1295 = vrot.slane %v1290, %v1294
    %v1296 = vlaneseq
    %v1297 = vshrl.u32 %v1296, 7
    %v1298 = vsub.s32 0, %v1297
    %v1299 = vrot.slane %v1291, %v1298
    %v1300 = vmul.f32 %v1286, %v1295
    %v1301 = vmul.f32 %v1287, %v1295
    %v1302 = vmul.f32 %v1288, %v1299
    %v1303 = vmul.f32 %v1289, %v1299
    %v1304 = vmul.f32 %v1283, 0.5
    %v1305 = vmul.f32 %v1285, 0.5
    %v1306 = vlaneseq
    %v1307 = vshrl.u32 %v1306, 7
    %v1308 = vsub.s32 0, %v1307
    %v1309 = vrot.slane %v1304, %v1308
    %v1310 = vlaneseq
    %v1311 = vshrl.u32 %v1310, 7
    %v1312 = vsub.s32 0, %v1311
    %v1313 = vrot.slane %v1305, %v1312
    %v1314 = vsub.f32 %v1300, %v1309
    %v1315 = vsub.f32 %v1301, %v1309
    %v1316 = vsub.f32 %v1302, %v1313
    %v1317 = vsub.f32 %v1303, %v1313
    %1318 = vmatprep.subr.mxu0 0.0
    %1319 = vmatpush1.msra.mxu0 %v354
    %1320 = vmatprep.subr.mxu0 0.0
    %1321 = vmatpush1.msra.mxu0 %v355
    %1322 = vmatprep.subr.mxu0 0.0
    %1323 = vmatpush1.msra.mxu0 %v356
    %1324 = vmatprep.subr.mxu0 0.0
    %1325 = vmatpush1.msra.mxu0 %v357
    %1326 = vmatprep.subr.mxu0 0.0
    %1327 = vmatpush1.msra.mxu0 %v358
    %1328 = vmatprep.subr.mxu0 0.0
    %1329 = vmatpush1.msra.mxu0 %v359
    %1330 = vmatprep.subr.mxu0 0.0
    %1331 = vmatpush1.msra.mxu0 %v360
    %1332 = vmatprep.subr.mxu0 0.0
    %1333 = vmatpush1.msra.mxu0 %v361
    %1334 = vmatprep.subr.mxu0 0.0
    %1335 = vmatpush1.msra.mxu0 %v362
    %1336 = vmatprep.subr.mxu0 0.0
    %1337 = vmatpush1.msra.mxu0 %v363
    %1338 = vmatprep.subr.mxu0 0.0
    %1339 = vmatpush1.msra.mxu0 %v364
    %1340 = vmatprep.subr.mxu0 0.0
    %1341 = vmatpush1.msra.mxu0 %v365
    %1342 = vmatprep.subr.mxu0 0.0
    %1343 = vmatpush1.msra.mxu0 %v366
    %1344 = vmatprep.subr.mxu0 0.0
    %1345 = vmatpush1.msra.mxu0 %v367
    %1346 = vmatprep.subr.mxu0 0.0
    %1347 = vmatpush1.msra.mxu0 %v368
    %1348 = vmatprep.subr.mxu0 0.0
    %1349 = vmatpush1.msra.mxu0 %v369
    %1350 = vmatprep.subr.mxu0 0.0
    %1351 = vmatpush1.msra.mxu0 0.0
    %1352 = vmatprep.subr.mxu0 0.0
    %1353 = vmatpush1.msra.mxu0 0.0
    %1354 = vmatprep.subr.mxu0 0.0
    %1355 = vmatpush1.msra.mxu0 0.0
    %1356 = vmatprep.subr.mxu0 0.0
    %1357 = vmatpush1.msra.mxu0 0.0
    %1358 = vmatprep.subr.mxu0 0.0
    %1359 = vmatpush1.msra.mxu0 0.0
    %1360 = vmatprep.subr.mxu0 0.0
    %1361 = vmatpush1.msra.mxu0 0.0
    %1362 = vmatprep.subr.mxu0 0.0
    %1363 = vmatpush1.msra.mxu0 0.0
    %1364 = vmatprep.subr.mxu0 0.0
    %1365 = vmatpush1.msra.mxu0 0.0
    %1366 = vmatprep.subr.mxu0 0.0
    %1367 = vmatpush1.msra.mxu0 0.0
    %1368 = vmatprep.subr.mxu0 0.0
    %1369 = vmatpush1.msra.mxu0 0.0
    %1370 = vmatprep.subr.mxu0 0.0
    %1371 = vmatpush1.msra.mxu0 0.0
    %1372 = vmatprep.subr.mxu0 0.0
    %1373 = vmatpush1.msra.mxu0 0.0
    %1374 = vmatprep.subr.mxu0 0.0
    %1375 = vmatpush1.msra.mxu0 0.0
    %1376 = vmatprep.subr.mxu0 0.0
    %1377 = vmatpush1.msra.mxu0 0.0
    %1378 = vmatprep.subr.mxu0 0.0
    %1379 = vmatpush1.msra.mxu0 0.0
    %1380 = vmatprep.subr.mxu0 0.0
    %1381 = vmatpush1.msra.mxu0 0.0
    %1382 = vmatprep.mubr.f32.mxu0 0.0
    %1383 = vmatmul.mubr.f32.gmra.mrb[0].mxu0 %v1314
    %v1384 = vpop.f32.mrb[0].mxu0
    %v1385 = vadd.f32 0.0, %v1384
    %v1386 = vpop.f32.mrb[0].mxu0
    %1387 = vmatprep.mubr.f32.mxu0 0.0
    %1388 = vmatmul.mubr.f32.gmra.mrb[0].mxu0 %v1315
    %v1389 = vpop.f32.mrb[0].mxu0
    %v1390 = vadd.f32 0.0, %v1389
    %v1391 = vpop.f32.mrb[0].mxu0
    %1392 = vmatprep.mubr.f32.mxu0 0.0
    %1393 = vmatmul.mubr.f32.gmra.mrb[0].mxu0 %v1316
    %v1394 = vpop.f32.mrb[0].mxu0
    %v1395 = vadd.f32 0.0, %v1394
    %v1396 = vpop.f32.mrb[0].mxu0
    %1397 = vmatprep.mubr.f32.mxu0 0.0
    %1398 = vmatmul.mubr.f32.gmra.mrb[0].mxu0 %v1317
    %v1399 = vpop.f32.mrb[0].mxu0
    %v1400 = vadd.f32 0.0, %v1399
    %v1401 = vpop.f32.mrb[0].mxu0
    %1402 = vdwg.mxu0
    %v1405 = vunpack.c.l.s4 1966171168
    %v1406 = vunpack.c.0.s8 %v1405
    %v1407 = vlaneseq
    %v1408 = vshrl.u32 %v1407, 7
    %v1409 = vsub.s32 %v1406, %v1408
    %v1410 = vrot.slane %v1277, %v1409
    %v1411 = vcombine.high %v1410, %v1410
    %v1413 = vunpack.c.l.s4 1966171168
    %v1414 = vunpack.c.0.s8 %v1413
    %v1415 = vlaneseq
    %v1416 = vshrl.u32 %v1415, 7
    %v1417 = vsub.s32 %v1414, %v1416
    %v1418 = vrot.slane %v1410, %v1417
    %v1420 = vunpack.c.l.s4 1966171168
    %v1421 = vunpack.c.0.s8 %v1420
    %v1422 = vlaneseq
    %v1423 = vshrl.u32 %v1422, 7
    %v1424 = vsub.s32 %v1421, %v1423
    %v1425 = vrot.slane %v1411, %v1424
    %v1426 = vlaneseq
    %v1427 = vshrl.u32 %v1426, 7
    %v1428 = vsub.s32 0, %v1427
    %v1429 = vrot.slane %v1418, %v1428
    %v1430 = vlaneseq
    %v1431 = vshrl.u32 %v1430, 7
    %v1432 = vsub.s32 0, %v1431
    %v1433 = vrot.slane %v1425, %v1432
    %v1436 = vadd.f32 %v1429, %v1385
    %v1437 = vadd.f32 %v1429, %v1390
    %v1438 = vadd.f32 %v1433, %v1395
    %v1439 = vadd.f32 %v1433, %v1400
    %v1440 = vsel %vm460, %v1436, -inf
    %1441 = vmax.xlane.f32.xlu0 %v1440
    %v1442 = vpop.xlane.xlu0 %1441
    %v1443 = vsel %vm460, %v1437, -inf
    %1444 = vmax.xlane.f32.xlu0 %v1443
    %v1445 = vpop.xlane.xlu0 %1444
    %v1446 = vsel %vm460, %v1438, -inf
    %1447 = vmax.xlane.f32.xlu0 %v1446
    %v1448 = vpop.xlane.xlu0 %1447
    %v1449 = vsel %vm460, %v1439, -inf
    %1450 = vmax.xlane.f32.xlu0 %v1449
    %v1451 = vpop.xlane.xlu0 %1450
    %v1452 = vsub.f32 %v1436, %v1442
    %v1453 = vsub.f32 %v1437, %v1445
    %v1454 = vsub.f32 %v1438, %v1448
    %v1455 = vsub.f32 %v1439, %v1451
    %v1456 = vmul.f32 %v1452, 1.442695
    %v1457 = vpow.pop %v1456
    %v1458 = vmul.f32 %v1453, 1.442695
    %v1459 = vpow.pop %v1458
    %v1460 = vmul.f32 %v1454, 1.442695
    %v1461 = vpow.pop %v1460
    %v1462 = vmul.f32 %v1455, 1.442695
    %v1463 = vpow.pop %v1462
    %v1464 = vsel %vm460, %v1457, 0.0
    %1465 = vadd.xlane.f32.xlu0 %v1464
    %v1466 = vpop.xlane.xlu0 %1465
    %v1467 = vsel %vm460, %v1459, 0.0
    %1468 = vadd.xlane.f32.xlu0 %v1467
    %v1469 = vpop.xlane.xlu0 %1468
    %v1470 = vsel %vm460, %v1461, 0.0
    %1471 = vadd.xlane.f32.xlu0 %v1470
    %v1472 = vpop.xlane.xlu0 %1471
    %v1473 = vsel %vm460, %v1463, 0.0
    %1474 = vadd.xlane.f32.xlu0 %v1473
    %v1475 = vpop.xlane.xlu0 %1474
    %v1476 = vrcp.pop %v1466
    %v1477 = vmul.f32 %v1457, %v1476
    %v1478 = vrcp.pop %v1469
    %v1479 = vmul.f32 %v1459, %v1478
    %v1480 = vrcp.pop %v1472
    %v1481 = vmul.f32 %v1461, %v1480
    %v1482 = vrcp.pop %v1475
    %v1483 = vmul.f32 %v1463, %v1482
    %v1484 = vmul.f32 %v378, %v1477
    %v1485 = vmul.f32 %v382, %v1479
    %v1486 = vmul.f32 %v389, %v1481
    %v1487 = vmul.f32 %v393, %v1483
    %v1488 = vsub.f32 %v378, %v1484
    %v1489 = vsub.f32 %v382, %v1485
    %v1490 = vsub.f32 %v389, %v1486
    %v1491 = vsub.f32 %v393, %v1487
    %v1492 = vsel %vm460, %v1484, 0.0
    %v1493 = vsel %vm460, %v1485, 0.0
    %v1494 = vadd.f32 %v1492, %v1493
    %v1495 = vrot.slane %v1494, 4
    %v1496 = vadd.f32 %v1494, %v1495
    %v1497 = vrot.slane %v1496, 2
    %v1498 = vadd.f32 %v1496, %v1497
    %v1499 = vrot.slane %v1498, 1
    %v1500 = vadd.f32 %v1498, %v1499
    %v1501 = vsel %vm460, %v1486, 0.0
    %v1502 = vsel %vm460, %v1487, 0.0
    %v1503 = vadd.f32 %v1501, %v1502
    %v1504 = vrot.slane %v1503, 4
    %v1505 = vadd.f32 %v1503, %v1504
    %v1506 = vrot.slane %v1505, 2
    %v1507 = vadd.f32 %v1505, %v1506
    %v1508 = vrot.slane %v1507, 1
    %v1509 = vadd.f32 %v1507, %v1508
    %v1510 = vsel %vm460, %v1488, 0.0
    %v1511 = vsel %vm460, %v1489, 0.0
    %v1512 = vadd.f32 %v1510, %v1511
    %v1513 = vrot.slane %v1512, 4
    %v1514 = vadd.f32 %v1512, %v1513
    %v1515 = vrot.slane %v1514, 2
    %v1516 = vadd.f32 %v1514, %v1515
    %v1517 = vrot.slane %v1516, 1
    %v1518 = vadd.f32 %v1516, %v1517
    %v1519 = vsel %vm460, %v1490, 0.0
    %v1520 = vsel %vm460, %v1491, 0.0
    %v1521 = vadd.f32 %v1519, %v1520
    %v1522 = vrot.slane %v1521, 4
    %v1523 = vadd.f32 %v1521, %v1522
    %v1524 = vrot.slane %v1523, 2
    %v1525 = vadd.f32 %v1523, %v1524
    %v1526 = vrot.slane %v1525, 1
    %v1527 = vadd.f32 %v1525, %v1526
    %v1530 = vsel %vm438, %v1509, %v1500
    %v1532 = vmul.f32 %v434, %v1530
    %v1535 = vsel %vm438, %v1527, %v1518
    %v1537 = vmul.f32 %v446, %v1535
    %v1538 = vsub.f32 %v1532, %v1537
    %v1539 = vadd.f32 %v1500, 1e-05
    %v1540 = vadd.f32 %v1509, 1e-05
    %v1541 = vrcp.pop %v1539
    %v1542 = vmul.f32 1.0, %v1541
    %v1543 = vrcp.pop %v1540
    %v1544 = vmul.f32 1.0, %v1543
    %v1546 = vsel %vm460, %v1484, 0
    %v1549 = vsel %vm460, %v1485, 0
    %v1552 = vsel %vm460, %v1486, 0
    %v1555 = vsel %vm460, %v1487, 0
    %1557 = vmatprep.subr.mxu0 0.0
    %1558 = vmatpush1.msra.mxu0 %v353
    %1559 = vmatprep.subr.mxu0 0.0
    %1560 = vmatpush1.msra.mxu0 0.0
    %1561 = vmatprep.subr.mxu0 0.0
    %1562 = vmatpush1.msra.mxu0 0.0
    %1563 = vmatprep.subr.mxu0 0.0
    %1564 = vmatpush1.msra.mxu0 0.0
    %1565 = vmatprep.subr.mxu0 0.0
    %1566 = vmatpush1.msra.mxu0 0.0
    %1567 = vmatprep.subr.mxu0 0.0
    %1568 = vmatpush1.msra.mxu0 0.0
    %1569 = vmatprep.subr.mxu0 0.0
    %1570 = vmatpush1.msra.mxu0 0.0
    %1571 = vmatprep.subr.mxu0 0.0
    %1572 = vmatpush1.msra.mxu0 0.0
    %1573 = vmatprep.subr.mxu0 0.0
    %1574 = vmatpush1.msra.mxu0 0.0
    %1575 = vmatprep.subr.mxu0 0.0
    %1576 = vmatpush1.msra.mxu0 0.0
    %1577 = vmatprep.subr.mxu0 0.0
    %1578 = vmatpush1.msra.mxu0 0.0
    %1579 = vmatprep.subr.mxu0 0.0
    %1580 = vmatpush1.msra.mxu0 0.0
    %1581 = vmatprep.subr.mxu0 0.0
    %1582 = vmatpush1.msra.mxu0 0.0
    %1583 = vmatprep.subr.mxu0 0.0
    %1584 = vmatpush1.msra.mxu0 0.0
    %1585 = vmatprep.subr.mxu0 0.0
    %1586 = vmatpush1.msra.mxu0 0.0
    %1587 = vmatprep.subr.mxu0 0.0
    %1588 = vmatpush1.msra.mxu0 0.0
    %1589 = vmatprep.subr.mxu0 0.0
    %1590 = vmatpush1.msra.mxu0 0.0
    %1591 = vmatprep.subr.mxu0 0.0
    %1592 = vmatpush1.msra.mxu0 0.0
    %1593 = vmatprep.subr.mxu0 0.0
    %1594 = vmatpush1.msra.mxu0 0.0
    %1595 = vmatprep.subr.mxu0 0.0
    %1596 = vmatpush1.msra.mxu0 0.0
    %1597 = vmatprep.subr.mxu0 0.0
    %1598 = vmatpush1.msra.mxu0 0.0
    %1599 = vmatprep.subr.mxu0 0.0
    %1600 = vmatpush1.msra.mxu0 0.0
    %1601 = vmatprep.subr.mxu0 0.0
    %1602 = vmatpush1.msra.mxu0 0.0
    %1603 = vmatprep.subr.mxu0 0.0
    %1604 = vmatpush1.msra.mxu0 0.0
    %1605 = vmatprep.subr.mxu0 0.0
    %1606 = vmatpush1.msra.mxu0 0.0
    %1607 = vmatprep.subr.mxu0 0.0
    %1608 = vmatpush1.msra.mxu0 0.0
    %1609 = vmatprep.subr.mxu0 0.0
    %1610 = vmatpush1.msra.mxu0 0.0
    %1611 = vmatprep.subr.mxu0 0.0
    %1612 = vmatpush1.msra.mxu0 0.0
    %1613 = vmatprep.subr.mxu0 0.0
    %1614 = vmatpush1.msra.mxu0 0.0
    %1615 = vmatprep.subr.mxu0 0.0
    %1616 = vmatpush1.msra.mxu0 0.0
    %1617 = vmatprep.subr.mxu0 0.0
    %1618 = vmatpush1.msra.mxu0 0.0
    %1619 = vmatprep.subr.mxu0 0.0
    %1620 = vmatpush1.msra.mxu0 0.0
    %1621 = vmatprep.mubr.f32.mxu0 0.0
    %1622 = vmatmul.mubr.f32.gmra.mrb[0].mxu0 %v1546
    %v1623 = vpop.f32.mrb[0].mxu0
    %v1624 = vadd.f32 0.0, %v1623
    %v1625 = vpop.f32.mrb[0].mxu0
    %1626 = vmatprep.mubr.f32.mxu0 0.0
    %1627 = vmatmul.mubr.f32.gmra.mrb[0].mxu0 %v1549
    %v1628 = vpop.f32.mrb[0].mxu0
    %v1629 = vadd.f32 0.0, %v1628
    %v1630 = vpop.f32.mrb[0].mxu0
    %1631 = vmatprep.mubr.f32.mxu0 0.0
    %1632 = vmatmul.mubr.f32.gmra.mrb[0].mxu0 %v1552
    %v1633 = vpop.f32.mrb[0].mxu0
    %v1634 = vadd.f32 0.0, %v1633
    %v1635 = vpop.f32.mrb[0].mxu0
    %1636 = vmatprep.mubr.f32.mxu0 0.0
    %1637 = vmatmul.mubr.f32.gmra.mrb[0].mxu0 %v1555
    %v1638 = vpop.f32.mrb[0].mxu0
    %v1639 = vadd.f32 0.0, %v1638
    %v1640 = vpop.f32.mrb[0].mxu0
    %1641 = vdwg.mxu0
    %v1644 = vsel %vm438, %v1544, %v1542
    %v1645 = vsel %vm460, %v1644, 0
    %1647 = vmatprep.subr.mxu0 0.0
    %1648 = vmatpush1.msra.mxu0 %v353
    %1649 = vmatprep.subr.mxu0 0.0
    %1650 = vmatpush1.msra.mxu0 0.0
    %1651 = vmatprep.subr.mxu0 0.0
    %1652 = vmatpush1.msra.mxu0 0.0
    %1653 = vmatprep.subr.mxu0 0.0
    %1654 = vmatpush1.msra.mxu0 0.0
    %1655 = vmatprep.subr.mxu0 0.0
    %1656 = vmatpush1.msra.mxu0 0.0
    %1657 = vmatprep.subr.mxu0 0.0
    %1658 = vmatpush1.msra.mxu0 0.0
    %1659 = vmatprep.subr.mxu0 0.0
    %1660 = vmatpush1.msra.mxu0 0.0
    %1661 = vmatprep.subr.mxu0 0.0
    %1662 = vmatpush1.msra.mxu0 0.0
    %1663 = vmatprep.subr.mxu0 0.0
    %1664 = vmatpush1.msra.mxu0 0.0
    %1665 = vmatprep.subr.mxu0 0.0
    %1666 = vmatpush1.msra.mxu0 0.0
    %1667 = vmatprep.subr.mxu0 0.0
    %1668 = vmatpush1.msra.mxu0 0.0
    %1669 = vmatprep.subr.mxu0 0.0
    %1670 = vmatpush1.msra.mxu0 0.0
    %1671 = vmatprep.subr.mxu0 0.0
    %1672 = vmatpush1.msra.mxu0 0.0
    %1673 = vmatprep.subr.mxu0 0.0
    %1674 = vmatpush1.msra.mxu0 0.0
    %1675 = vmatprep.subr.mxu0 0.0
    %1676 = vmatpush1.msra.mxu0 0.0
    %1677 = vmatprep.subr.mxu0 0.0
    %1678 = vmatpush1.msra.mxu0 0.0
    %1679 = vmatprep.subr.mxu0 0.0
    %1680 = vmatpush1.msra.mxu0 0.0
    %1681 = vmatprep.subr.mxu0 0.0
    %1682 = vmatpush1.msra.mxu0 0.0
    %1683 = vmatprep.subr.mxu0 0.0
    %1684 = vmatpush1.msra.mxu0 0.0
    %1685 = vmatprep.subr.mxu0 0.0
    %1686 = vmatpush1.msra.mxu0 0.0
    %1687 = vmatprep.subr.mxu0 0.0
    %1688 = vmatpush1.msra.mxu0 0.0
    %1689 = vmatprep.subr.mxu0 0.0
    %1690 = vmatpush1.msra.mxu0 0.0
    %1691 = vmatprep.subr.mxu0 0.0
    %1692 = vmatpush1.msra.mxu0 0.0
    %1693 = vmatprep.subr.mxu0 0.0
    %1694 = vmatpush1.msra.mxu0 0.0
    %1695 = vmatprep.subr.mxu0 0.0
    %1696 = vmatpush1.msra.mxu0 0.0
    %1697 = vmatprep.subr.mxu0 0.0
    %1698 = vmatpush1.msra.mxu0 0.0
    %1699 = vmatprep.subr.mxu0 0.0
    %1700 = vmatpush1.msra.mxu0 0.0
    %1701 = vmatprep.subr.mxu0 0.0
    %1702 = vmatpush1.msra.mxu0 0.0
    %1703 = vmatprep.subr.mxu0 0.0
    %1704 = vmatpush1.msra.mxu0 0.0
    %1705 = vmatprep.subr.mxu0 0.0
    %1706 = vmatpush1.msra.mxu0 0.0
    %1707 = vmatprep.subr.mxu0 0.0
    %1708 = vmatpush1.msra.mxu0 0.0
    %1709 = vmatprep.subr.mxu0 0.0
    %1710 = vmatpush1.msra.mxu0 0.0
    %1711 = vmatprep.mubr.f32.mxu0 0.0
    %1712 = vmatmul.mubr.f32.gmra.mrb[0].mxu0 %v1645
    %v1713 = vpop.f32.mrb[0].mxu0
    %v1714 = vadd.f32 0.0, %v1713
    %v1715 = vpop.f32.mrb[0].mxu0
    %1716 = vdwg.mxu0
    %v1719 = vunpack.c.l.s4 1966171168
    %v1720 = vunpack.c.0.s8 %v1719
    %v1721 = vlaneseq
    %v1722 = vshrl.u32 %v1721, 7
    %v1723 = vsub.s32 %v1720, %v1722
    %v1724 = vrot.slane %v1714, %v1723
    %v1725 = vcombine.high %v1724, %v1724
    %v1727 = vunpack.c.l.s4 1966171168
    %v1728 = vunpack.c.0.s8 %v1727
    %v1729 = vlaneseq
    %v1730 = vshrl.u32 %v1729, 7
    %v1731 = vsub.s32 %v1728, %v1730
    %v1732 = vrot.slane %v1724, %v1731
    %v1734 = vunpack.c.l.s4 1966171168
    %v1735 = vunpack.c.0.s8 %v1734
    %v1736 = vlaneseq
    %v1737 = vshrl.u32 %v1736, 7
    %v1738 = vsub.s32 %v1735, %v1737
    %v1739 = vrot.slane %v1725, %v1738
    %v1742 = vmul.f32 %v1624, %v332
    %v1743 = vmul.f32 %v1629, %v335
    %v1744 = vmul.f32 %v1634, %v340
    %v1745 = vmul.f32 %v1639, %v343
    %v1746 = vadd.f32 %v1742, %v1743
    %v1747 = vrot.slane %v1746, 4
    %v1748 = vadd.f32 %v1746, %v1747
    %v1749 = vrot.slane %v1748, 2
    %v1750 = vadd.f32 %v1748, %v1749
    %v1751 = vrot.slane %v1750, 1
    %v1752 = vadd.f32 %v1750, %v1751
    %v1753 = vadd.f32 %v1744, %v1745
    %v1754 = vrot.slane %v1753, 4
    %v1755 = vadd.f32 %v1753, %v1754
    %v1756 = vrot.slane %v1755, 2
    %v1757 = vadd.f32 %v1755, %v1756
    %v1758 = vrot.slane %v1757, 1
    %v1759 = vadd.f32 %v1757, %v1758
    %v1760 = vmul.f32 %v1752, %v1732
    %v1761 = vmul.f32 %v1759, %v1739
    %v1762 = vpack.c.bf16 %v1760, %v1760
    %v1763 = vpack.c.bf16 %v1761, %v1761
    %v1764 = vld [vmem:[#allocation2] sm:$0xff]
    %v1765 = vld [vmem:[#allocation2 + $0x8] sm:$0xff]
    %v1766 = vld [vmem:[#allocation2 + $0x10] sm:$0xff]
    %v1767 = vld [vmem:[#allocation2 + $0x18] sm:$0xff]
    %v1768 = vld [vmem:[#allocation2 + $0x20] sm:$0xff]
    %v1769 = vld [vmem:[#allocation2 + $0x28] sm:$0xff]
    %v1770 = vld [vmem:[#allocation2 + $0x30] sm:$0xff]
    %v1771 = vld [vmem:[#allocation2 + $0x38] sm:$0xff]
    %v1772 = vld [vmem:[#allocation2 + $0x40] sm:$0xff]
    %v1773 = vld [vmem:[#allocation2 + $0x48] sm:$0xff]
    %v1774 = vld [vmem:[#allocation2 + $0x50] sm:$0xff]
    %v1775 = vld [vmem:[#allocation2 + $0x58] sm:$0xff]
    %v1776 = vld [vmem:[#allocation2 + $0x60] sm:$0xff]
    %v1777 = vld [vmem:[#allocation2 + $0x68] sm:$0xff]
    %v1778 = vld [vmem:[#allocation2 + $0x70] sm:$0xff]
    %v1779 = vld [vmem:[#allocation2 + $0x78] sm:$0xff]
    %v1780 = vld [vmem:[#allocation2 + $0x80] sm:$0xff]
    %v1781 = vld [vmem:[#allocation2 + $0x88] sm:$0xff]
    %v1782 = vld [vmem:[#allocation2 + $0x90] sm:$0xff]
    %v1783 = vld [vmem:[#allocation2 + $0x98] sm:$0xff]
    %v1784 = vld [vmem:[#allocation2 + $0xa0] sm:$0xff]
    %v1785 = vld [vmem:[#allocation2 + $0xa8] sm:$0xff]
    %v1786 = vld [vmem:[#allocation2 + $0xb0] sm:$0xff]
    %v1787 = vld [vmem:[#allocation2 + $0xb8] sm:$0xff]
    %v1788 = vld [vmem:[#allocation2 + $0xc0] sm:$0xff]
    %v1789 = vld [vmem:[#allocation2 + $0xc8] sm:$0xff]
    %v1790 = vld [vmem:[#allocation2 + $0xd0] sm:$0xff]
    %v1791 = vld [vmem:[#allocation2 + $0xd8] sm:$0xff]
    %v1792 = vld [vmem:[#allocation2 + $0xe0] sm:$0xff]
    %v1793 = vld [vmem:[#allocation2 + $0xe8] sm:$0xff]
    %v1794 = vld [vmem:[#allocation2 + $0xf0] sm:$0xff]
    %v1795 = vld [vmem:[#allocation2 + $0xf8] sm:$0xff]
    %v1798 = vunpack.c.l.b16 %v1762
    %v1799 = vunpack.c.l.b16 %v1763
    %v1800 = vrot.slane %v1799, 7
    %v1801 = vsel %vm438, %v1800, %v1798
    %v1802 = vpack.c.b16 %v1801, %v1801
    %v1836 = vunpack.c.l.b16 %v1764
    %v1837 = vunpack.c.h.b16 %v1764
    %v1838 = vunpack.c.l.b16 %v1765
    %v1839 = vunpack.c.h.b16 %v1765
    %v1840 = vunpack.c.l.b16 %v1766
    %v1841 = vunpack.c.h.b16 %v1766
    %v1842 = vunpack.c.l.b16 %v1767
    %v1843 = vunpack.c.h.b16 %v1767
    %v1844 = vunpack.c.l.b16 %v1768
    %v1845 = vunpack.c.h.b16 %v1768
    %v1846 = vunpack.c.l.b16 %v1769
    %v1847 = vunpack.c.h.b16 %v1769
    %v1848 = vunpack.c.l.b16 %v1770
    %v1849 = vunpack.c.h.b16 %v1770
    %v1850 = vunpack.c.l.b16 %v1771
    %v1851 = vunpack.c.h.b16 %v1771
    %v1852 = vunpack.c.l.b16 %v1772
    %v1853 = vunpack.c.h.b16 %v1772
    %v1854 = vunpack.c.l.b16 %v1773
    %v1855 = vunpack.c.h.b16 %v1773
    %v1856 = vunpack.c.l.b16 %v1774
    %v1857 = vunpack.c.h.b16 %v1774
    %v1858 = vunpack.c.l.b16 %v1775
    %v1859 = vunpack.c.h.b16 %v1775
    %v1860 = vunpack.c.l.b16 %v1776
    %v1861 = vunpack.c.h.b16 %v1776
    %v1862 = vunpack.c.l.b16 %v1777
    %v1863 = vunpack.c.h.b16 %v1777
    %v1864 = vunpack.c.l.b16 %v1778
    %v1865 = vunpack.c.h.b16 %v1778
    %v1866 = vunpack.c.l.b16 %v1779
    %v1867 = vunpack.c.h.b16 %v1779
    %v1868 = vunpack.c.l.b16 %v1780
    %v1869 = vunpack.c.h.b16 %v1780
    %v1870 = vunpack.c.l.b16 %v1781
    %v1871 = vunpack.c.h.b16 %v1781
    %v1872 = vunpack.c.l.b16 %v1782
    %v1873 = vunpack.c.h.b16 %v1782
    %v1874 = vunpack.c.l.b16 %v1783
    %v1875 = vunpack.c.h.b16 %v1783
    %v1876 = vunpack.c.l.b16 %v1784
    %v1877 = vunpack.c.h.b16 %v1784
    %v1878 = vunpack.c.l.b16 %v1785
    %v1879 = vunpack.c.h.b16 %v1785
    %v1880 = vunpack.c.l.b16 %v1786
    %v1881 = vunpack.c.h.b16 %v1786
    %v1882 = vunpack.c.l.b16 %v1787
    %v1883 = vunpack.c.h.b16 %v1787
    %v1884 = vunpack.c.l.b16 %v1788
    %v1885 = vunpack.c.h.b16 %v1788
    %v1886 = vunpack.c.l.b16 %v1789
    %v1887 = vunpack.c.h.b16 %v1789
    %v1888 = vunpack.c.l.b16 %v1790
    %v1889 = vunpack.c.h.b16 %v1790
    %v1890 = vunpack.c.l.b16 %v1791
    %v1891 = vunpack.c.h.b16 %v1791
    %v1892 = vunpack.c.l.b16 %v1792
    %v1893 = vunpack.c.h.b16 %v1792
    %v1894 = vunpack.c.l.b16 %v1793
    %v1895 = vunpack.c.h.b16 %v1793
    %v1896 = vunpack.c.l.b16 %v1794
    %v1897 = vunpack.c.h.b16 %v1794
    %v1898 = vunpack.c.l.b16 %v1795
    %v1899 = vunpack.c.h.b16 %v1795
    %v1900 = vpack.c.b16 %v1840, %v1836
    %v1901 = vpack.c.b16 %v1841, %v1837
    %v1902 = vpack.c.b16 %v1842, %v1838
    %v1903 = vpack.c.b16 %v1843, %v1839
    %v1904 = vpack.c.b16 %v1848, %v1844
    %v1905 = vpack.c.b16 %v1849, %v1845
    %v1906 = vpack.c.b16 %v1850, %v1846
    %v1907 = vpack.c.b16 %v1851, %v1847
    %v1908 = vpack.c.b16 %v1856, %v1852
    %v1909 = vpack.c.b16 %v1857, %v1853
    %v1910 = vpack.c.b16 %v1858, %v1854
    %v1911 = vpack.c.b16 %v1859, %v1855
    %v1912 = vpack.c.b16 %v1864, %v1860
    %v1913 = vpack.c.b16 %v1865, %v1861
    %v1914 = vpack.c.b16 %v1866, %v1862
    %v1915 = vpack.c.b16 %v1867, %v1863
    %v1916 = vpack.c.b16 %v1872, %v1868
    %v1917 = vpack.c.b16 %v1873, %v1869
    %v1918 = vpack.c.b16 %v1874, %v1870
    %v1919 = vpack.c.b16 %v1875, %v1871
    %v1920 = vpack.c.b16 %v1880, %v1876
    %v1921 = vpack.c.b16 %v1881, %v1877
    %v1922 = vpack.c.b16 %v1882, %v1878
    %v1923 = vpack.c.b16 %v1883, %v1879
    %v1924 = vpack.c.b16 %v1888, %v1884
    %v1925 = vpack.c.b16 %v1889, %v1885
    %v1926 = vpack.c.b16 %v1890, %v1886
    %v1927 = vpack.c.b16 %v1891, %v1887
    %v1928 = vpack.c.b16 %v1896, %v1892
    %v1929 = vpack.c.b16 %v1897, %v1893
    %v1930 = vpack.c.b16 %v1898, %v1894
    %v1931 = vpack.c.b16 %v1899, %v1895
    %1964 = vmatprep.subr.bf16.mxu0 %v1901
    %1965 = vmatpush1.bf16.msra.mxu0 %v1900
    %1966 = vmatprep.subr.bf16.mxu0 %v1905
    %1967 = vmatpush1.bf16.msra.mxu0 %v1904
    %1968 = vmatprep.subr.bf16.mxu0 %v1909
    %1969 = vmatpush1.bf16.msra.mxu0 %v1908
    %1970 = vmatprep.subr.bf16.mxu0 %v1913
    %1971 = vmatpush1.bf16.msra.mxu0 %v1912
    %1972 = vmatprep.subr.bf16.mxu0 %v1917
    %1973 = vmatpush1.bf16.msra.mxu0 %v1916
    %1974 = vmatprep.subr.bf16.mxu0 %v1921
    %1975 = vmatpush1.bf16.msra.mxu0 %v1920
    %1976 = vmatprep.subr.bf16.mxu0 %v1925
    %1977 = vmatpush1.bf16.msra.mxu0 %v1924
    %1978 = vmatprep.subr.bf16.mxu0 %v1929
    %1979 = vmatpush1.bf16.msra.mxu0 %v1928
    %1980 = vmatprep.subr.bf16.mxu0 0
    %1981 = vmatpush1.bf16.msra.mxu0 0
    %1982 = vmatprep.subr.bf16.mxu0 0
    %1983 = vmatpush1.bf16.msra.mxu0 0
    %1984 = vmatprep.subr.bf16.mxu0 0
    %1985 = vmatpush1.bf16.msra.mxu0 0
    %1986 = vmatprep.subr.bf16.mxu0 0
    %1987 = vmatpush1.bf16.msra.mxu0 0
    %1988 = vmatprep.subr.bf16.mxu0 0
    %1989 = vmatpush1.bf16.msra.mxu0 0
    %1990 = vmatprep.subr.bf16.mxu0 0
    %1991 = vmatpush1.bf16.msra.mxu0 0
    %1992 = vmatprep.subr.bf16.mxu0 0
    %1993 = vmatpush1.bf16.msra.mxu0 0
    %1994 = vmatprep.subr.bf16.mxu0 0
    %1995 = vmatpush1.bf16.msra.mxu0 0
    %1996 = vmatprep.mubr.bf16.mxu0 0
    %1997 = vmatmul.mubr.bf16.gmra.mrb[0].mxu0 %v1802
    %v1998 = vpop.f32.mrb[0].mxu0
    %v1999 = vadd.f32 0.0, %v1998
    %v2000 = vpop.f32.mrb[0].mxu0
    %v2001 = vadd.f32 0.0, %v2000
    %v2002 = vpop.f32.mrb[0].mxu0
    %v2003 = vpop.f32.mrb[0].mxu0
    %2004 = vdwg.mxu0
    %2005 = vmatprep.subr.bf16.mxu0 %v1903
    %2006 = vmatpush1.bf16.msra.mxu0 %v1902
    %2007 = vmatprep.subr.bf16.mxu0 %v1907
    %2008 = vmatpush1.bf16.msra.mxu0 %v1906
    %2009 = vmatprep.subr.bf16.mxu0 %v1911
    %2010 = vmatpush1.bf16.msra.mxu0 %v1910
    %2011 = vmatprep.subr.bf16.mxu0 %v1915
    %2012 = vmatpush1.bf16.msra.mxu0 %v1914
    %2013 = vmatprep.subr.bf16.mxu0 %v1919
    %2014 = vmatpush1.bf16.msra.mxu0 %v1918
    %2015 = vmatprep.subr.bf16.mxu0 %v1923
    %2016 = vmatpush1.bf16.msra.mxu0 %v1922
    %2017 = vmatprep.subr.bf16.mxu0 %v1927
    %2018 = vmatpush1.bf16.msra.mxu0 %v1926
    %2019 = vmatprep.subr.bf16.mxu0 %v1931
    %2020 = vmatpush1.bf16.msra.mxu0 %v1930
    %2021 = vmatprep.subr.bf16.mxu0 0
    %2022 = vmatpush1.bf16.msra.mxu0 0
    %2023 = vmatprep.subr.bf16.mxu0 0
    %2024 = vmatpush1.bf16.msra.mxu0 0
    %2025 = vmatprep.subr.bf16.mxu0 0
    %2026 = vmatpush1.bf16.msra.mxu0 0
    %2027 = vmatprep.subr.bf16.mxu0 0
    %2028 = vmatpush1.bf16.msra.mxu0 0
    %2029 = vmatprep.subr.bf16.mxu0 0
    %2030 = vmatpush1.bf16.msra.mxu0 0
    %2031 = vmatprep.subr.bf16.mxu0 0
    %2032 = vmatpush1.bf16.msra.mxu0 0
    %2033 = vmatprep.subr.bf16.mxu0 0
    %2034 = vmatpush1.bf16.msra.mxu0 0
    %2035 = vmatprep.subr.bf16.mxu0 0
    %2036 = vmatpush1.bf16.msra.mxu0 0
    %2037 = vmatprep.mubr.bf16.mxu0 0
    %2038 = vmatmul.mubr.bf16.gmra.mrb[0].mxu0 %v1802
    %v2039 = vpop.f32.mrb[0].mxu0
    %v2040 = vadd.f32 0.0, %v2039
    %v2041 = vpop.f32.mrb[0].mxu0
    %v2042 = vadd.f32 0.0, %v2041
    %v2043 = vpop.f32.mrb[0].mxu0
    %v2044 = vpop.f32.mrb[0].mxu0
    %2045 = vdwg.mxu0
    %2047 = vrot.lane.b32.xlu0 %v1999, 64
    %v2048 = vpop.permute.xlu0 %2047
    %2051 = vrot.lane.b32.xlu0 %v2001, 64
    %v2052 = vpop.permute.xlu0 %2051
    %2055 = vrot.lane.b32.xlu0 %v2040, 64
    %v2056 = vpop.permute.xlu0 %2055
    %2059 = vrot.lane.b32.xlu0 %v2042, 64
    %v2060 = vpop.permute.xlu0 %2059
    %v2062 = vcombine.low %v1999, %v2001
    %v2064 = vunpack.c.l.s4 1983009808
    %v2065 = vunpack.c.0.s8 %v2064
    %v2066 = vlaneseq
    %v2067 = vshrl.u32 %v2066, 7
    %v2068 = vsub.s32 %v2065, %v2067
    %v2069 = vrot.slane %v2062, %v2068
    %v2070 = vcombine.low %v2048, %v2052
    %v2072 = vunpack.c.l.s4 1983009808
    %v2073 = vunpack.c.0.s8 %v2072
    %v2074 = vlaneseq
    %v2075 = vshrl.u32 %v2074, 7
    %v2076 = vsub.s32 %v2073, %v2075
    %v2077 = vrot.slane %v2070, %v2076
    %v2078 = vcombine.low %v2040, %v2042
    %v2080 = vunpack.c.l.s4 1983009808
    %v2081 = vunpack.c.0.s8 %v2080
    %v2082 = vlaneseq
    %v2083 = vshrl.u32 %v2082, 7
    %v2084 = vsub.s32 %v2081, %v2083
    %v2085 = vrot.slane %v2078, %v2084
    %v2086 = vcombine.low %v2056, %v2060
    %v2088 = vunpack.c.l.s4 1983009808
    %v2089 = vunpack.c.0.s8 %v2088
    %v2090 = vlaneseq
    %v2091 = vshrl.u32 %v2090, 7
    %v2092 = vsub.s32 %v2089, %v2091
    %v2093 = vrot.slane %v2086, %v2092
    %v2094 = vcombine.low %v2069, %v2077
    %v2096 = vunpack.c.l.s4 1934713408
    %v2097 = vunpack.c.0.s8 %v2096
    %v2098 = vlaneseq
    %v2099 = vshrl.u32 %v2098, 7
    %v2100 = vsub.s32 %v2097, %v2099
    %v2101 = vrot.slane %v2094, %v2100
    %v2102 = vcombine.low %v2085, %v2093
    %v2104 = vunpack.c.l.s4 1934713408
    %v2105 = vunpack.c.0.s8 %v2104
    %v2106 = vlaneseq
    %v2107 = vshrl.u32 %v2106, 7
    %v2108 = vsub.s32 %v2105, %v2107
    %v2109 = vrot.slane %v2102, %v2108
    %v2110 = vcombine.low %v2101, %v2109
    %v2111 = vcombine.high %v2101, %v2109
    %v2112 = vld [vmem:[%s13] sm:$0x1]
    %v2114 = vlaneseq
    %v2115 = vshrl.u32 %v2114, 7
    %v2116 = vsub.s32 0, %v2115
    %v2117 = vrot.slane %v2112, %v2116
    %v2119 = vadd.f32 %v2110, %v2117
    %v2120 = vadd.f32 %v2111, %v2117
    %v2121 = vxor.u32 %v1538, 2147483648
    %v2122 = vmul.f32 %v2121, 1.442695
    %v2123 = vpow.pop %v2122
    %v2124 = vadd.f32 %v2123, 1.0
    %v2125 = vrcp.pop %v2124
    %v2126 = vmul.f32 1.0, %v2125
    %v2127 = vld [vmem:[%s16] sm:$0xf]
    %v2128 = vld [vmem:[%s17] sm:$0xff]
    %v2129 = vld [vmem:[%s17 + $0x8] sm:$0xff]
    %v2130 = vld [vmem:[%s17 + $0x10] sm:$0xff]
    %v2131 = vld [vmem:[%s17 + $0x18] sm:$0xff]
    %v2132 = vld [vmem:[%s17 + $0x20] sm:$0xff]
    %v2133 = vld [vmem:[%s17 + $0x28] sm:$0xff]
    %v2134 = vld [vmem:[%s17 + $0x30] sm:$0xff]
    %v2135 = vld [vmem:[%s17 + $0x38] sm:$0xff]
    %v2136 = vld [vmem:[%s14] sm:$0x1]
    %v2137 = vld [vmem:[%s15] sm:$0x1]
    %v2138 = vlaneseq
    %v2139 = vshrl.u32 %v2138, 7
    %v2140 = vsub.s32 0, %v2139
    %v2141 = vrot.slane %v2126, %v2140
    %2143 = vbcast.lane.b32.xlu0 %v2141, 256
    %v2144 = vpop.permute.xlu0 %2143
    %v2145 = vlaneseq
    %v2146 = vshrl.u32 %v2145, 7
    %v2147 = vsub.s32 1, %v2146
    %v2148 = vrot.slane %v2126, %v2147
    %2150 = vbcast.lane.b32.xlu0 %v2148, 256
    %v2151 = vpop.permute.xlu0 %2150
    %v2152 = vmul.f32 %v2144, 0.25
    %v2153 = vmul.f32 %v2151, 0.25
    %v2154 = vsub.f32 %v2144, %v2152
    %v2155 = vsub.f32 %v2151, %v2153
    %v2156 = vrot.slane %v2152, 4
    %v2157 = vadd.f32 %v2152, %v2156
    %v2158 = vrot.slane %v2157, 2
    %v2159 = vadd.f32 %v2157, %v2158
    %v2160 = vrot.slane %v2159, 1
    %v2161 = vadd.f32 %v2159, %v2160
    %v2162 = vrot.slane %v2153, 4
    %v2163 = vadd.f32 %v2153, %v2162
    %v2164 = vrot.slane %v2163, 2
    %v2165 = vadd.f32 %v2163, %v2164
    %v2166 = vrot.slane %v2165, 1
    %v2167 = vadd.f32 %v2165, %v2166
    %v2168 = vrot.slane %v2154, 4
    %v2169 = vadd.f32 %v2154, %v2168
    %v2170 = vrot.slane %v2169, 2
    %v2171 = vadd.f32 %v2169, %v2170
    %v2172 = vrot.slane %v2171, 1
    %v2173 = vadd.f32 %v2171, %v2172
    %v2174 = vrot.slane %v2155, 4
    %v2175 = vadd.f32 %v2155, %v2174
    %v2176 = vrot.slane %v2175, 2
    %v2177 = vadd.f32 %v2175, %v2176
    %v2178 = vrot.slane %v2177, 1
    %v2179 = vadd.f32 %v2177, %v2178
    %v2181 = vlaneseq
    %v2182 = vshrl.u32 %v2181, 7
    %v2183 = vsub.s32 0, %v2182
    %v2184 = vrot.slane %v2136, %v2183
    %v2188 = vsel %vm438, %v2167, %v2161
    %v2190 = vmul.f32 %v2184, %v2188
    %v2192 = vlaneseq
    %v2193 = vshrl.u32 %v2192, 7
    %v2194 = vsub.s32 0, %v2193
    %v2195 = vrot.slane %v2137, %v2194
    %v2199 = vsel %vm438, %v2179, %v2173
    %v2201 = vmul.f32 %v2195, %v2199
    %v2202 = vsub.f32 %v2190, %v2201
    %v2203 = vadd.f32 %v2161, 1e-05
    %v2204 = vadd.f32 %v2167, 1e-05
    %v2205 = vrcp.pop %v2203
    %v2206 = vmul.f32 1.0, %v2205
    %v2207 = vrcp.pop %v2204
    %v2208 = vmul.f32 1.0, %v2207
    %vm2209 = vcmask 31744
    %v2211 = vsel %vm2209, %v2152, 0
    %v2214 = vsel %vm2209, %v2153, 0
    %vm2216 = vcmask 1043456
    %v2218 = vsel %vm2216, %v2127, 0
    %2220 = vmatprep.subr.mxu0 0.0
    %2221 = vmatpush1.msra.mxu0 %v2218
    %2222 = vmatprep.subr.mxu0 0.0
    %2223 = vmatpush1.msra.mxu0 0.0
    %2224 = vmatprep.subr.mxu0 0.0
    %2225 = vmatpush1.msra.mxu0 0.0
    %2226 = vmatprep.subr.mxu0 0.0
    %2227 = vmatpush1.msra.mxu0 0.0
    %2228 = vmatprep.subr.mxu0 0.0
    %2229 = vmatpush1.msra.mxu0 0.0
    %2230 = vmatprep.subr.mxu0 0.0
    %2231 = vmatpush1.msra.mxu0 0.0
    %2232 = vmatprep.subr.mxu0 0.0
    %2233 = vmatpush1.msra.mxu0 0.0
    %2234 = vmatprep.subr.mxu0 0.0
    %2235 = vmatpush1.msra.mxu0 0.0
    %2236 = vmatprep.subr.mxu0 0.0
    %2237 = vmatpush1.msra.mxu0 0.0
    %2238 = vmatprep.subr.mxu0 0.0
    %2239 = vmatpush1.msra.mxu0 0.0
    %2240 = vmatprep.subr.mxu0 0.0
    %2241 = vmatpush1.msra.mxu0 0.0
    %2242 = vmatprep.subr.mxu0 0.0
    %2243 = vmatpush1.msra.mxu0 0.0
    %2244 = vmatprep.subr.mxu0 0.0
    %2245 = vmatpush1.msra.mxu0 0.0
    %2246 = vmatprep.subr.mxu0 0.0
    %2247 = vmatpush1.msra.mxu0 0.0
    %2248 = vmatprep.subr.mxu0 0.0
    %2249 = vmatpush1.msra.mxu0 0.0
    %2250 = vmatprep.subr.mxu0 0.0
    %2251 = vmatpush1.msra.mxu0 0.0
    %2252 = vmatprep.subr.mxu0 0.0
    %2253 = vmatpush1.msra.mxu0 0.0
    %2254 = vmatprep.subr.mxu0 0.0
    %2255 = vmatpush1.msra.mxu0 0.0
    %2256 = vmatprep.subr.mxu0 0.0
    %2257 = vmatpush1.msra.mxu0 0.0
    %2258 = vmatprep.subr.mxu0 0.0
    %2259 = vmatpush1.msra.mxu0 0.0
    %2260 = vmatprep.subr.mxu0 0.0
    %2261 = vmatpush1.msra.mxu0 0.0
    %2262 = vmatprep.subr.mxu0 0.0
    %2263 = vmatpush1.msra.mxu0 0.0
    %2264 = vmatprep.subr.mxu0 0.0
    %2265 = vmatpush1.msra.mxu0 0.0
    %2266 = vmatprep.subr.mxu0 0.0
    %2267 = vmatpush1.msra.mxu0 0.0
    %2268 = vmatprep.subr.mxu0 0.0
    %2269 = vmatpush1.msra.mxu0 0.0
    %2270 = vmatprep.subr.mxu0 0.0
    %2271 = vmatpush1.msra.mxu0 0.0
    %2272 = vmatprep.subr.mxu0 0.0
    %2273 = vmatpush1.msra.mxu0 0.0
    %2274 = vmatprep.subr.mxu0 0.0
    %2275 = vmatpush1.msra.mxu0 0.0
    %2276 = vmatprep.subr.mxu0 0.0
    %2277 = vmatpush1.msra.mxu0 0.0
    %2278 = vmatprep.subr.mxu0 0.0
    %2279 = vmatpush1.msra.mxu0 0.0
    %2280 = vmatprep.subr.mxu0 0.0
    %2281 = vmatpush1.msra.mxu0 0.0
    %2282 = vmatprep.subr.mxu0 0.0
    %2283 = vmatpush1.msra.mxu0 0.0
    %2284 = vmatprep.mubr.f32.mxu0 0.0
    %2285 = vmatmul.mubr.f32.gmra.mrb[0].mxu0 %v2211
    %v2286 = vpop.f32.mrb[0].mxu0
    %v2287 = vadd.f32 0.0, %v2286
    %v2288 = vpop.f32.mrb[0].mxu0
    %2289 = vmatprep.mubr.f32.mxu0 0.0
    %2290 = vmatmul.mubr.f32.gmra.mrb[0].mxu0 %v2214
    %v2291 = vpop.f32.mrb[0].mxu0
    %v2292 = vadd.f32 0.0, %v2291
    %v2293 = vpop.f32.mrb[0].mxu0
    %2294 = vdwg.mxu0
    %v2297 = vsel %vm438, %v2208, %v2206
    %v2298 = vsel %vm2209, %v2297, 0
    %2300 = vmatprep.subr.mxu0 0.0
    %2301 = vmatpush1.msra.mxu0 %v2218
    %2302 = vmatprep.subr.mxu0 0.0
    %2303 = vmatpush1.msra.mxu0 0.0
    %2304 = vmatprep.subr.mxu0 0.0
    %2305 = vmatpush1.msra.mxu0 0.0
    %2306 = vmatprep.subr.mxu0 0.0
    %2307 = vmatpush1.msra.mxu0 0.0
    %2308 = vmatprep.subr.mxu0 0.0
    %2309 = vmatpush1.msra.mxu0 0.0
    %2310 = vmatprep.subr.mxu0 0.0
    %2311 = vmatpush1.msra.mxu0 0.0
    %2312 = vmatprep.subr.mxu0 0.0
    %2313 = vmatpush1.msra.mxu0 0.0
    %2314 = vmatprep.subr.mxu0 0.0
    %2315 = vmatpush1.msra.mxu0 0.0
    %2316 = vmatprep.subr.mxu0 0.0
    %2317 = vmatpush1.msra.mxu0 0.0
    %2318 = vmatprep.subr.mxu0 0.0
    %2319 = vmatpush1.msra.mxu0 0.0
    %2320 = vmatprep.subr.mxu0 0.0
    %2321 = vmatpush1.msra.mxu0 0.0
    %2322 = vmatprep.subr.mxu0 0.0
    %2323 = vmatpush1.msra.mxu0 0.0
    %2324 = vmatprep.subr.mxu0 0.0
    %2325 = vmatpush1.msra.mxu0 0.0
    %2326 = vmatprep.subr.mxu0 0.0
    %2327 = vmatpush1.msra.mxu0 0.0
    %2328 = vmatprep.subr.mxu0 0.0
    %2329 = vmatpush1.msra.mxu0 0.0
    %2330 = vmatprep.subr.mxu0 0.0
    %2331 = vmatpush1.msra.mxu0 0.0
    %2332 = vmatprep.subr.mxu0 0.0
    %2333 = vmatpush1.msra.mxu0 0.0
    %2334 = vmatprep.subr.mxu0 0.0
    %2335 = vmatpush1.msra.mxu0 0.0
    %2336 = vmatprep.subr.mxu0 0.0
    %2337 = vmatpush1.msra.mxu0 0.0
    %2338 = vmatprep.subr.mxu0 0.0
    %2339 = vmatpush1.msra.mxu0 0.0
    %2340 = vmatprep.subr.mxu0 0.0
    %2341 = vmatpush1.msra.mxu0 0.0
    %2342 = vmatprep.subr.mxu0 0.0
    %2343 = vmatpush1.msra.mxu0 0.0
    %2344 = vmatprep.subr.mxu0 0.0
    %2345 = vmatpush1.msra.mxu0 0.0
    %2346 = vmatprep.subr.mxu0 0.0
    %2347 = vmatpush1.msra.mxu0 0.0
    %2348 = vmatprep.subr.mxu0 0.0
    %2349 = vmatpush1.msra.mxu0 0.0
    %2350 = vmatprep.subr.mxu0 0.0
    %2351 = vmatpush1.msra.mxu0 0.0
    %2352 = vmatprep.subr.mxu0 0.0
    %2353 = vmatpush1.msra.mxu0 0.0
    %2354 = vmatprep.subr.mxu0 0.0
    %2355 = vmatpush1.msra.mxu0 0.0
    %2356 = vmatprep.subr.mxu0 0.0
    %2357 = vmatpush1.msra.mxu0 0.0
    %2358 = vmatprep.subr.mxu0 0.0
    %2359 = vmatpush1.msra.mxu0 0.0
    %2360 = vmatprep.subr.mxu0 0.0
    %2361 = vmatpush1.msra.mxu0 0.0
    %2362 = vmatprep.subr.mxu0 0.0
    %2363 = vmatpush1.msra.mxu0 0.0
    %2364 = vmatprep.mubr.f32.mxu0 0.0
    %2365 = vmatmul.mubr.f32.gmra.mrb[0].mxu0 %v2298
    %v2366 = vpop.f32.mrb[0].mxu0
    %v2367 = vadd.f32 0.0, %v2366
    %v2368 = vpop.f32.mrb[0].mxu0
    %2369 = vdwg.mxu0
    %v2372 = vunpack.c.l.s4 1966171168
    %v2373 = vunpack.c.0.s8 %v2372
    %v2374 = vlaneseq
    %v2375 = vshrl.u32 %v2374, 7
    %v2376 = vsub.s32 %v2373, %v2375
    %v2377 = vrot.slane %v2367, %v2376
    %v2378 = vcombine.high %v2377, %v2377
    %v2380 = vunpack.c.l.s4 1966171168
    %v2381 = vunpack.c.0.s8 %v2380
    %v2382 = vlaneseq
    %v2383 = vshrl.u32 %v2382, 7
    %v2384 = vsub.s32 %v2381, %v2383
    %v2385 = vrot.slane %v2377, %v2384
    %v2387 = vunpack.c.l.s4 1966171168
    %v2388 = vunpack.c.0.s8 %v2387
    %v2389 = vlaneseq
    %v2390 = vshrl.u32 %v2389, 7
    %v2391 = vsub.s32 %v2388, %v2390
    %v2392 = vrot.slane %v2378, %v2391
    %v2395 = vmul.f32 %v2287, %v2119
    %v2396 = vmul.f32 %v2292, %v2120
    %vm2397 = vcmask 523264
    %v2398 = vsel %vm2397, %v2395, 0.0
    %v2399 = vrot.slane %v2398, 4
    %v2400 = vadd.f32 %v2398, %v2399
    %v2401 = vrot.slane %v2400, 2
    %v2402 = vadd.f32 %v2400, %v2401
    %v2403 = vrot.slane %v2402, 1
    %v2404 = vadd.f32 %v2402, %v2403
    %v2405 = vsel %vm2397, %v2396, 0.0
    %v2406 = vrot.slane %v2405, 4
    %v2407 = vadd.f32 %v2405, %v2406
    %v2408 = vrot.slane %v2407, 2
    %v2409 = vadd.f32 %v2407, %v2408
    %v2410 = vrot.slane %v2409, 1
    %v2411 = vadd.f32 %v2409, %v2410
    %v2412 = vmul.f32 %v2404, %v2385
    %v2413 = vmul.f32 %v2411, %v2392
    %v2414 = vlaneseq
    %v2415 = vshrl.u32 %v2414, 7
    %v2416 = vsub.s32 0, %v2415
    %v2417 = vrot.slane %v2412, %v2416
    %v2418 = vlaneseq
    %v2419 = vshrl.u32 %v2418, 7
    %v2420 = vsub.s32 0, %v2419
    %v2421 = vrot.slane %v2413, %v2420
    %v2422 = vsub.f32 %v2119, %v2417
    %v2423 = vsub.f32 %v2120, %v2421
    %v2424 = vmul.f32 %v2422, %v2422
    %v2425 = vmul.f32 %v2423, %v2423
    %v2426 = vmul.f32 %v2287, %v2424
    %v2427 = vmul.f32 %v2292, %v2425
    %v2428 = vsel %vm2397, %v2426, 0.0
    %v2429 = vrot.slane %v2428, 4
    %v2430 = vadd.f32 %v2428, %v2429
    %v2431 = vrot.slane %v2430, 2
    %v2432 = vadd.f32 %v2430, %v2431
    %v2433 = vrot.slane %v2432, 1
    %v2434 = vadd.f32 %v2432, %v2433
    %v2435 = vsel %vm2397, %v2427, 0.0
    %v2436 = vrot.slane %v2435, 4
    %v2437 = vadd.f32 %v2435, %v2436
    %v2438 = vrot.slane %v2437, 2
    %v2439 = vadd.f32 %v2437, %v2438
    %v2440 = vrot.slane %v2439, 1
    %v2441 = vadd.f32 %v2439, %v2440
    %v2442 = vmul.f32 %v2434, %v2385
    %v2443 = vmul.f32 %v2441, %v2392
    %v2444 = vadd.f32 %v2442, 1e-05
    %v2445 = vadd.f32 %v2443, 1e-05
    %v2446 = vsub.f32 0.0, %v2202
    %v2447 = vmax.f32 %v2446, 0.0
    %vm2448 = vcmp.ne.f32.partialorder %v2446, %v2446
    %v2449 = vadd.f32 %v2446, 0.0
    %v2450 = vand.u32 2147483647, %v2446
    %v2451 = vsub.f32 0.0, %v2450
    %v2452 = vmul.f32 %v2451, 1.442695
    %v2453 = vpow.pop %v2452
    %v2454 = vadd.f32 %v2453, 1.0
    %v2455 = vlog2.pop %v2454
    %v2456 = vmul.f32 %v2455, 0.6931472
    %v2457 = vmul.f32 -0.5, %v2453
    %v2458 = vadd.f32 %v2457, 1.0
    %v2459 = vmul.f32 %v2458, %v2453
    %v2460 = vand.u32 2147483647, %v2453
    %vm2461 = vcmp.lt.f32.partialorder %v2460, 0.0004427343
    %v2462 = vsel %vm2461, %v2459, %v2456
    %v2463 = vadd.f32 %v2447, %v2462
    %v2464 = vsel %vm2448, %v2449, %v2463
    %v2465 = vsub.f32 0.0, %v2464
    %v2466 = vrcp.pop %v2444
    %v2467 = vmul.f32 1.0, %v2466
    %v2468 = vrcp.pop %v2445
    %v2469 = vmul.f32 1.0, %v2468
    %v2470 = vlog2.pop %v2444
    %v2471 = vmul.f32 %v2470, 0.6931472
    %v2472 = vlog2.pop %v2445
    %v2473 = vmul.f32 %v2472, 0.6931472
    %v2474 = vsub.f32 0.0, %v2424
    %v2475 = vsub.f32 0.0, %v2425
    %v2476 = vmul.f32 %v2467, 0.5
    %v2477 = vmul.f32 %v2469, 0.5
    %v2478 = vlaneseq
    %v2479 = vshrl.u32 %v2478, 7
    %v2480 = vsub.s32 0, %v2479
    %v2481 = vrot.slane %v2476, %v2480
    %v2482 = vlaneseq
    %v2483 = vshrl.u32 %v2482, 7
    %v2484 = vsub.s32 0, %v2483
    %v2485 = vrot.slane %v2477, %v2484
    %v2486 = vmul.f32 %v2474, %v2481
    %v2487 = vmul.f32 %v2475, %v2485
    %v2488 = vmul.f32 %v2471, 0.5
    %v2489 = vmul.f32 %v2473, 0.5
    %v2490 = vlaneseq
    %v2491 = vshrl.u32 %v2490, 7
    %v2492 = vsub.s32 0, %v2491
    %v2493 = vrot.slane %v2488, %v2492
    %v2494 = vlaneseq
    %v2495 = vshrl.u32 %v2494, 7
    %v2496 = vsub.s32 0, %v2495
    %v2497 = vrot.slane %v2489, %v2496
    %v2498 = vsub.f32 %v2486, %v2493
    %v2499 = vsub.f32 %v2487, %v2497
    %v2501 = vsel %vm2397, %v2498, 0
    %v2504 = vsel %vm2397, %v2499, 0
    %2506 = vmatprep.subr.mxu0 0.0
    %2507 = vmatpush1.msra.mxu0 %v2128
    %2508 = vmatprep.subr.mxu0 0.0
    %2509 = vmatpush1.msra.mxu0 %v2129
    %2510 = vmatprep.subr.mxu0 0.0
    %2511 = vmatpush1.msra.mxu0 %v2130
    %2512 = vmatprep.subr.mxu0 0.0
    %2513 = vmatpush1.msra.mxu0 %v2131
    %2514 = vmatprep.subr.mxu0 0.0
    %2515 = vmatpush1.msra.mxu0 %v2132
    %2516 = vmatprep.subr.mxu0 0.0
    %2517 = vmatpush1.msra.mxu0 %v2133
    %2518 = vmatprep.subr.mxu0 0.0
    %2519 = vmatpush1.msra.mxu0 %v2134
    %2520 = vmatprep.subr.mxu0 0.0
    %2521 = vmatpush1.msra.mxu0 %v2135
    %2522 = vmatprep.subr.mxu0 0.0
    %2523 = vmatpush1.msra.mxu0 0.0
    %2524 = vmatprep.subr.mxu0 0.0
    %2525 = vmatpush1.msra.mxu0 0.0
    %2526 = vmatprep.subr.mxu0 0.0
    %2527 = vmatpush1.msra.mxu0 0.0
    %2528 = vmatprep.subr.mxu0 0.0
    %2529 = vmatpush1.msra.mxu0 0.0
    %2530 = vmatprep.subr.mxu0 0.0
    %2531 = vmatpush1.msra.mxu0 0.0
    %2532 = vmatprep.subr.mxu0 0.0
    %2533 = vmatpush1.msra.mxu0 0.0
    %2534 = vmatprep.subr.mxu0 0.0
    %2535 = vmatpush1.msra.mxu0 0.0
    %2536 = vmatprep.subr.mxu0 0.0
    %2537 = vmatpush1.msra.mxu0 0.0
    %2538 = vmatprep.subr.mxu0 0.0
    %2539 = vmatpush1.msra.mxu0 0.0
    %2540 = vmatprep.subr.mxu0 0.0
    %2541 = vmatpush1.msra.mxu0 0.0
    %2542 = vmatprep.subr.mxu0 0.0
    %2543 = vmatpush1.msra.mxu0 0.0
    %2544 = vmatprep.subr.mxu0 0.0
    %2545 = vmatpush1.msra.mxu0 0.0
    %2546 = vmatprep.subr.mxu0 0.0
    %2547 = vmatpush1.msra.mxu0 0.0
    %2548 = vmatprep.subr.mxu0 0.0
    %2549 = vmatpush1.msra.mxu0 0.0
    %2550 = vmatprep.subr.mxu0 0.0
    %2551 = vmatpush1.msra.mxu0 0.0
    %2552 = vmatprep.subr.mxu0 0.0
    %2553 = vmatpush1.msra.mxu0 0.0
    %2554 = vmatprep.subr.mxu0 0.0
    %2555 = vmatpush1.msra.mxu0 0.0
    %2556 = vmatprep.subr.mxu0 0.0
    %2557 = vmatpush1.msra.mxu0 0.0
    %2558 = vmatprep.subr.mxu0 0.0
    %2559 = vmatpush1.msra.mxu0 0.0
    %2560 = vmatprep.subr.mxu0 0.0
    %2561 = vmatpush1.msra.mxu0 0.0
    %2562 = vmatprep.subr.mxu0 0.0
    %2563 = vmatpush1.msra.mxu0 0.0
    %2564 = vmatprep.subr.mxu0 0.0
    %2565 = vmatpush1.msra.mxu0 0.0
    %2566 = vmatprep.subr.mxu0 0.0
    %2567 = vmatpush1.msra.mxu0 0.0
    %2568 = vmatprep.subr.mxu0 0.0
    %2569 = vmatpush1.msra.mxu0 0.0
    %2570 = vmatprep.mubr.f32.mxu0 0.0
    %2571 = vmatmul.mubr.f32.gmra.mrb[0].mxu0 %v2501
    %v2572 = vpop.f32.mrb[0].mxu0
    %v2573 = vadd.f32 0.0, %v2572
    %v2574 = vpop.f32.mrb[0].mxu0
    %2575 = vmatprep.mubr.f32.mxu0 0.0
    %2576 = vmatmul.mubr.f32.gmra.mrb[0].mxu0 %v2504
    %v2577 = vpop.f32.mrb[0].mxu0
    %v2578 = vadd.f32 0.0, %v2577
    %v2579 = vpop.f32.mrb[0].mxu0
    %2580 = vdwg.mxu0
    %v2583 = vunpack.c.l.s4 1966171168
    %v2584 = vunpack.c.0.s8 %v2583
    %v2585 = vlaneseq
    %v2586 = vshrl.u32 %v2585, 7
    %v2587 = vsub.s32 %v2584, %v2586
    %v2588 = vrot.slane %v2465, %v2587
    %v2589 = vcombine.high %v2588, %v2588
    %v2591 = vunpack.c.l.s4 1966171168
    %v2592 = vunpack.c.0.s8 %v2591
    %v2593 = vlaneseq
    %v2594 = vshrl.u32 %v2593, 7
    %v2595 = vsub.s32 %v2592, %v2594
    %v2596 = vrot.slane %v2588, %v2595
    %v2598 = vunpack.c.l.s4 1966171168
    %v2599 = vunpack.c.0.s8 %v2598
    %v2600 = vlaneseq
    %v2601 = vshrl.u32 %v2600, 7
    %v2602 = vsub.s32 %v2599, %v2601
    %v2603 = vrot.slane %v2589, %v2602
    %v2604 = vlaneseq
    %v2605 = vshrl.u32 %v2604, 7
    %v2606 = vsub.s32 0, %v2605
    %v2607 = vrot.slane %v2596, %v2606
    %v2608 = vlaneseq
    %v2609 = vshrl.u32 %v2608, 7
    %v2610 = vsub.s32 0, %v2609
    %v2611 = vrot.slane %v2603, %v2610
    %v2614 = vadd.f32 %v2607, %v2573
    %v2615 = vadd.f32 %v2611, %v2578
    %v2616 = vsel %vm2209, %v2614, -inf
    %2617 = vmax.xlane.f32.xlu0 %v2616
    %v2618 = vpop.xlane.xlu0 %2617
    %v2619 = vsel %vm2209, %v2615, -inf
    %2620 = vmax.xlane.f32.xlu0 %v2619
    %v2621 = vpop.xlane.xlu0 %2620
    %v2622 = vsub.f32 %v2614, %v2618
    %v2623 = vsub.f32 %v2615, %v2621
    %v2624 = vmul.f32 %v2622, 1.442695
    %v2625 = vpow.pop %v2624
    %v2626 = vmul.f32 %v2623, 1.442695
    %v2627 = vpow.pop %v2626
    %v2628 = vsel %vm2209, %v2625, 0.0
    %2629 = vadd.xlane.f32.xlu0 %v2628
    %v2630 = vpop.xlane.xlu0 %2629
    %v2631 = vsel %vm2209, %v2627, 0.0
    %2632 = vadd.xlane.f32.xlu0 %v2631
    %v2633 = vpop.xlane.xlu0 %2632
    %v2634 = vrcp.pop %v2630
    %v2635 = vmul.f32 %v2625, %v2634
    %v2636 = vrcp.pop %v2633
    %v2637 = vmul.f32 %v2627, %v2636
    %v2638 = vmul.f32 %v2144, %v2635
    %v2639 = vmul.f32 %v2151, %v2637
    %v2640 = vsub.f32 %v2144, %v2638
    %v2641 = vsub.f32 %v2151, %v2639
    %v2642 = vsel %vm2209, %v2638, 0.0
    %v2643 = vrot.slane %v2642, 4
    %v2644 = vadd.f32 %v2642, %v2643
    %v2645 = vrot.slane %v2644, 2
    %v2646 = vadd.f32 %v2644, %v2645
    %v2647 = vrot.slane %v2646, 1
    %v2648 = vadd.f32 %v2646, %v2647
    %v2649 = vsel %vm2209, %v2639, 0.0
    %v2650 = vrot.slane %v2649, 4
    %v2651 = vadd.f32 %v2649, %v2650
    %v2652 = vrot.slane %v2651, 2
    %v2653 = vadd.f32 %v2651, %v2652
    %v2654 = vrot.slane %v2653, 1
    %v2655 = vadd.f32 %v2653, %v2654
    %v2656 = vsel %vm2209, %v2640, 0.0
    %v2657 = vrot.slane %v2656, 4
    %v2658 = vadd.f32 %v2656, %v2657
    %v2659 = vrot.slane %v2658, 2
    %v2660 = vadd.f32 %v2658, %v2659
    %v2661 = vrot.slane %v2660, 1
    %v2662 = vadd.f32 %v2660, %v2661
    %v2663 = vsel %vm2209, %v2641, 0.0
    %v2664 = vrot.slane %v2663, 4
    %v2665 = vadd.f32 %v2663, %v2664
    %v2666 = vrot.slane %v2665, 2
    %v2667 = vadd.f32 %v2665, %v2666
    %v2668 = vrot.slane %v2667, 1
    %v2669 = vadd.f32 %v2667, %v2668
    %v2672 = vsel %vm438, %v2655, %v2648
    %v2674 = vmul.f32 %v2184, %v2672
    %v2677 = vsel %vm438, %v2669, %v2662
    %v2679 = vmul.f32 %v2195, %v2677
    %v2680 = vsub.f32 %v2674, %v2679
    %v2681 = vadd.f32 %v2648, 1e-05
    %v2682 = vadd.f32 %v2655, 1e-05
    %v2683 = vrcp.pop %v2681
    %v2684 = vmul.f32 1.0, %v2683
    %v2685 = vrcp.pop %v2682
    %v2686 = vmul.f32 1.0, %v2685
    %v2688 = vsel %vm2209, %v2638, 0
    %v2691 = vsel %vm2209, %v2639, 0
    %2693 = vmatprep.subr.mxu0 0.0
    %2694 = vmatpush1.msra.mxu0 %v2218
    %2695 = vmatprep.subr.mxu0 0.0
    %2696 = vmatpush1.msra.mxu0 0.0
    %2697 = vmatprep.subr.mxu0 0.0
    %2698 = vmatpush1.msra.mxu0 0.0
    %2699 = vmatprep.subr.mxu0 0.0
    %2700 = vmatpush1.msra.mxu0 0.0
    %2701 = vmatprep.subr.mxu0 0.0
    %2702 = vmatpush1.msra.mxu0 0.0
    %2703 = vmatprep.subr.mxu0 0.0
    %2704 = vmatpush1.msra.mxu0 0.0
    %2705 = vmatprep.subr.mxu0 0.0
    %2706 = vmatpush1.msra.mxu0 0.0
    %2707 = vmatprep.subr.mxu0 0.0
    %2708 = vmatpush1.msra.mxu0 0.0
    %2709 = vmatprep.subr.mxu0 0.0
    %2710 = vmatpush1.msra.mxu0 0.0
    %2711 = vmatprep.subr.mxu0 0.0
    %2712 = vmatpush1.msra.mxu0 0.0
    %2713 = vmatprep.subr.mxu0 0.0
    %2714 = vmatpush1.msra.mxu0 0.0
    %2715 = vmatprep.subr.mxu0 0.0
    %2716 = vmatpush1.msra.mxu0 0.0
    %2717 = vmatprep.subr.mxu0 0.0
    %2718 = vmatpush1.msra.mxu0 0.0
    %2719 = vmatprep.subr.mxu0 0.0
    %2720 = vmatpush1.msra.mxu0 0.0
    %2721 = vmatprep.subr.mxu0 0.0
    %2722 = vmatpush1.msra.mxu0 0.0
    %2723 = vmatprep.subr.mxu0 0.0
    %2724 = vmatpush1.msra.mxu0 0.0
    %2725 = vmatprep.subr.mxu0 0.0
    %2726 = vmatpush1.msra.mxu0 0.0
    %2727 = vmatprep.subr.mxu0 0.0
    %2728 = vmatpush1.msra.mxu0 0.0
    %2729 = vmatprep.subr.mxu0 0.0
    %2730 = vmatpush1.msra.mxu0 0.0
    %2731 = vmatprep.subr.mxu0 0.0
    %2732 = vmatpush1.msra.mxu0 0.0
    %2733 = vmatprep.subr.mxu0 0.0
    %2734 = vmatpush1.msra.mxu0 0.0
    %2735 = vmatprep.subr.mxu0 0.0
    %2736 = vmatpush1.msra.mxu0 0.0
    %2737 = vmatprep.subr.mxu0 0.0
    %2738 = vmatpush1.msra.mxu0 0.0
    %2739 = vmatprep.subr.mxu0 0.0
    %2740 = vmatpush1.msra.mxu0 0.0
    %2741 = vmatprep.subr.mxu0 0.0
    %2742 = vmatpush1.msra.mxu0 0.0
    %2743 = vmatprep.subr.mxu0 0.0
    %2744 = vmatpush1.msra.mxu0 0.0
    %2745 = vmatprep.subr.mxu0 0.0
    %2746 = vmatpush1.msra.mxu0 0.0
    %2747 = vmatprep.subr.mxu0 0.0
    %2748 = vmatpush1.msra.mxu0 0.0
    %2749 = vmatprep.subr.mxu0 0.0
    %2750 = vmatpush1.msra.mxu0 0.0
    %2751 = vmatprep.subr.mxu0 0.0
    %2752 = vmatpush1.msra.mxu0 0.0
    %2753 = vmatprep.subr.mxu0 0.0
    %2754 = vmatpush1.msra.mxu0 0.0
    %2755 = vmatprep.subr.mxu0 0.0
    %2756 = vmatpush1.msra.mxu0 0.0
    %2757 = vmatprep.mubr.f32.mxu0 0.0
    %2758 = vmatmul.mubr.f32.gmra.mrb[0].mxu0 %v2688
    %v2759 = vpop.f32.mrb[0].mxu0
    %v2760 = vadd.f32 0.0, %v2759
    %v2761 = vpop.f32.mrb[0].mxu0
    %2762 = vmatprep.mubr.f32.mxu0 0.0
    %2763 = vmatmul.mubr.f32.gmra.mrb[0].mxu0 %v2691
    %v2764 = vpop.f32.mrb[0].mxu0
    %v2765 = vadd.f32 0.0, %v2764
    %v2766 = vpop.f32.mrb[0].mxu0
    %2767 = vdwg.mxu0
    %v2770 = vsel %vm438, %v2686, %v2684
    %v2771 = vsel %vm2209, %v2770, 0
    %2773 = vmatprep.subr.mxu0 0.0
    %2774 = vmatpush1.msra.mxu0 %v2218
    %2775 = vmatprep.subr.mxu0 0.0
    %2776 = vmatpush1.msra.mxu0 0.0
    %2777 = vmatprep.subr.mxu0 0.0
    %2778 = vmatpush1.msra.mxu0 0.0
    %2779 = vmatprep.subr.mxu0 0.0
    %2780 = vmatpush1.msra.mxu0 0.0
    %2781 = vmatprep.subr.mxu0 0.0
    %2782 = vmatpush1.msra.mxu0 0.0
    %2783 = vmatprep.subr.mxu0 0.0
    %2784 = vmatpush1.msra.mxu0 0.0
    %2785 = vmatprep.subr.mxu0 0.0
    %2786 = vmatpush1.msra.mxu0 0.0
    %2787 = vmatprep.subr.mxu0 0.0
    %2788 = vmatpush1.msra.mxu0 0.0
    %2789 = vmatprep.subr.mxu0 0.0
    %2790 = vmatpush1.msra.mxu0 0.0
    %2791 = vmatprep.subr.mxu0 0.0
    %2792 = vmatpush1.msra.mxu0 0.0
    %2793 = vmatprep.subr.mxu0 0.0
    %2794 = vmatpush1.msra.mxu0 0.0
    %2795 = vmatprep.subr.mxu0 0.0
    %2796 = vmatpush1.msra.mxu0 0.0
    %2797 = vmatprep.subr.mxu0 0.0
    %2798 = vmatpush1.msra.mxu0 0.0
    %2799 = vmatprep.subr.mxu0 0.0
    %2800 = vmatpush1.msra.mxu0 0.0
    %2801 = vmatprep.subr.mxu0 0.0
    %2802 = vmatpush1.msra.mxu0 0.0
    %2803 = vmatprep.subr.mxu0 0.0
    %2804 = vmatpush1.msra.mxu0 0.0
    %2805 = vmatprep.subr.mxu0 0.0
    %2806 = vmatpush1.msra.mxu0 0.0
    %2807 = vmatprep.subr.mxu0 0.0
    %2808 = vmatpush1.msra.mxu0 0.0
    %2809 = vmatprep.subr.mxu0 0.0
    %2810 = vmatpush1.msra.mxu0 0.0
    %2811 = vmatprep.subr.mxu0 0.0
    %2812 = vmatpush1.msra.mxu0 0.0
    %2813 = vmatprep.subr.mxu0 0.0
    %2814 = vmatpush1.msra.mxu0 0.0
    %2815 = vmatprep.subr.mxu0 0.0
    %2816 = vmatpush1.msra.mxu0 0.0
    %2817 = vmatprep.subr.mxu0 0.0
    %2818 = vmatpush1.msra.mxu0 0.0
    %2819 = vmatprep.subr.mxu0 0.0
    %2820 = vmatpush1.msra.mxu0 0.0
    %2821 = vmatprep.subr.mxu0 0.0
    %2822 = vmatpush1.msra.mxu0 0.0
    %2823 = vmatprep.subr.mxu0 0.0
    %2824 = vmatpush1.msra.mxu0 0.0
    %2825 = vmatprep.subr.mxu0 0.0
    %2826 = vmatpush1.msra.mxu0 0.0
    %2827 = vmatprep.subr.mxu0 0.0
    %2828 = vmatpush1.msra.mxu0 0.0
    %2829 = vmatprep.subr.mxu0 0.0
    %2830 = vmatpush1.msra.mxu0 0.0
    %2831 = vmatprep.subr.mxu0 0.0
    %2832 = vmatpush1.msra.mxu0 0.0
    %2833 = vmatprep.subr.mxu0 0.0
    %2834 = vmatpush1.msra.mxu0 0.0
    %2835 = vmatprep.subr.mxu0 0.0
    %2836 = vmatpush1.msra.mxu0 0.0
    %2837 = vmatprep.mubr.f32.mxu0 0.0
    %2838 = vmatmul.mubr.f32.gmra.mrb[0].mxu0 %v2771
    %v2839 = vpop.f32.mrb[0].mxu0
    %v2840 = vadd.f32 0.0, %v2839
    %v2841 = vpop.f32.mrb[0].mxu0
    %2842 = vdwg.mxu0
    %v2845 = vunpack.c.l.s4 1966171168
    %v2846 = vunpack.c.0.s8 %v2845
    %v2847 = vlaneseq
    %v2848 = vshrl.u32 %v2847, 7
    %v2849 = vsub.s32 %v2846, %v2848
    %v2850 = vrot.slane %v2840, %v2849
    %v2851 = vcombine.high %v2850, %v2850
    %v2853 = vunpack.c.l.s4 1966171168
    %v2854 = vunpack.c.0.s8 %v2853
    %v2855 = vlaneseq
    %v2856 = vshrl.u32 %v2855, 7
    %v2857 = vsub.s32 %v2854, %v2856
    %v2858 = vrot.slane %v2850, %v2857
    %v2860 = vunpack.c.l.s4 1966171168
    %v2861 = vunpack.c.0.s8 %v2860
    %v2862 = vlaneseq
    %v2863 = vshrl.u32 %v2862, 7
    %v2864 = vsub.s32 %v2861, %v2863
    %v2865 = vrot.slane %v2851, %v2864
    %v2868 = vmul.f32 %v2760, %v2119
    %v2869 = vmul.f32 %v2765, %v2120
    %v2870 = vsel %vm2397, %v2868, 0.0
    %v2871 = vrot.slane %v2870, 4
    %v2872 = vadd.f32 %v2870, %v2871
    %v2873 = vrot.slane %v2872, 2
    %v2874 = vadd.f32 %v2872, %v2873
    %v2875 = vrot.slane %v2874, 1
    %v2876 = vadd.f32 %v2874, %v2875
    %v2877 = vsel %vm2397, %v2869, 0.0
    %v2878 = vrot.slane %v2877, 4
    %v2879 = vadd.f32 %v2877, %v2878
    %v2880 = vrot.slane %v2879, 2
    %v2881 = vadd.f32 %v2879, %v2880
    %v2882 = vrot.slane %v2881, 1
    %v2883 = vadd.f32 %v2881, %v2882
    %v2884 = vmul.f32 %v2876, %v2858
    %v2885 = vmul.f32 %v2883, %v2865
    %v2886 = vlaneseq
    %v2887 = vshrl.u32 %v2886, 7
    %v2888 = vsub.s32 0, %v2887
    %v2889 = vrot.slane %v2884, %v2888
    %v2890 = vlaneseq
    %v2891 = vshrl.u32 %v2890, 7
    %v2892 = vsub.s32 0, %v2891
    %v2893 = vrot.slane %v2885, %v2892
    %v2894 = vsub.f32 %v2119, %v2889
    %v2895 = vsub.f32 %v2120, %v2893
    %v2896 = vmul.f32 %v2894, %v2894
    %v2897 = vmul.f32 %v2895, %v2895
    %v2898 = vmul.f32 %v2760, %v2896
    %v2899 = vmul.f32 %v2765, %v2897
    %v2900 = vsel %vm2397, %v2898, 0.0
    %v2901 = vrot.slane %v2900, 4
    %v2902 = vadd.f32 %v2900, %v2901
    %v2903 = vrot.slane %v2902, 2
    %v2904 = vadd.f32 %v2902, %v2903
    %v2905 = vrot.slane %v2904, 1
    %v2906 = vadd.f32 %v2904, %v2905
    %v2907 = vsel %vm2397, %v2899, 0.0
    %v2908 = vrot.slane %v2907, 4
    %v2909 = vadd.f32 %v2907, %v2908
    %v2910 = vrot.slane %v2909, 2
    %v2911 = vadd.f32 %v2909, %v2910
    %v2912 = vrot.slane %v2911, 1
    %v2913 = vadd.f32 %v2911, %v2912
    %v2914 = vmul.f32 %v2906, %v2858
    %v2915 = vmul.f32 %v2913, %v2865
    %v2916 = vadd.f32 %v2914, 1e-05
    %v2917 = vadd.f32 %v2915, 1e-05
    %v2918 = vsub.f32 0.0, %v2680
    %v2919 = vmax.f32 %v2918, 0.0
    %vm2920 = vcmp.ne.f32.partialorder %v2918, %v2918
    %v2921 = vadd.f32 %v2918, 0.0
    %v2922 = vand.u32 2147483647, %v2918
    %v2923 = vsub.f32 0.0, %v2922
    %v2924 = vmul.f32 %v2923, 1.442695
    %v2925 = vpow.pop %v2924
    %v2926 = vadd.f32 %v2925, 1.0
    %v2927 = vlog2.pop %v2926
    %v2928 = vmul.f32 %v2927, 0.6931472
    %v2929 = vmul.f32 -0.5, %v2925
    %v2930 = vadd.f32 %v2929, 1.0
    %v2931 = vmul.f32 %v2930, %v2925
    %v2932 = vand.u32 2147483647, %v2925
    %vm2933 = vcmp.lt.f32.partialorder %v2932, 0.0004427343
    %v2934 = vsel %vm2933, %v2931, %v2928
    %v2935 = vadd.f32 %v2919, %v2934
    %v2936 = vsel %vm2920, %v2921, %v2935
    %v2937 = vsub.f32 0.0, %v2936
    %v2938 = vrcp.pop %v2916
    %v2939 = vmul.f32 1.0, %v2938
    %v2940 = vrcp.pop %v2917
    %v2941 = vmul.f32 1.0, %v2940
    %v2942 = vlog2.pop %v2916
    %v2943 = vmul.f32 %v2942, 0.6931472
    %v2944 = vlog2.pop %v2917
    %v2945 = vmul.f32 %v2944, 0.6931472
    %v2946 = vsub.f32 0.0, %v2896
    %v2947 = vsub.f32 0.0, %v2897
    %v2948 = vmul.f32 %v2939, 0.5
    %v2949 = vmul.f32 %v2941, 0.5
    %v2950 = vlaneseq
    %v2951 = vshrl.u32 %v2950, 7
    %v2952 = vsub.s32 0, %v2951
    %v2953 = vrot.slane %v2948, %v2952
    %v2954 = vlaneseq
    %v2955 = vshrl.u32 %v2954, 7
    %v2956 = vsub.s32 0, %v2955
    %v2957 = vrot.slane %v2949, %v2956
    %v2958 = vmul.f32 %v2946, %v2953
    %v2959 = vmul.f32 %v2947, %v2957
    %v2960 = vmul.f32 %v2943, 0.5
    %v2961 = vmul.f32 %v2945, 0.5
    %v2962 = vlaneseq
    %v2963 = vshrl.u32 %v2962, 7
    %v2964 = vsub.s32 0, %v2963
    %v2965 = vrot.slane %v2960, %v2964
    %v2966 = vlaneseq
    %v2967 = vshrl.u32 %v2966, 7
    %v2968 = vsub.s32 0, %v2967
    %v2969 = vrot.slane %v2961, %v2968
    %v2970 = vsub.f32 %v2958, %v2965
    %v2971 = vsub.f32 %v2959, %v2969
    %v2973 = vsel %vm2397, %v2970, 0
    %v2976 = vsel %vm2397, %v2971, 0
    %2978 = vmatprep.subr.mxu0 0.0
    %2979 = vmatpush1.msra.mxu0 %v2128
    %2980 = vmatprep.subr.mxu0 0.0
    %2981 = vmatpush1.msra.mxu0 %v2129
    %2982 = vmatprep.subr.mxu0 0.0
    %2983 = vmatpush1.msra.mxu0 %v2130
    %2984 = vmatprep.subr.mxu0 0.0
    %2985 = vmatpush1.msra.mxu0 %v2131
    %2986 = vmatprep.subr.mxu0 0.0
    %2987 = vmatpush1.msra.mxu0 %v2132
    %2988 = vmatprep.subr.mxu0 0.0
    %2989 = vmatpush1.msra.mxu0 %v2133
    %2990 = vmatprep.subr.mxu0 0.0
    %2991 = vmatpush1.msra.mxu0 %v2134
    %2992 = vmatprep.subr.mxu0 0.0
    %2993 = vmatpush1.msra.mxu0 %v2135
    %2994 = vmatprep.subr.mxu0 0.0
    %2995 = vmatpush1.msra.mxu0 0.0
    %2996 = vmatprep.subr.mxu0 0.0
    %2997 = vmatpush1.msra.mxu0 0.0
    %2998 = vmatprep.subr.mxu0 0.0
    %2999 = vmatpush1.msra.mxu0 0.0
    %3000 = vmatprep.subr.mxu0 0.0
    %3001 = vmatpush1.msra.mxu0 0.0
    %3002 = vmatprep.subr.mxu0 0.0
    %3003 = vmatpush1.msra.mxu0 0.0
    %3004 = vmatprep.subr.mxu0 0.0
    %3005 = vmatpush1.msra.mxu0 0.0
    %3006 = vmatprep.subr.mxu0 0.0
    %3007 = vmatpush1.msra.mxu0 0.0
    %3008 = vmatprep.subr.mxu0 0.0
    %3009 = vmatpush1.msra.mxu0 0.0
    %3010 = vmatprep.subr.mxu0 0.0
    %3011 = vmatpush1.msra.mxu0 0.0
    %3012 = vmatprep.subr.mxu0 0.0
    %3013 = vmatpush1.msra.mxu0 0.0
    %3014 = vmatprep.subr.mxu0 0.0
    %3015 = vmatpush1.msra.mxu0 0.0
    %3016 = vmatprep.subr.mxu0 0.0
    %3017 = vmatpush1.msra.mxu0 0.0
    %3018 = vmatprep.subr.mxu0 0.0
    %3019 = vmatpush1.msra.mxu0 0.0
    %3020 = vmatprep.subr.mxu0 0.0
    %3021 = vmatpush1.msra.mxu0 0.0
    %3022 = vmatprep.subr.mxu0 0.0
    %3023 = vmatpush1.msra.mxu0 0.0
    %3024 = vmatprep.subr.mxu0 0.0
    %3025 = vmatpush1.msra.mxu0 0.0
    %3026 = vmatprep.subr.mxu0 0.0
    %3027 = vmatpush1.msra.mxu0 0.0
    %3028 = vmatprep.subr.mxu0 0.0
    %3029 = vmatpush1.msra.mxu0 0.0
    %3030 = vmatprep.subr.mxu0 0.0
    %3031 = vmatpush1.msra.mxu0 0.0
    %3032 = vmatprep.subr.mxu0 0.0
    %3033 = vmatpush1.msra.mxu0 0.0
    %3034 = vmatprep.subr.mxu0 0.0
    %3035 = vmatpush1.msra.mxu0 0.0
    %3036 = vmatprep.subr.mxu0 0.0
    %3037 = vmatpush1.msra.mxu0 0.0
    %3038 = vmatprep.subr.mxu0 0.0
    %3039 = vmatpush1.msra.mxu0 0.0
    %3040 = vmatprep.subr.mxu0 0.0
    %3041 = vmatpush1.msra.mxu0 0.0
    %3042 = vmatprep.mubr.f32.mxu0 0.0
    %3043 = vmatmul.mubr.f32.gmra.mrb[0].mxu0 %v2973
    %v3044 = vpop.f32.mrb[0].mxu0
    %v3045 = vadd.f32 0.0, %v3044
    %v3046 = vpop.f32.mrb[0].mxu0
    %3047 = vmatprep.mubr.f32.mxu0 0.0
    %3048 = vmatmul.mubr.f32.gmra.mrb[0].mxu0 %v2976
    %v3049 = vpop.f32.mrb[0].mxu0
    %v3050 = vadd.f32 0.0, %v3049
    %v3051 = vpop.f32.mrb[0].mxu0
    %3052 = vdwg.mxu0
    %v3055 = vunpack.c.l.s4 1966171168
    %v3056 = vunpack.c.0.s8 %v3055
    %v3057 = vlaneseq
    %v3058 = vshrl.u32 %v3057, 7
    %v3059 = vsub.s32 %v3056, %v3058
    %v3060 = vrot.slane %v2937, %v3059
    %v3061 = vcombine.high %v3060, %v3060
    %v3063 = vunpack.c.l.s4 1966171168
    %v3064 = vunpack.c.0.s8 %v3063
    %v3065 = vlaneseq
    %v3066 = vshrl.u32 %v3065, 7
    %v3067 = vsub.s32 %v3064, %v3066
    %v3068 = vrot.slane %v3060, %v3067
    %v3070 = vunpack.c.l.s4 1966171168
    %v3071 = vunpack.c.0.s8 %v3070
    %v3072 = vlaneseq
    %v3073 = vshrl.u32 %v3072, 7
    %v3074 = vsub.s32 %v3071, %v3073
    %v3075 = vrot.slane %v3061, %v3074
    %v3076 = vlaneseq
    %v3077 = vshrl.u32 %v3076, 7
    %v3078 = vsub.s32 0, %v3077
    %v3079 = vrot.slane %v3068, %v3078
    %v3080 = vlaneseq
    %v3081 = vshrl.u32 %v3080, 7
    %v3082 = vsub.s32 0, %v3081
    %v3083 = vrot.slane %v3075, %v3082
    %v3086 = vadd.f32 %v3079, %v3045
    %v3087 = vadd.f32 %v3083, %v3050
    %v3088 = vsel %vm2209, %v3086, -inf
    %3089 = vmax.xlane.f32.xlu0 %v3088
    %v3090 = vpop.xlane.xlu0 %3089
    %v3091 = vsel %vm2209, %v3087, -inf
    %3092 = vmax.xlane.f32.xlu0 %v3091
    %v3093 = vpop.xlane.xlu0 %3092
    %v3094 = vsub.f32 %v3086, %v3090
    %v3095 = vsub.f32 %v3087, %v3093
    %v3096 = vmul.f32 %v3094, 1.442695
    %v3097 = vpow.pop %v3096
    %v3098 = vmul.f32 %v3095, 1.442695
    %v3099 = vpow.pop %v3098
    %v3100 = vsel %vm2209, %v3097, 0.0
    %3101 = vadd.xlane.f32.xlu0 %v3100
    %v3102 = vpop.xlane.xlu0 %3101
    %v3103 = vsel %vm2209, %v3099, 0.0
    %3104 = vadd.xlane.f32.xlu0 %v3103
    %v3105 = vpop.xlane.xlu0 %3104
    %v3106 = vrcp.pop %v3102
    %v3107 = vmul.f32 %v3097, %v3106
    %v3108 = vrcp.pop %v3105
    %v3109 = vmul.f32 %v3099, %v3108
    %v3110 = vmul.f32 %v2144, %v3107
    %v3111 = vmul.f32 %v2151, %v3109
    %v3112 = vsub.f32 %v2144, %v3110
    %v3113 = vsub.f32 %v2151, %v3111
    %v3114 = vsel %vm2209, %v3110, 0.0
    %v3115 = vrot.slane %v3114, 4
    %v3116 = vadd.f32 %v3114, %v3115
    %v3117 = vrot.slane %v3116, 2
    %v3118 = vadd.f32 %v3116, %v3117
    %v3119 = vrot.slane %v3118, 1
    %v3120 = vadd.f32 %v3118, %v3119
    %v3121 = vsel %vm2209, %v3111, 0.0
    %v3122 = vrot.slane %v3121, 4
    %v3123 = vadd.f32 %v3121, %v3122
    %v3124 = vrot.slane %v3123, 2
    %v3125 = vadd.f32 %v3123, %v3124
    %v3126 = vrot.slane %v3125, 1
    %v3127 = vadd.f32 %v3125, %v3126
    %v3128 = vsel %vm2209, %v3112, 0.0
    %v3129 = vrot.slane %v3128, 4
    %v3130 = vadd.f32 %v3128, %v3129
    %v3131 = vrot.slane %v3130, 2
    %v3132 = vadd.f32 %v3130, %v3131
    %v3133 = vrot.slane %v3132, 1
    %v3134 = vadd.f32 %v3132, %v3133
    %v3135 = vsel %vm2209, %v3113, 0.0
    %v3136 = vrot.slane %v3135, 4
    %v3137 = vadd.f32 %v3135, %v3136
    %v3138 = vrot.slane %v3137, 2
    %v3139 = vadd.f32 %v3137, %v3138
    %v3140 = vrot.slane %v3139, 1
    %v3141 = vadd.f32 %v3139, %v3140
    %v3144 = vsel %vm438, %v3127, %v3120
    %v3146 = vmul.f32 %v2184, %v3144
    %v3149 = vsel %vm438, %v3141, %v3134
    %v3151 = vmul.f32 %v2195, %v3149
    %v3152 = vsub.f32 %v3146, %v3151
    %v3153 = vadd.f32 %v3120, 1e-05
    %v3154 = vadd.f32 %v3127, 1e-05
    %v3155 = vrcp.pop %v3153
    %v3156 = vmul.f32 1.0, %v3155
    %v3157 = vrcp.pop %v3154
    %v3158 = vmul.f32 1.0, %v3157
    %v3160 = vsel %vm2209, %v3110, 0
    %v3163 = vsel %vm2209, %v3111, 0
    %3165 = vmatprep.subr.mxu0 0.0
    %3166 = vmatpush1.msra.mxu0 %v2218
    %3167 = vmatprep.subr.mxu0 0.0
    %3168 = vmatpush1.msra.mxu0 0.0
    %3169 = vmatprep.subr.mxu0 0.0
    %3170 = vmatpush1.msra.mxu0 0.0
    %3171 = vmatprep.subr.mxu0 0.0
    %3172 = vmatpush1.msra.mxu0 0.0
    %3173 = vmatprep.subr.mxu0 0.0
    %3174 = vmatpush1.msra.mxu0 0.0
    %3175 = vmatprep.subr.mxu0 0.0
    %3176 = vmatpush1.msra.mxu0 0.0
    %3177 = vmatprep.subr.mxu0 0.0
    %3178 = vmatpush1.msra.mxu0 0.0
    %3179 = vmatprep.subr.mxu0 0.0
    %3180 = vmatpush1.msra.mxu0 0.0
    %3181 = vmatprep.subr.mxu0 0.0
    %3182 = vmatpush1.msra.mxu0 0.0
    %3183 = vmatprep.subr.mxu0 0.0
    %3184 = vmatpush1.msra.mxu0 0.0
    %3185 = vmatprep.subr.mxu0 0.0
    %3186 = vmatpush1.msra.mxu0 0.0
    %3187 = vmatprep.subr.mxu0 0.0
    %3188 = vmatpush1.msra.mxu0 0.0
    %3189 = vmatprep.subr.mxu0 0.0
    %3190 = vmatpush1.msra.mxu0 0.0
    %3191 = vmatprep.subr.mxu0 0.0
    %3192 = vmatpush1.msra.mxu0 0.0
    %3193 = vmatprep.subr.mxu0 0.0
    %3194 = vmatpush1.msra.mxu0 0.0
    %3195 = vmatprep.subr.mxu0 0.0
    %3196 = vmatpush1.msra.mxu0 0.0
    %3197 = vmatprep.subr.mxu0 0.0
    %3198 = vmatpush1.msra.mxu0 0.0
    %3199 = vmatprep.subr.mxu0 0.0
    %3200 = vmatpush1.msra.mxu0 0.0
    %3201 = vmatprep.subr.mxu0 0.0
    %3202 = vmatpush1.msra.mxu0 0.0
    %3203 = vmatprep.subr.mxu0 0.0
    %3204 = vmatpush1.msra.mxu0 0.0
    %3205 = vmatprep.subr.mxu0 0.0
    %3206 = vmatpush1.msra.mxu0 0.0
    %3207 = vmatprep.subr.mxu0 0.0
    %3208 = vmatpush1.msra.mxu0 0.0
    %3209 = vmatprep.subr.mxu0 0.0
    %3210 = vmatpush1.msra.mxu0 0.0
    %3211 = vmatprep.subr.mxu0 0.0
    %3212 = vmatpush1.msra.mxu0 0.0
    %3213 = vmatprep.subr.mxu0 0.0
    %3214 = vmatpush1.msra.mxu0 0.0
    %3215 = vmatprep.subr.mxu0 0.0
    %3216 = vmatpush1.msra.mxu0 0.0
    %3217 = vmatprep.subr.mxu0 0.0
    %3218 = vmatpush1.msra.mxu0 0.0
    %3219 = vmatprep.subr.mxu0 0.0
    %3220 = vmatpush1.msra.mxu0 0.0
    %3221 = vmatprep.subr.mxu0 0.0
    %3222 = vmatpush1.msra.mxu0 0.0
    %3223 = vmatprep.subr.mxu0 0.0
    %3224 = vmatpush1.msra.mxu0 0.0
    %3225 = vmatprep.subr.mxu0 0.0
    %3226 = vmatpush1.msra.mxu0 0.0
    %3227 = vmatprep.subr.mxu0 0.0
    %3228 = vmatpush1.msra.mxu0 0.0
    %3229 = vmatprep.mubr.f32.mxu0 0.0
    %3230 = vmatmul.mubr.f32.gmra.mrb[0].mxu0 %v3160
    %v3231 = vpop.f32.mrb[0].mxu0
    %v3232 = vadd.f32 0.0, %v3231
    %v3233 = vpop.f32.mrb[0].mxu0
    %3234 = vmatprep.mubr.f32.mxu0 0.0
    %3235 = vmatmul.mubr.f32.gmra.mrb[0].mxu0 %v3163
    %v3236 = vpop.f32.mrb[0].mxu0
    %v3237 = vadd.f32 0.0, %v3236
    %v3238 = vpop.f32.mrb[0].mxu0
    %3239 = vdwg.mxu0
    %v3242 = vsel %vm438, %v3158, %v3156
    %v3243 = vsel %vm2209, %v3242, 0
    %3245 = vmatprep.subr.mxu0 0.0
    %3246 = vmatpush1.msra.mxu0 %v2218
    %3247 = vmatprep.subr.mxu0 0.0
    %3248 = vmatpush1.msra.mxu0 0.0
    %3249 = vmatprep.subr.mxu0 0.0
    %3250 = vmatpush1.msra.mxu0 0.0
    %3251 = vmatprep.subr.mxu0 0.0
    %3252 = vmatpush1.msra.mxu0 0.0
    %3253 = vmatprep.subr.mxu0 0.0
    %3254 = vmatpush1.msra.mxu0 0.0
    %3255 = vmatprep.subr.mxu0 0.0
    %3256 = vmatpush1.msra.mxu0 0.0
    %3257 = vmatprep.subr.mxu0 0.0
    %3258 = vmatpush1.msra.mxu0 0.0
    %3259 = vmatprep.subr.mxu0 0.0
    %3260 = vmatpush1.msra.mxu0 0.0
    %3261 = vmatprep.subr.mxu0 0.0
    %3262 = vmatpush1.msra.mxu0 0.0
    %3263 = vmatprep.subr.mxu0 0.0
    %3264 = vmatpush1.msra.mxu0 0.0
    %3265 = vmatprep.subr.mxu0 0.0
    %3266 = vmatpush1.msra.mxu0 0.0
    %3267 = vmatprep.subr.mxu0 0.0
    %3268 = vmatpush1.msra.mxu0 0.0
    %3269 = vmatprep.subr.mxu0 0.0
    %3270 = vmatpush1.msra.mxu0 0.0
    %3271 = vmatprep.subr.mxu0 0.0
    %3272 = vmatpush1.msra.mxu0 0.0
    %3273 = vmatprep.subr.mxu0 0.0
    %3274 = vmatpush1.msra.mxu0 0.0
    %3275 = vmatprep.subr.mxu0 0.0
    %3276 = vmatpush1.msra.mxu0 0.0
    %3277 = vmatprep.subr.mxu0 0.0
    %3278 = vmatpush1.msra.mxu0 0.0
    %3279 = vmatprep.subr.mxu0 0.0
    %3280 = vmatpush1.msra.mxu0 0.0
    %3281 = vmatprep.subr.mxu0 0.0
    %3282 = vmatpush1.msra.mxu0 0.0
    %3283 = vmatprep.subr.mxu0 0.0
    %3284 = vmatpush1.msra.mxu0 0.0
    %3285 = vmatprep.subr.mxu0 0.0
    %3286 = vmatpush1.msra.mxu0 0.0
    %3287 = vmatprep.subr.mxu0 0.0
    %3288 = vmatpush1.msra.mxu0 0.0
    %3289 = vmatprep.subr.mxu0 0.0
    %3290 = vmatpush1.msra.mxu0 0.0
    %3291 = vmatprep.subr.mxu0 0.0
    %3292 = vmatpush1.msra.mxu0 0.0
    %3293 = vmatprep.subr.mxu0 0.0
    %3294 = vmatpush1.msra.mxu0 0.0
    %3295 = vmatprep.subr.mxu0 0.0
    %3296 = vmatpush1.msra.mxu0 0.0
    %3297 = vmatprep.subr.mxu0 0.0
    %3298 = vmatpush1.msra.mxu0 0.0
    %3299 = vmatprep.subr.mxu0 0.0
    %3300 = vmatpush1.msra.mxu0 0.0
    %3301 = vmatprep.subr.mxu0 0.0
    %3302 = vmatpush1.msra.mxu0 0.0
    %3303 = vmatprep.subr.mxu0 0.0
    %3304 = vmatpush1.msra.mxu0 0.0
    %3305 = vmatprep.subr.mxu0 0.0
    %3306 = vmatpush1.msra.mxu0 0.0
    %3307 = vmatprep.subr.mxu0 0.0
    %3308 = vmatpush1.msra.mxu0 0.0
    %3309 = vmatprep.mubr.f32.mxu0 0.0
    %3310 = vmatmul.mubr.f32.gmra.mrb[0].mxu0 %v3243
    %v3311 = vpop.f32.mrb[0].mxu0
    %v3312 = vadd.f32 0.0, %v3311
    %v3313 = vpop.f32.mrb[0].mxu0
    %3314 = vdwg.mxu0
    %v3317 = vunpack.c.l.s4 1966171168
    %v3318 = vunpack.c.0.s8 %v3317
    %v3319 = vlaneseq
    %v3320 = vshrl.u32 %v3319, 7
    %v3321 = vsub.s32 %v3318, %v3320
    %v3322 = vrot.slane %v3312, %v3321
    %v3323 = vcombine.high %v3322, %v3322
    %v3325 = vunpack.c.l.s4 1966171168
    %v3326 = vunpack.c.0.s8 %v3325
    %v3327 = vlaneseq
    %v3328 = vshrl.u32 %v3327, 7
    %v3329 = vsub.s32 %v3326, %v3328
    %v3330 = vrot.slane %v3322, %v3329
    %v3332 = vunpack.c.l.s4 1966171168
    %v3333 = vunpack.c.0.s8 %v3332
    %v3334 = vlaneseq
    %v3335 = vshrl.u32 %v3334, 7
    %v3336 = vsub.s32 %v3333, %v3335
    %v3337 = vrot.slane %v3323, %v3336
    %v3340 = vmul.f32 %v3232, %v2119
    %v3341 = vmul.f32 %v3237, %v2120
    %v3342 = vsel %vm2397, %v3340, 0.0
    %v3343 = vrot.slane %v3342, 4
    %v3344 = vadd.f32 %v3342, %v3343
    %v3345 = vrot.slane %v3344, 2
    %v3346 = vadd.f32 %v3344, %v3345
    %v3347 = vrot.slane %v3346, 1
    %v3348 = vadd.f32 %v3346, %v3347
    %v3349 = vsel %vm2397, %v3341, 0.0
    %v3350 = vrot.slane %v3349, 4
    %v3351 = vadd.f32 %v3349, %v3350
    %v3352 = vrot.slane %v3351, 2
    %v3353 = vadd.f32 %v3351, %v3352
    %v3354 = vrot.slane %v3353, 1
    %v3355 = vadd.f32 %v3353, %v3354
    %v3356 = vmul.f32 %v3348, %v3330
    %v3357 = vmul.f32 %v3355, %v3337
    %v3358 = vlaneseq
    %v3359 = vshrl.u32 %v3358, 7
    %v3360 = vsub.s32 0, %v3359
    %v3361 = vrot.slane %v3356, %v3360
    %v3362 = vlaneseq
    %v3363 = vshrl.u32 %v3362, 7
    %v3364 = vsub.s32 0, %v3363
    %v3365 = vrot.slane %v3357, %v3364
    %v3366 = vsub.f32 %v2119, %v3361
    %v3367 = vsub.f32 %v2120, %v3365
    %v3368 = vmul.f32 %v3366, %v3366
    %v3369 = vmul.f32 %v3367, %v3367
    %v3370 = vmul.f32 %v3232, %v3368
    %v3371 = vmul.f32 %v3237, %v3369
    %v3372 = vsel %vm2397, %v3370, 0.0
    %v3373 = vrot.slane %v3372, 4
    %v3374 = vadd.f32 %v3372, %v3373
    %v3375 = vrot.slane %v3374, 2
    %v3376 = vadd.f32 %v3374, %v3375
    %v3377 = vrot.slane %v3376, 1
    %v3378 = vadd.f32 %v3376, %v3377
    %v3379 = vsel %vm2397, %v3371, 0.0
    %v3380 = vrot.slane %v3379, 4
    %v3381 = vadd.f32 %v3379, %v3380
    %v3382 = vrot.slane %v3381, 2
    %v3383 = vadd.f32 %v3381, %v3382
    %v3384 = vrot.slane %v3383, 1
    %v3385 = vadd.f32 %v3383, %v3384
    %v3386 = vmul.f32 %v3378, %v3330
    %v3387 = vmul.f32 %v3385, %v3337
    %v3388 = vadd.f32 %v3386, 1e-05
    %v3389 = vadd.f32 %v3387, 1e-05
    %vm3390 = vcmask 25600
    %3391 = vst.msk [vmem:[#allocation5] sm:$0x3] %vm3390, %v3152
    %v3394 = vrot.slane %v3357, 7
    %v3395 = vsel %vm438, %v3394, %v3356
    %vm3397 = vcmask 517120
    %3398 = vst.msk [vmem:[#allocation6] sm:$0x3] %vm3397, %v3395
    %v3401 = vrot.slane %v3389, 7
    %v3402 = vsel %vm438, %v3401, %v3388
    %3403 = vrot.lane.b32.xlu0 %v3402, 64
    %v3404 = vpop.permute.xlu0 %3403
    %vm3406 = vcmask 1041920
    %3407 = vst.msk [vmem:[#allocation6] sm:$0x3] %vm3406, %v3404
    // Predicated region
    $region78: #{tpu_custom_call.1} parent=1 // pred_check
      _
    $region79: #{tpu_custom_call.1} parent=1 // pred_check_branch
      %3409 = sbr.rel (0) target = $region81
    $region80: #{tpu_custom_call.1} parent=1 // pred_region
      %s3411 = ssub.s32 32, 32
      %3412 = vsyncadd [#allocation4], %s3411
      %s3414 = sshll.u32 [#allocation5], 4
      %s3415 = int_to_ptr.vmem [resolvable:$true] %s3414
      %3417 = dma.vmem_to_hbm [thread:$0]  %s3415, 32, %s18, [#allocation4]
    $region81: #{tpu_custom_call.1} parent=1 // pred_fallthru
      _
    // Predicated region
    $region82: #{tpu_custom_call.1} parent=1 // pred_check
      _
    $region83: #{tpu_custom_call.1} parent=1 // pred_check_branch
      %3419 = sbr.rel (0) target = $region85
    $region84: #{tpu_custom_call.1} parent=1 // pred_region
      %s3421 = ssub.s32 32, 32
      %3422 = vsyncadd [#allocation7], %s3421
      %s3424 = sshll.u32 [#allocation6], 4
      %s3425 = int_to_ptr.vmem [resolvable:$true] %s3424
      %3427 = dma.vmem_to_hbm [thread:$0]  %s3425, 32, %s19, [#allocation7]
    $region85: #{tpu_custom_call.1} parent=1 // pred_fallthru
      _
    // Predicated region
    $region86: #{tpu_custom_call.1} parent=1 // pred_check
      _
    $region87: #{tpu_custom_call.1} parent=1 // pred_check_branch
      %3429 = sbr.rel (0) target = $region89
    $region88: #{tpu_custom_call.1} parent=1 // pred_region
      %3430 = dma.done [#allocation4], 32
    $region89: #{tpu_custom_call.1} parent=1 // pred_fallthru
      _
    // Predicated region
    $region90: #{tpu_custom_call.1} parent=1 // pred_check
      _
    $region91: #{tpu_custom_call.1} parent=1 // pred_check_branch
      %3432 = sbr.rel (0) target = $region93
    $region92: #{tpu_custom_call.1} parent=1 // pred_region
      %3433 = dma.done [#allocation7], 32
    $region93: #{tpu_custom_call.1} parent=1 // pred_fallthru
      _
    %3434 = vsyncpa [#allocation3], 1
    %3435 = vsyncpa [#allocation4], 1
    %3436 = vsyncpa [#allocation7], 1

</llo_original>
